<compile_context>
chip_gen: v6e
topology: v6e:2x2x1
jax: 0.10.0
libtpu: 0.0.40
codegen_flags: <defaults>
</compile_context>

<pallas_src>
import functools

import jax
import jax.numpy as jnp
from jax import lax
from jax.experimental import pallas as pl
from jax.experimental.pallas import tpu as pltpu


def _gp_kernel(L_ref, dinv_ref, alpha_ref, ktt_ref, kdiag_ref, mean_ref, *rest,
               has_var, block_r):
    if has_var:
        var_ref, mean_out_ref, var_out_ref = rest
    else:
        var_ref = None
        mean_out_ref, var_out_ref = rest

    G, N, M = ktt_ref.shape
    R = block_r
    NB = N // R
    f32 = jnp.float32

    mean_slabs = []
    sq_slabs = []
    for g in range(G):                      # static unroll over packed batch
        Lg = L_ref[g]                       # (N, N)
        Kg = ktt_ref[g]                     # (N, M)
        Ag = alpha_ref[g]                   # (N, D)
        Dg = dinv_ref[g]                    # (N, R) stacked diag-block inverses

        # predictive mean in transposed (D, M) orientation (lane-packed later)
        kta_t = lax.dot_general(Ag, Kg,
                                dimension_numbers=(((0,), (0,)), ((), ())),
                                preferred_element_type=f32)       # (D, M)
        mean_slabs.append(kta_t)

        # right-looking blocked forward solve of L w = K_train_test, fused
        # with the variance reduction sum_n w^2 -- entirely in vregs.
        rhs = Kg                                                  # (N, M)
        sq = None
        for b in range(NB):                 # static unroll over row blocks
            i0 = b * R
            w_blk = jnp.dot(Dg[i0:i0 + R, :], rhs[0:R, :],
                            preferred_element_type=f32)           # (R, M)
            s = jnp.sum(w_blk * w_blk, axis=0, keepdims=True)     # (1, M)
            sq = s if sq is None else sq + s
            if b + 1 < NB:
                rhs = rhs[R:, :] - jnp.dot(Lg[i0 + R:N, i0:i0 + R], w_blk,
                                           preferred_element_type=f32)
        sq_slabs.append(sq)

    # lane-packed, lane-dense output slabs -> single unmasked stores.
    mean_slab = mean_slabs[0] if G == 1 else jnp.concatenate(mean_slabs, axis=-1)
    mean_out_ref[0] = (mean_ref[0] + mean_slab).astype(mean_out_ref.dtype)

    sq_slab = sq_slabs[0] if G == 1 else jnp.concatenate(sq_slabs, axis=-1)
    pv = kdiag_ref[0] - sq_slab
    if has_var:
        pv = pv + var_ref[0]
    var_out_ref[0] = pv.astype(var_out_ref.dtype)


def _is_multi_tc_chip():
    # Only v7x-class parts have 2 TensorCores per chip; unknown kinds fall
    # back to the single-TC (grid=1) choice, which is always correct.
    try:
        kind = jax.devices()[0].device_kind.lower()
    except Exception:
        return False
    return "v7" in kind


def _choose_batch_pack(B, M, multi_tc):
    lane_target = max(1, 128 // max(M, 1))        # aim for G*M ~= 128 lanes
    divisors = [g for g in range(1, B + 1) if B % g == 0]
    if multi_tc and B >= 2:                       # keep >=2 grid steps on v7x
        div2 = [g for g in divisors if B // g >= 2]
        divisors = div2 if div2 else divisors
    le = [g for g in divisors if g <= lane_target]
    return max(le) if le else min(divisors)


def gp_test_module(L, alpha, K_train_test, K_test_test_diag, mean, var=None,
                   *, block_r=8, batch_block=None):
    """Pallas implementation of GpTestModule.forward."""
    B, N, M = K_train_test.shape
    D = alpha.shape[-1]
    f32 = jnp.float32

    L = L.astype(f32)
    alpha = alpha.astype(f32)
    Ktt = K_train_test.astype(f32)
    mean = mean.astype(f32)
    Kdiag = K_test_test_diag.astype(f32)

    # block size along the solve (must divide N)
    R = max(1, min(block_r, N))
    if N % R != 0:
        R = next(r for r in range(R, 0, -1) if N % r == 0)
    NB = N // R

    # Precompute inverses of the (R, R) lower-triangular diagonal blocks of L
    # (stable block-level solves, hoisted off the kernel's serial path).
    eye = jnp.eye(R, dtype=f32)
    diag_blocks = jnp.stack(
        [L[:, i * R:(i + 1) * R, i * R:(i + 1) * R] for i in range(NB)],
        axis=1)                                                    # (B, NB, R, R)
    dinv = lax.linalg.triangular_solve(
        diag_blocks, jnp.broadcast_to(eye, diag_blocks.shape),
        left_side=True, lower=True)                                # (B, NB, R, R)
    dinv = dinv.reshape(B, N, R)                                   # stacked rows

    # batch packing along the lane axis
    has_var = var is not None
    if batch_block is None:
        G = _choose_batch_pack(B, M, _is_multi_tc_chip())
    else:
        G = batch_block
    assert B % G == 0, "batch_block must divide B"
    BG = B // G
    GM = G * M

    # lane-packed (B//G, ., G*M) slabs for the per-test-point operands
    mean_p = mean.transpose(0, 2, 1).reshape(BG, G, D, M)
    mean_p = mean_p.transpose(0, 2, 1, 3).reshape(BG, D, GM)
    kdiag_p = Kdiag.reshape(BG, 1, GM)
    if has_var:
        var_p = jnp.broadcast_to(var.astype(f32), (B, M, 1)).reshape(BG, 1, GM)

    in_specs = [
        pl.BlockSpec((G, N, N), lambda b: (b, 0, 0)),     # L
        pl.BlockSpec((G, N, R), lambda b: (b, 0, 0)),     # diag-block inverses
        pl.BlockSpec((G, N, D), lambda b: (b, 0, 0)),     # alpha
        pl.BlockSpec((G, N, M), lambda b: (b, 0, 0)),     # K_train_test
        pl.BlockSpec((1, 1, GM), lambda b: (b, 0, 0)),    # K_test_test_diag (packed)
        pl.BlockSpec((1, D, GM), lambda b: (b, 0, 0)),    # mean (packed, transposed)
    ]
    args = [L, dinv, alpha, Ktt, kdiag_p, mean_p]
    if has_var:
        in_specs.append(pl.BlockSpec((1, 1, GM), lambda b: (b, 0, 0)))
        args.append(var_p)

    out_shapes = (jax.ShapeDtypeStruct((BG, D, GM), f32),   # pred_mean (packed)
                  jax.ShapeDtypeStruct((BG, 1, GM), f32))   # pred_var  (packed)
    out_specs = [pl.BlockSpec((1, D, GM), lambda b: (b, 0, 0)),
                 pl.BlockSpec((1, 1, GM), lambda b: (b, 0, 0))]

    grid_spec = pltpu.PrefetchScalarGridSpec(
        num_scalar_prefetch=0, grid=(BG,),
        in_specs=in_specs, out_specs=out_specs)

    # advisory cost hint so XLA schedules this small custom call sensibly
    flops = B * (2 * N * M * D + N * N * M + 2 * N * R * M + 4 * N * M)
    bytes_accessed = sum(int(a.size) * 4 for a in args) + B * (M * D + M) * 4
    cost = pl.CostEstimate(flops=flops, transcendentals=0,
                           bytes_accessed=bytes_accessed)

    # per-step VMEM footprint (x2 for double buffering); only raise the scoped
    # limit when actually needed.
    blk_bytes = 4 * (G * (N * N + N * R + N * D + N * M)
                     + D * GM + 2 * GM + (GM if has_var else 0))
    compiler_kwargs = dict(dimension_semantics=("parallel",))
    if 2 * blk_bytes > 32 * 1024 * 1024:
        # TODO(synk): beyond this point, panel-tile L / K_train_test instead
        # (mandatory on v7x's 64 MiB VMEM part).
        compiler_kwargs["vmem_limit_bytes"] = min(int(2.5 * blk_bytes),
                                                  100 * 1024 * 1024)

    kernel = functools.partial(_gp_kernel, has_var=has_var, block_r=R)

    mean_packed, var_packed = pl.pallas_call(
        kernel,
        out_shape=out_shapes,
        grid_spec=grid_spec,
        compiler_params=pltpu.CompilerParams(**compiler_kwargs),
        cost_estimate=cost,
    )(*args)

    # free layout plumbing back to the module's output shapes
    pred_mean = (mean_packed.reshape(BG, D, G, M)
                 .transpose(0, 2, 3, 1).reshape(B, M, D))
    pred_var = var_packed.reshape(B, M, 1)
    return pred_mean, pred_var


def gp_reference(L, alpha, K_train_test, K_test_test_diag, mean, var=None):
    """Plain-JAX reference mirroring the PyTorch forward."""
    pred_mean = mean + jnp.einsum('bnd,bnm->bmd', alpha, K_train_test)
    v = jax.vmap(lambda Lb, Kb: jax.scipy.linalg.cho_solve((Lb, True), Kb))(
        L, K_train_test)
    pred_var = K_test_test_diag - jnp.sum(K_train_test * v, axis=1)
    pred_var = pred_var[..., None]
    if var is not None:
        pred_var = pred_var + var
    return pred_mean, pred_var


if __name__ == "__main__":
    B, N, M, D = 4, 32, 16, 4   # batch, train points, test points, output dims

    key = jax.random.PRNGKey(0)
    k1, k2, k3, k4, k5, k6 = jax.random.split(key, 6)

    # Well-conditioned SPD matrix -> lower Cholesky factor L (forward input).
    A = jax.random.normal(k1, (B, N, N), dtype=jnp.float32)
    K_train_train = jnp.einsum('bij,bkj->bik', A, A) + N * jnp.eye(N, dtype=jnp.float32)
    L = jnp.linalg.cholesky(K_train_train)

    alpha = jax.random.normal(k2, (B, N, D), dtype=jnp.float32)
    K_train_test = jax.random.normal(k3, (B, N, M), dtype=jnp.float32)
    K_test_test_diag = jax.random.uniform(k4, (B, M), dtype=jnp.float32) + 10.0
    mean = jax.random.normal(k5, (B, M, D), dtype=jnp.float32)
    var = jax.random.uniform(k6, (B, M, 1), dtype=jnp.float32)

    # --- with var ---
    pred_mean, pred_var = gp_test_module(L, alpha, K_train_test,
                                         K_test_test_diag, mean, var)
    jax.block_until_ready((pred_mean, pred_var))
    ref_mean, ref_var = gp_reference(L, alpha, K_train_test,
                                     K_test_test_diag, mean, var)
    assert pred_mean.shape == (B, M, D) and pred_var.shape == (B, M, 1)
    assert jnp.allclose(pred_mean, ref_mean, rtol=1e-4, atol=1e-4)
    assert jnp.allclose(pred_var, ref_var, rtol=1e-4, atol=1e-4)

    # --- var=None specialization ---
    pm2, pv2 = gp_test_module(L, alpha, K_train_test, K_test_test_diag, mean)
    jax.block_until_ready((pm2, pv2))
    rm2, rv2 = gp_reference(L, alpha, K_train_test, K_test_test_diag, mean)
    assert jnp.allclose(pm2, rm2, rtol=1e-4, atol=1e-4)
    assert jnp.allclose(pv2, rv2, rtol=1e-4, atol=1e-4)

    # --- explicit batch_block (multi-step grid path) ---
    pm3, pv3 = gp_test_module(L, alpha, K_train_test, K_test_test_diag, mean,
                              var, batch_block=2)
    jax.block_until_ready((pm3, pv3))
    assert jnp.allclose(pm3, ref_mean, rtol=1e-4, atol=1e-4)
    assert jnp.allclose(pv3, ref_var, rtol=1e-4, atol=1e-4)

    print("KERNEL_OK")
</pallas_src>

<mosaic_0001>
module attributes {stable_mosaic.version = 11 : i64} {
  func.func @_gp_kernel(%arg0: i32, %arg1: memref<4x32x32xf32, #tpu.memory_space<vmem>>, %arg2: memref<4x32x8xf32, #tpu.memory_space<vmem>>, %arg3: memref<4x32x4xf32, #tpu.memory_space<vmem>>, %arg4: memref<4x32x16xf32, #tpu.memory_space<vmem>>, %arg5: memref<1x1x64xf32, #tpu.memory_space<vmem>>, %arg6: memref<1x4x64xf32, #tpu.memory_space<vmem>>, %arg7: memref<1x1x64xf32, #tpu.memory_space<vmem>>, %arg8: memref<1x4x64xf32, #tpu.memory_space<vmem>>, %arg9: memref<1x1x64xf32, #tpu.memory_space<vmem>>) attributes {dimension_semantics = [#tpu.dimension_semantics<parallel>], iteration_bounds = array<i64: 1>, scalar_prefetch = 0 : i64, scratch_operands = 0 : i64, tpu.core_type = #tpu.core_type<tc>, window_params = [{transform_indices = @transform_0, window_bounds = array<i64: 4, 32, 32>}, {transform_indices = @transform_1, window_bounds = array<i64: 4, 32, 8>}, {transform_indices = @transform_2, window_bounds = array<i64: 4, 32, 4>}, {transform_indices = @transform_3, window_bounds = array<i64: 4, 32, 16>}, {transform_indices = @transform_4, window_bounds = array<i64: 1, 1, 64>}, {transform_indices = @transform_5, window_bounds = array<i64: 1, 4, 64>}, {transform_indices = @transform_6, window_bounds = array<i64: 1, 1, 64>}, {transform_indices = @transform_7, window_bounds = array<i64: 1, 4, 64>}, {transform_indices = @transform_8, window_bounds = array<i64: 1, 1, 64>}]} {
    %c0 = arith.constant 0 : index
    %c0_0 = arith.constant 0 : index
    %c0_1 = arith.constant 0 : index
    %0 = vector.load %arg1[%c0, %c0_0, %c0_1] : memref<4x32x32xf32, #tpu.memory_space<vmem>>, vector<1x32x32xf32>
    %1 = vector.shape_cast %0 : vector<1x32x32xf32> to vector<32x32xf32>
    %c0_2 = arith.constant 0 : index
    %c0_3 = arith.constant 0 : index
    %c0_4 = arith.constant 0 : index
    %2 = vector.load %arg4[%c0_2, %c0_3, %c0_4] : memref<4x32x16xf32, #tpu.memory_space<vmem>>, vector<1x32x16xf32>
    %3 = vector.shape_cast %2 : vector<1x32x16xf32> to vector<32x16xf32>
    %c0_5 = arith.constant 0 : index
    %c0_6 = arith.constant 0 : index
    %c0_7 = arith.constant 0 : index
    %4 = vector.load %arg3[%c0_5, %c0_6, %c0_7] : memref<4x32x4xf32, #tpu.memory_space<vmem>>, vector<1x32x4xf32>
    %5 = vector.shape_cast %4 : vector<1x32x4xf32> to vector<32x4xf32>
    %c0_8 = arith.constant 0 : index
    %c0_9 = arith.constant 0 : index
    %c0_10 = arith.constant 0 : index
    %6 = vector.load %arg2[%c0_8, %c0_9, %c0_10] : memref<4x32x8xf32, #tpu.memory_space<vmem>>, vector<1x32x8xf32>
    %7 = vector.shape_cast %6 : vector<1x32x8xf32> to vector<32x8xf32>
    %cst = arith.constant dense<0.000000e+00> : vector<4x16xf32>
    %8 = tpu.matmul %5, %3, %cst {dimension_numbers = #tpu.dot_dimension_numbers<[0], [0], [1], [1], [0, 1, 1, 1], [], []>} : vector<32x4xf32>, vector<32x16xf32>, vector<4x16xf32> -> vector<4x16xf32>
    %9 = vector.extract_strided_slice %7 {offsets = [0, 0], sizes = [8, 8], strides = [1, 1]} : vector<32x8xf32> to vector<8x8xf32>
    %10 = vector.extract_strided_slice %3 {offsets = [0, 0], sizes = [8, 16], strides = [1, 1]} : vector<32x16xf32> to vector<8x16xf32>
    %cst_11 = arith.constant dense<0.000000e+00> : vector<8x16xf32>
    %11 = tpu.matmul %9, %10, %cst_11 {dimension_numbers = #tpu.dot_dimension_numbers<[1], [0], [0], [1], [0, 0, 1, 1], [], []>} : vector<8x8xf32>, vector<8x16xf32>, vector<8x16xf32> -> vector<8x16xf32>
    %12 = arith.mulf %11, %11 : vector<8x16xf32>
    %cst_12 = arith.constant dense<0.000000e+00> : vector<16xf32>
    %13 = vector.multi_reduction <add>, %12, %cst_12 [0] : vector<8x16xf32> to vector<16xf32>
    %14 = vector.shape_cast %13 : vector<16xf32> to vector<1x16xf32>
    %15 = vector.extract_strided_slice %3 {offsets = [8, 0], sizes = [24, 16], strides = [1, 1]} : vector<32x16xf32> to vector<24x16xf32>
    %16 = vector.extract_strided_slice %1 {offsets = [8, 0], sizes = [24, 8], strides = [1, 1]} : vector<32x32xf32> to vector<24x8xf32>
    %cst_13 = arith.constant dense<0.000000e+00> : vector<24x16xf32>
    %17 = tpu.matmul %16, %11, %cst_13 {dimension_numbers = #tpu.dot_dimension_numbers<[1], [0], [0], [1], [0, 0, 1, 1], [], []>} : vector<24x8xf32>, vector<8x16xf32>, vector<24x16xf32> -> vector<24x16xf32>
    %18 = arith.subf %15, %17 : vector<24x16xf32>
    %19 = vector.extract_strided_slice %7 {offsets = [8, 0], sizes = [8, 8], strides = [1, 1]} : vector<32x8xf32> to vector<8x8xf32>
    %20 = vector.extract_strided_slice %18 {offsets = [0, 0], sizes = [8, 16], strides = [1, 1]} : vector<24x16xf32> to vector<8x16xf32>
    %cst_14 = arith.constant dense<0.000000e+00> : vector<8x16xf32>
    %21 = tpu.matmul %19, %20, %cst_14 {dimension_numbers = #tpu.dot_dimension_numbers<[1], [0], [0], [1], [0, 0, 1, 1], [], []>} : vector<8x8xf32>, vector<8x16xf32>, vector<8x16xf32> -> vector<8x16xf32>
    %22 = arith.mulf %21, %21 : vector<8x16xf32>
    %cst_15 = arith.constant dense<0.000000e+00> : vector<16xf32>
    %23 = vector.multi_reduction <add>, %22, %cst_15 [0] : vector<8x16xf32> to vector<16xf32>
    %24 = vector.shape_cast %23 : vector<16xf32> to vector<1x16xf32>
    %25 = arith.addf %14, %24 : vector<1x16xf32>
    %26 = vector.extract_strided_slice %18 {offsets = [8, 0], sizes = [16, 16], strides = [1, 1]} : vector<24x16xf32> to vector<16x16xf32>
    %27 = vector.extract_strided_slice %1 {offsets = [16, 8], sizes = [16, 8], strides = [1, 1]} : vector<32x32xf32> to vector<16x8xf32>
    %cst_16 = arith.constant dense<0.000000e+00> : vector<16x16xf32>
    %28 = tpu.matmul %27, %21, %cst_16 {dimension_numbers = #tpu.dot_dimension_numbers<[1], [0], [0], [1], [0, 0, 1, 1], [], []>} : vector<16x8xf32>, vector<8x16xf32>, vector<16x16xf32> -> vector<16x16xf32>
    %29 = arith.subf %26, %28 : vector<16x16xf32>
    %30 = vector.extract_strided_slice %7 {offsets = [16, 0], sizes = [8, 8], strides = [1, 1]} : vector<32x8xf32> to vector<8x8xf32>
    %31 = vector.extract_strided_slice %29 {offsets = [0, 0], sizes = [8, 16], strides = [1, 1]} : vector<16x16xf32> to vector<8x16xf32>
    %cst_17 = arith.constant dense<0.000000e+00> : vector<8x16xf32>
    %32 = tpu.matmul %30, %31, %cst_17 {dimension_numbers = #tpu.dot_dimension_numbers<[1], [0], [0], [1], [0, 0, 1, 1], [], []>} : vector<8x8xf32>, vector<8x16xf32>, vector<8x16xf32> -> vector<8x16xf32>
    %33 = arith.mulf %32, %32 : vector<8x16xf32>
    %cst_18 = arith.constant dense<0.000000e+00> : vector<16xf32>
    %34 = vector.multi_reduction <add>, %33, %cst_18 [0] : vector<8x16xf32> to vector<16xf32>
    %35 = vector.shape_cast %34 : vector<16xf32> to vector<1x16xf32>
    %36 = arith.addf %25, %35 : vector<1x16xf32>
    %37 = vector.extract_strided_slice %29 {offsets = [8, 0], sizes = [8, 16], strides = [1, 1]} : vector<16x16xf32> to vector<8x16xf32>
    %38 = vector.extract_strided_slice %1 {offsets = [24, 16], sizes = [8, 8], strides = [1, 1]} : vector<32x32xf32> to vector<8x8xf32>
    %cst_19 = arith.constant dense<0.000000e+00> : vector<8x16xf32>
    %39 = tpu.matmul %38, %32, %cst_19 {dimension_numbers = #tpu.dot_dimension_numbers<[1], [0], [0], [1], [0, 0, 1, 1], [], []>} : vector<8x8xf32>, vector<8x16xf32>, vector<8x16xf32> -> vector<8x16xf32>
    %40 = arith.subf %37, %39 : vector<8x16xf32>
    %41 = vector.extract_strided_slice %7 {offsets = [24, 0], sizes = [8, 8], strides = [1, 1]} : vector<32x8xf32> to vector<8x8xf32>
    %cst_20 = arith.constant dense<0.000000e+00> : vector<8x16xf32>
    %42 = tpu.matmul %41, %40, %cst_20 {dimension_numbers = #tpu.dot_dimension_numbers<[1], [0], [0], [1], [0, 0, 1, 1], [], []>} : vector<8x8xf32>, vector<8x16xf32>, vector<8x16xf32> -> vector<8x16xf32>
    %43 = arith.mulf %42, %42 : vector<8x16xf32>
    %cst_21 = arith.constant dense<0.000000e+00> : vector<16xf32>
    %44 = vector.multi_reduction <add>, %43, %cst_21 [0] : vector<8x16xf32> to vector<16xf32>
    %45 = vector.shape_cast %44 : vector<16xf32> to vector<1x16xf32>
    %46 = arith.addf %36, %45 : vector<1x16xf32>
    %c1 = arith.constant 1 : index
    %c0_22 = arith.constant 0 : index
    %c0_23 = arith.constant 0 : index
    %47 = vector.load %arg1[%c1, %c0_22, %c0_23] : memref<4x32x32xf32, #tpu.memory_space<vmem>>, vector<1x32x32xf32>
    %48 = vector.shape_cast %47 : vector<1x32x32xf32> to vector<32x32xf32>
    %c1_24 = arith.constant 1 : index
    %c0_25 = arith.constant 0 : index
    %c0_26 = arith.constant 0 : index
    %49 = vector.load %arg4[%c1_24, %c0_25, %c0_26] : memref<4x32x16xf32, #tpu.memory_space<vmem>>, vector<1x32x16xf32>
    %50 = vector.shape_cast %49 : vector<1x32x16xf32> to vector<32x16xf32>
    %c1_27 = arith.constant 1 : index
    %c0_28 = arith.constant 0 : index
    %c0_29 = arith.constant 0 : index
    %51 = vector.load %arg3[%c1_27, %c0_28, %c0_29] : memref<4x32x4xf32, #tpu.memory_space<vmem>>, vector<1x32x4xf32>
    %52 = vector.shape_cast %51 : vector<1x32x4xf32> to vector<32x4xf32>
    %c1_30 = arith.constant 1 : index
    %c0_31 = arith.constant 0 : index
    %c0_32 = arith.constant 0 : index
    %53 = vector.load %arg2[%c1_30, %c0_31, %c0_32] : memref<4x32x8xf32, #tpu.memory_space<vmem>>, vector<1x32x8xf32>
    %54 = vector.shape_cast %53 : vector<1x32x8xf32> to vector<32x8xf32>
    %cst_33 = arith.constant dense<0.000000e+00> : vector<4x16xf32>
    %55 = tpu.matmul %52, %50, %cst_33 {dimension_numbers = #tpu.dot_dimension_numbers<[0], [0], [1], [1], [0, 1, 1, 1], [], []>} : vector<32x4xf32>, vector<32x16xf32>, vector<4x16xf32> -> vector<4x16xf32>
    %56 = vector.extract_strided_slice %54 {offsets = [0, 0], sizes = [8, 8], strides = [1, 1]} : vector<32x8xf32> to vector<8x8xf32>
    %57 = vector.extract_strided_slice %50 {offsets = [0, 0], sizes = [8, 16], strides = [1, 1]} : vector<32x16xf32> to vector<8x16xf32>
    %cst_34 = arith.constant dense<0.000000e+00> : vector<8x16xf32>
    %58 = tpu.matmul %56, %57, %cst_34 {dimension_numbers = #tpu.dot_dimension_numbers<[1], [0], [0], [1], [0, 0, 1, 1], [], []>} : vector<8x8xf32>, vector<8x16xf32>, vector<8x16xf32> -> vector<8x16xf32>
    %59 = arith.mulf %58, %58 : vector<8x16xf32>
    %cst_35 = arith.constant dense<0.000000e+00> : vector<16xf32>
    %60 = vector.multi_reduction <add>, %59, %cst_35 [0] : vector<8x16xf32> to vector<16xf32>
    %61 = vector.shape_cast %60 : vector<16xf32> to vector<1x16xf32>
    %62 = vector.extract_strided_slice %50 {offsets = [8, 0], sizes = [24, 16], strides = [1, 1]} : vector<32x16xf32> to vector<24x16xf32>
    %63 = vector.extract_strided_slice %48 {offsets = [8, 0], sizes = [24, 8], strides = [1, 1]} : vector<32x32xf32> to vector<24x8xf32>
    %cst_36 = arith.constant dense<0.000000e+00> : vector<24x16xf32>
    %64 = tpu.matmul %63, %58, %cst_36 {dimension_numbers = #tpu.dot_dimension_numbers<[1], [0], [0], [1], [0, 0, 1, 1], [], []>} : vector<24x8xf32>, vector<8x16xf32>, vector<24x16xf32> -> vector<24x16xf32>
    %65 = arith.subf %62, %64 : vector<24x16xf32>
    %66 = vector.extract_strided_slice %54 {offsets = [8, 0], sizes = [8, 8], strides = [1, 1]} : vector<32x8xf32> to vector<8x8xf32>
    %67 = vector.extract_strided_slice %65 {offsets = [0, 0], sizes = [8, 16], strides = [1, 1]} : vector<24x16xf32> to vector<8x16xf32>
    %cst_37 = arith.constant dense<0.000000e+00> : vector<8x16xf32>
    %68 = tpu.matmul %66, %67, %cst_37 {dimension_numbers = #tpu.dot_dimension_numbers<[1], [0], [0], [1], [0, 0, 1, 1], [], []>} : vector<8x8xf32>, vector<8x16xf32>, vector<8x16xf32> -> vector<8x16xf32>
    %69 = arith.mulf %68, %68 : vector<8x16xf32>
    %cst_38 = arith.constant dense<0.000000e+00> : vector<16xf32>
    %70 = vector.multi_reduction <add>, %69, %cst_38 [0] : vector<8x16xf32> to vector<16xf32>
    %71 = vector.shape_cast %70 : vector<16xf32> to vector<1x16xf32>
    %72 = arith.addf %61, %71 : vector<1x16xf32>
    %73 = vector.extract_strided_slice %65 {offsets = [8, 0], sizes = [16, 16], strides = [1, 1]} : vector<24x16xf32> to vector<16x16xf32>
    %74 = vector.extract_strided_slice %48 {offsets = [16, 8], sizes = [16, 8], strides = [1, 1]} : vector<32x32xf32> to vector<16x8xf32>
    %cst_39 = arith.constant dense<0.000000e+00> : vector<16x16xf32>
    %75 = tpu.matmul %74, %68, %cst_39 {dimension_numbers = #tpu.dot_dimension_numbers<[1], [0], [0], [1], [0, 0, 1, 1], [], []>} : vector<16x8xf32>, vector<8x16xf32>, vector<16x16xf32> -> vector<16x16xf32>
    %76 = arith.subf %73, %75 : vector<16x16xf32>
    %77 = vector.extract_strided_slice %54 {offsets = [16, 0], sizes = [8, 8], strides = [1, 1]} : vector<32x8xf32> to vector<8x8xf32>
    %78 = vector.extract_strided_slice %76 {offsets = [0, 0], sizes = [8, 16], strides = [1, 1]} : vector<16x16xf32> to vector<8x16xf32>
    %cst_40 = arith.constant dense<0.000000e+00> : vector<8x16xf32>
    %79 = tpu.matmul %77, %78, %cst_40 {dimension_numbers = #tpu.dot_dimension_numbers<[1], [0], [0], [1], [0, 0, 1, 1], [], []>} : vector<8x8xf32>, vector<8x16xf32>, vector<8x16xf32> -> vector<8x16xf32>
    %80 = arith.mulf %79, %79 : vector<8x16xf32>
    %cst_41 = arith.constant dense<0.000000e+00> : vector<16xf32>
    %81 = vector.multi_reduction <add>, %80, %cst_41 [0] : vector<8x16xf32> to vector<16xf32>
    %82 = vector.shape_cast %81 : vector<16xf32> to vector<1x16xf32>
    %83 = arith.addf %72, %82 : vector<1x16xf32>
    %84 = vector.extract_strided_slice %76 {offsets = [8, 0], sizes = [8, 16], strides = [1, 1]} : vector<16x16xf32> to vector<8x16xf32>
    %85 = vector.extract_strided_slice %48 {offsets = [24, 16], sizes = [8, 8], strides = [1, 1]} : vector<32x32xf32> to vector<8x8xf32>
    %cst_42 = arith.constant dense<0.000000e+00> : vector<8x16xf32>
    %86 = tpu.matmul %85, %79, %cst_42 {dimension_numbers = #tpu.dot_dimension_numbers<[1], [0], [0], [1], [0, 0, 1, 1], [], []>} : vector<8x8xf32>, vector<8x16xf32>, vector<8x16xf32> -> vector<8x16xf32>
    %87 = arith.subf %84, %86 : vector<8x16xf32>
    %88 = vector.extract_strided_slice %54 {offsets = [24, 0], sizes = [8, 8], strides = [1, 1]} : vector<32x8xf32> to vector<8x8xf32>
    %cst_43 = arith.constant dense<0.000000e+00> : vector<8x16xf32>
    %89 = tpu.matmul %88, %87, %cst_43 {dimension_numbers = #tpu.dot_dimension_numbers<[1], [0], [0], [1], [0, 0, 1, 1], [], []>} : vector<8x8xf32>, vector<8x16xf32>, vector<8x16xf32> -> vector<8x16xf32>
    %90 = arith.mulf %89, %89 : vector<8x16xf32>
    %cst_44 = arith.constant dense<0.000000e+00> : vector<16xf32>
    %91 = vector.multi_reduction <add>, %90, %cst_44 [0] : vector<8x16xf32> to vector<16xf32>
    %92 = vector.shape_cast %91 : vector<16xf32> to vector<1x16xf32>
    %93 = arith.addf %83, %92 : vector<1x16xf32>
    %c2 = arith.constant 2 : index
    %c0_45 = arith.constant 0 : index
    %c0_46 = arith.constant 0 : index
    %94 = vector.load %arg1[%c2, %c0_45, %c0_46] : memref<4x32x32xf32, #tpu.memory_space<vmem>>, vector<1x32x32xf32>
    %95 = vector.shape_cast %94 : vector<1x32x32xf32> to vector<32x32xf32>
    %c2_47 = arith.constant 2 : index
    %c0_48 = arith.constant 0 : index
    %c0_49 = arith.constant 0 : index
    %96 = vector.load %arg4[%c2_47, %c0_48, %c0_49] : memref<4x32x16xf32, #tpu.memory_space<vmem>>, vector<1x32x16xf32>
    %97 = vector.shape_cast %96 : vector<1x32x16xf32> to vector<32x16xf32>
    %c2_50 = arith.constant 2 : index
    %c0_51 = arith.constant 0 : index
    %c0_52 = arith.constant 0 : index
    %98 = vector.load %arg3[%c2_50, %c0_51, %c0_52] : memref<4x32x4xf32, #tpu.memory_space<vmem>>, vector<1x32x4xf32>
    %99 = vector.shape_cast %98 : vector<1x32x4xf32> to vector<32x4xf32>
    %c2_53 = arith.constant 2 : index
    %c0_54 = arith.constant 0 : index
    %c0_55 = arith.constant 0 : index
    %100 = vector.load %arg2[%c2_53, %c0_54, %c0_55] : memref<4x32x8xf32, #tpu.memory_space<vmem>>, vector<1x32x8xf32>
    %101 = vector.shape_cast %100 : vector<1x32x8xf32> to vector<32x8xf32>
    %cst_56 = arith.constant dense<0.000000e+00> : vector<4x16xf32>
    %102 = tpu.matmul %99, %97, %cst_56 {dimension_numbers = #tpu.dot_dimension_numbers<[0], [0], [1], [1], [0, 1, 1, 1], [], []>} : vector<32x4xf32>, vector<32x16xf32>, vector<4x16xf32> -> vector<4x16xf32>
    %103 = vector.extract_strided_slice %101 {offsets = [0, 0], sizes = [8, 8], strides = [1, 1]} : vector<32x8xf32> to vector<8x8xf32>
    %104 = vector.extract_strided_slice %97 {offsets = [0, 0], sizes = [8, 16], strides = [1, 1]} : vector<32x16xf32> to vector<8x16xf32>
    %cst_57 = arith.constant dense<0.000000e+00> : vector<8x16xf32>
    %105 = tpu.matmul %103, %104, %cst_57 {dimension_numbers = #tpu.dot_dimension_numbers<[1], [0], [0], [1], [0, 0, 1, 1], [], []>} : vector<8x8xf32>, vector<8x16xf32>, vector<8x16xf32> -> vector<8x16xf32>
    %106 = arith.mulf %105, %105 : vector<8x16xf32>
    %cst_58 = arith.constant dense<0.000000e+00> : vector<16xf32>
    %107 = vector.multi_reduction <add>, %106, %cst_58 [0] : vector<8x16xf32> to vector<16xf32>
    %108 = vector.shape_cast %107 : vector<16xf32> to vector<1x16xf32>
    %109 = vector.extract_strided_slice %97 {offsets = [8, 0], sizes = [24, 16], strides = [1, 1]} : vector<32x16xf32> to vector<24x16xf32>
    %110 = vector.extract_strided_slice %95 {offsets = [8, 0], sizes = [24, 8], strides = [1, 1]} : vector<32x32xf32> to vector<24x8xf32>
    %cst_59 = arith.constant dense<0.000000e+00> : vector<24x16xf32>
    %111 = tpu.matmul %110, %105, %cst_59 {dimension_numbers = #tpu.dot_dimension_numbers<[1], [0], [0], [1], [0, 0, 1, 1], [], []>} : vector<24x8xf32>, vector<8x16xf32>, vector<24x16xf32> -> vector<24x16xf32>
    %112 = arith.subf %109, %111 : vector<24x16xf32>
    %113 = vector.extract_strided_slice %101 {offsets = [8, 0], sizes = [8, 8], strides = [1, 1]} : vector<32x8xf32> to vector<8x8xf32>
    %114 = vector.extract_strided_slice %112 {offsets = [0, 0], sizes = [8, 16], strides = [1, 1]} : vector<24x16xf32> to vector<8x16xf32>
    %cst_60 = arith.constant dense<0.000000e+00> : vector<8x16xf32>
    %115 = tpu.matmul %113, %114, %cst_60 {dimension_numbers = #tpu.dot_dimension_numbers<[1], [0], [0], [1], [0, 0, 1, 1], [], []>} : vector<8x8xf32>, vector<8x16xf32>, vector<8x16xf32> -> vector<8x16xf32>
    %116 = arith.mulf %115, %115 : vector<8x16xf32>
    %cst_61 = arith.constant dense<0.000000e+00> : vector<16xf32>
    %117 = vector.multi_reduction <add>, %116, %cst_61 [0] : vector<8x16xf32> to vector<16xf32>
    %118 = vector.shape_cast %117 : vector<16xf32> to vector<1x16xf32>
    %119 = arith.addf %108, %118 : vector<1x16xf32>
    %120 = vector.extract_strided_slice %112 {offsets = [8, 0], sizes = [16, 16], strides = [1, 1]} : vector<24x16xf32> to vector<16x16xf32>
    %121 = vector.extract_strided_slice %95 {offsets = [16, 8], sizes = [16, 8], strides = [1, 1]} : vector<32x32xf32> to vector<16x8xf32>
    %cst_62 = arith.constant dense<0.000000e+00> : vector<16x16xf32>
    %122 = tpu.matmul %121, %115, %cst_62 {dimension_numbers = #tpu.dot_dimension_numbers<[1], [0], [0], [1], [0, 0, 1, 1], [], []>} : vector<16x8xf32>, vector<8x16xf32>, vector<16x16xf32> -> vector<16x16xf32>
    %123 = arith.subf %120, %122 : vector<16x16xf32>
    %124 = vector.extract_strided_slice %101 {offsets = [16, 0], sizes = [8, 8], strides = [1, 1]} : vector<32x8xf32> to vector<8x8xf32>
    %125 = vector.extract_strided_slice %123 {offsets = [0, 0], sizes = [8, 16], strides = [1, 1]} : vector<16x16xf32> to vector<8x16xf32>
    %cst_63 = arith.constant dense<0.000000e+00> : vector<8x16xf32>
    %126 = tpu.matmul %124, %125, %cst_63 {dimension_numbers = #tpu.dot_dimension_numbers<[1], [0], [0], [1], [0, 0, 1, 1], [], []>} : vector<8x8xf32>, vector<8x16xf32>, vector<8x16xf32> -> vector<8x16xf32>
    %127 = arith.mulf %126, %126 : vector<8x16xf32>
    %cst_64 = arith.constant dense<0.000000e+00> : vector<16xf32>
    %128 = vector.multi_reduction <add>, %127, %cst_64 [0] : vector<8x16xf32> to vector<16xf32>
    %129 = vector.shape_cast %128 : vector<16xf32> to vector<1x16xf32>
    %130 = arith.addf %119, %129 : vector<1x16xf32>
    %131 = vector.extract_strided_slice %123 {offsets = [8, 0], sizes = [8, 16], strides = [1, 1]} : vector<16x16xf32> to vector<8x16xf32>
    %132 = vector.extract_strided_slice %95 {offsets = [24, 16], sizes = [8, 8], strides = [1, 1]} : vector<32x32xf32> to vector<8x8xf32>
    %cst_65 = arith.constant dense<0.000000e+00> : vector<8x16xf32>
    %133 = tpu.matmul %132, %126, %cst_65 {dimension_numbers = #tpu.dot_dimension_numbers<[1], [0], [0], [1], [0, 0, 1, 1], [], []>} : vector<8x8xf32>, vector<8x16xf32>, vector<8x16xf32> -> vector<8x16xf32>
    %134 = arith.subf %131, %133 : vector<8x16xf32>
    %135 = vector.extract_strided_slice %101 {offsets = [24, 0], sizes = [8, 8], strides = [1, 1]} : vector<32x8xf32> to vector<8x8xf32>
    %cst_66 = arith.constant dense<0.000000e+00> : vector<8x16xf32>
    %136 = tpu.matmul %135, %134, %cst_66 {dimension_numbers = #tpu.dot_dimension_numbers<[1], [0], [0], [1], [0, 0, 1, 1], [], []>} : vector<8x8xf32>, vector<8x16xf32>, vector<8x16xf32> -> vector<8x16xf32>
    %137 = arith.mulf %136, %136 : vector<8x16xf32>
    %cst_67 = arith.constant dense<0.000000e+00> : vector<16xf32>
    %138 = vector.multi_reduction <add>, %137, %cst_67 [0] : vector<8x16xf32> to vector<16xf32>
    %139 = vector.shape_cast %138 : vector<16xf32> to vector<1x16xf32>
    %140 = arith.addf %130, %139 : vector<1x16xf32>
    %c3 = arith.constant 3 : index
    %c0_68 = arith.constant 0 : index
    %c0_69 = arith.constant 0 : index
    %141 = vector.load %arg1[%c3, %c0_68, %c0_69] : memref<4x32x32xf32, #tpu.memory_space<vmem>>, vector<1x32x32xf32>
    %142 = vector.shape_cast %141 : vector<1x32x32xf32> to vector<32x32xf32>
    %c3_70 = arith.constant 3 : index
    %c0_71 = arith.constant 0 : index
    %c0_72 = arith.constant 0 : index
    %143 = vector.load %arg4[%c3_70, %c0_71, %c0_72] : memref<4x32x16xf32, #tpu.memory_space<vmem>>, vector<1x32x16xf32>
    %144 = vector.shape_cast %143 : vector<1x32x16xf32> to vector<32x16xf32>
    %c3_73 = arith.constant 3 : index
    %c0_74 = arith.constant 0 : index
    %c0_75 = arith.constant 0 : index
    %145 = vector.load %arg3[%c3_73, %c0_74, %c0_75] : memref<4x32x4xf32, #tpu.memory_space<vmem>>, vector<1x32x4xf32>
    %146 = vector.shape_cast %145 : vector<1x32x4xf32> to vector<32x4xf32>
    %c3_76 = arith.constant 3 : index
    %c0_77 = arith.constant 0 : index
    %c0_78 = arith.constant 0 : index
    %147 = vector.load %arg2[%c3_76, %c0_77, %c0_78] : memref<4x32x8xf32, #tpu.memory_space<vmem>>, vector<1x32x8xf32>
    %148 = vector.shape_cast %147 : vector<1x32x8xf32> to vector<32x8xf32>
    %cst_79 = arith.constant dense<0.000000e+00> : vector<4x16xf32>
    %149 = tpu.matmul %146, %144, %cst_79 {dimension_numbers = #tpu.dot_dimension_numbers<[0], [0], [1], [1], [0, 1, 1, 1], [], []>} : vector<32x4xf32>, vector<32x16xf32>, vector<4x16xf32> -> vector<4x16xf32>
    %150 = vector.extract_strided_slice %148 {offsets = [0, 0], sizes = [8, 8], strides = [1, 1]} : vector<32x8xf32> to vector<8x8xf32>
    %151 = vector.extract_strided_slice %144 {offsets = [0, 0], sizes = [8, 16], strides = [1, 1]} : vector<32x16xf32> to vector<8x16xf32>
    %cst_80 = arith.constant dense<0.000000e+00> : vector<8x16xf32>
    %152 = tpu.matmul %150, %151, %cst_80 {dimension_numbers = #tpu.dot_dimension_numbers<[1], [0], [0], [1], [0, 0, 1, 1], [], []>} : vector<8x8xf32>, vector<8x16xf32>, vector<8x16xf32> -> vector<8x16xf32>
    %153 = arith.mulf %152, %152 : vector<8x16xf32>
    %cst_81 = arith.constant dense<0.000000e+00> : vector<16xf32>
    %154 = vector.multi_reduction <add>, %153, %cst_81 [0] : vector<8x16xf32> to vector<16xf32>
    %155 = vector.shape_cast %154 : vector<16xf32> to vector<1x16xf32>
    %156 = vector.extract_strided_slice %144 {offsets = [8, 0], sizes = [24, 16], strides = [1, 1]} : vector<32x16xf32> to vector<24x16xf32>
    %157 = vector.extract_strided_slice %142 {offsets = [8, 0], sizes = [24, 8], strides = [1, 1]} : vector<32x32xf32> to vector<24x8xf32>
    %cst_82 = arith.constant dense<0.000000e+00> : vector<24x16xf32>
    %158 = tpu.matmul %157, %152, %cst_82 {dimension_numbers = #tpu.dot_dimension_numbers<[1], [0], [0], [1], [0, 0, 1, 1], [], []>} : vector<24x8xf32>, vector<8x16xf32>, vector<24x16xf32> -> vector<24x16xf32>
    %159 = arith.subf %156, %158 : vector<24x16xf32>
    %160 = vector.extract_strided_slice %148 {offsets = [8, 0], sizes = [8, 8], strides = [1, 1]} : vector<32x8xf32> to vector<8x8xf32>
    %161 = vector.extract_strided_slice %159 {offsets = [0, 0], sizes = [8, 16], strides = [1, 1]} : vector<24x16xf32> to vector<8x16xf32>
    %cst_83 = arith.constant dense<0.000000e+00> : vector<8x16xf32>
    %162 = tpu.matmul %160, %161, %cst_83 {dimension_numbers = #tpu.dot_dimension_numbers<[1], [0], [0], [1], [0, 0, 1, 1], [], []>} : vector<8x8xf32>, vector<8x16xf32>, vector<8x16xf32> -> vector<8x16xf32>
    %163 = arith.mulf %162, %162 : vector<8x16xf32>
    %cst_84 = arith.constant dense<0.000000e+00> : vector<16xf32>
    %164 = vector.multi_reduction <add>, %163, %cst_84 [0] : vector<8x16xf32> to vector<16xf32>
    %165 = vector.shape_cast %164 : vector<16xf32> to vector<1x16xf32>
    %166 = arith.addf %155, %165 : vector<1x16xf32>
    %167 = vector.extract_strided_slice %159 {offsets = [8, 0], sizes = [16, 16], strides = [1, 1]} : vector<24x16xf32> to vector<16x16xf32>
    %168 = vector.extract_strided_slice %142 {offsets = [16, 8], sizes = [16, 8], strides = [1, 1]} : vector<32x32xf32> to vector<16x8xf32>
    %cst_85 = arith.constant dense<0.000000e+00> : vector<16x16xf32>
    %169 = tpu.matmul %168, %162, %cst_85 {dimension_numbers = #tpu.dot_dimension_numbers<[1], [0], [0], [1], [0, 0, 1, 1], [], []>} : vector<16x8xf32>, vector<8x16xf32>, vector<16x16xf32> -> vector<16x16xf32>
    %170 = arith.subf %167, %169 : vector<16x16xf32>
    %171 = vector.extract_strided_slice %148 {offsets = [16, 0], sizes = [8, 8], strides = [1, 1]} : vector<32x8xf32> to vector<8x8xf32>
    %172 = vector.extract_strided_slice %170 {offsets = [0, 0], sizes = [8, 16], strides = [1, 1]} : vector<16x16xf32> to vector<8x16xf32>
    %cst_86 = arith.constant dense<0.000000e+00> : vector<8x16xf32>
    %173 = tpu.matmul %171, %172, %cst_86 {dimension_numbers = #tpu.dot_dimension_numbers<[1], [0], [0], [1], [0, 0, 1, 1], [], []>} : vector<8x8xf32>, vector<8x16xf32>, vector<8x16xf32> -> vector<8x16xf32>
    %174 = arith.mulf %173, %173 : vector<8x16xf32>
    %cst_87 = arith.constant dense<0.000000e+00> : vector<16xf32>
    %175 = vector.multi_reduction <add>, %174, %cst_87 [0] : vector<8x16xf32> to vector<16xf32>
    %176 = vector.shape_cast %175 : vector<16xf32> to vector<1x16xf32>
    %177 = arith.addf %166, %176 : vector<1x16xf32>
    %178 = vector.extract_strided_slice %170 {offsets = [8, 0], sizes = [8, 16], strides = [1, 1]} : vector<16x16xf32> to vector<8x16xf32>
    %179 = vector.extract_strided_slice %142 {offsets = [24, 16], sizes = [8, 8], strides = [1, 1]} : vector<32x32xf32> to vector<8x8xf32>
    %cst_88 = arith.constant dense<0.000000e+00> : vector<8x16xf32>
    %180 = tpu.matmul %179, %173, %cst_88 {dimension_numbers = #tpu.dot_dimension_numbers<[1], [0], [0], [1], [0, 0, 1, 1], [], []>} : vector<8x8xf32>, vector<8x16xf32>, vector<8x16xf32> -> vector<8x16xf32>
    %181 = arith.subf %178, %180 : vector<8x16xf32>
    %182 = vector.extract_strided_slice %148 {offsets = [24, 0], sizes = [8, 8], strides = [1, 1]} : vector<32x8xf32> to vector<8x8xf32>
    %cst_89 = arith.constant dense<0.000000e+00> : vector<8x16xf32>
    %183 = tpu.matmul %182, %181, %cst_89 {dimension_numbers = #tpu.dot_dimension_numbers<[1], [0], [0], [1], [0, 0, 1, 1], [], []>} : vector<8x8xf32>, vector<8x16xf32>, vector<8x16xf32> -> vector<8x16xf32>
    %184 = arith.mulf %183, %183 : vector<8x16xf32>
    %cst_90 = arith.constant dense<0.000000e+00> : vector<16xf32>
    %185 = vector.multi_reduction <add>, %184, %cst_90 [0] : vector<8x16xf32> to vector<16xf32>
    %186 = vector.shape_cast %185 : vector<16xf32> to vector<1x16xf32>
    %187 = arith.addf %177, %186 : vector<1x16xf32>
    %188 = tpu.concatenate %8, %55, %102, %149 in 1 : vector<4x16xf32>, vector<4x16xf32>, vector<4x16xf32>, vector<4x16xf32> -> vector<4x64xf32>
    %c0_91 = arith.constant 0 : index
    %c0_92 = arith.constant 0 : index
    %c0_93 = arith.constant 0 : index
    %189 = vector.load %arg6[%c0_91, %c0_92, %c0_93] : memref<1x4x64xf32, #tpu.memory_space<vmem>>, vector<1x4x64xf32>
    %190 = vector.shape_cast %189 : vector<1x4x64xf32> to vector<4x64xf32>
    %191 = arith.addf %190, %188 : vector<4x64xf32>
    %c0_94 = arith.constant 0 : index
    %c0_95 = arith.constant 0 : index
    %c0_96 = arith.constant 0 : index
    %192 = vector.load %arg8[%c0_94, %c0_95, %c0_96] : memref<1x4x64xf32, #tpu.memory_space<vmem>>, vector<1x4x64xf32>
    %193 = vector.shape_cast %192 : vector<1x4x64xf32> to vector<4x64xf32>
    %194 = vector.shape_cast %191 : vector<4x64xf32> to vector<1x4x64xf32>
    tpu.vector_store %arg8[%c0_94, %c0_95, %c0_96], %194 {strides = array<i32>} : memref<1x4x64xf32, #tpu.memory_space<vmem>>, vector<1x4x64xf32>,
    %195 = tpu.concatenate %46, %93, %140, %187 in 1 : vector<1x16xf32>, vector<1x16xf32>, vector<1x16xf32>, vector<1x16xf32> -> vector<1x64xf32>
    %c0_97 = arith.constant 0 : index
    %c0_98 = arith.constant 0 : index
    %c0_99 = arith.constant 0 : index
    %196 = vector.load %arg5[%c0_97, %c0_98, %c0_99] : memref<1x1x64xf32, #tpu.memory_space<vmem>>, vector<1x1x64xf32>
    %197 = vector.shape_cast %196 : vector<1x1x64xf32> to vector<1x64xf32>
    %198 = arith.subf %197, %195 : vector<1x64xf32>
    %c0_100 = arith.constant 0 : index
    %c0_101 = arith.constant 0 : index
    %c0_102 = arith.constant 0 : index
    %199 = vector.load %arg7[%c0_100, %c0_101, %c0_102] : memref<1x1x64xf32, #tpu.memory_space<vmem>>, vector<1x1x64xf32>
    %200 = vector.shape_cast %199 : vector<1x1x64xf32> to vector<1x64xf32>
    %201 = arith.addf %198, %200 : vector<1x64xf32>
    %c0_103 = arith.constant 0 : index
    %c0_104 = arith.constant 0 : index
    %c0_105 = arith.constant 0 : index
    %202 = vector.load %arg9[%c0_103, %c0_104, %c0_105] : memref<1x1x64xf32, #tpu.memory_space<vmem>>, vector<1x1x64xf32>
    %203 = vector.shape_cast %202 : vector<1x1x64xf32> to vector<1x64xf32>
    %204 = vector.shape_cast %201 : vector<1x64xf32> to vector<1x1x64xf32>
    tpu.vector_store %arg9[%c0_103, %c0_104, %c0_105], %204 {strides = array<i32>} : memref<1x1x64xf32, #tpu.memory_space<vmem>>, vector<1x1x64xf32>,
    return
  }
  func.func @transform_0(%arg0: i32) -> (i32, i32, i32) {
    %c0_i32 = arith.constant 0 : i32
    %c0_i32_0 = arith.constant 0 : i32
    %c0_i32_1 = arith.constant 0 : i32
    return %arg0, %c0_i32, %c0_i32_0 : i32, i32, i32
  }
  func.func @transform_1(%arg0: i32) -> (i32, i32, i32) {
    %c0_i32 = arith.constant 0 : i32
    %c0_i32_0 = arith.constant 0 : i32
    %c0_i32_1 = arith.constant 0 : i32
    return %arg0, %c0_i32, %c0_i32_0 : i32, i32, i32
  }
  func.func @transform_2(%arg0: i32) -> (i32, i32, i32) {
    %c0_i32 = arith.constant 0 : i32
    %c0_i32_0 = arith.constant 0 : i32
    %c0_i32_1 = arith.constant 0 : i32
    return %arg0, %c0_i32, %c0_i32_0 : i32, i32, i32
  }
  func.func @transform_3(%arg0: i32) -> (i32, i32, i32) {
    %c0_i32 = arith.constant 0 : i32
    %c0_i32_0 = arith.constant 0 : i32
    %c0_i32_1 = arith.constant 0 : i32
    return %arg0, %c0_i32, %c0_i32_0 : i32, i32, i32
  }
  func.func @transform_4(%arg0: i32) -> (i32, i32, i32) {
    %c0_i32 = arith.constant 0 : i32
    %c0_i32_0 = arith.constant 0 : i32
    %c0_i32_1 = arith.constant 0 : i32
    return %arg0, %c0_i32, %c0_i32_0 : i32, i32, i32
  }
  func.func @transform_5(%arg0: i32) -> (i32, i32, i32) {
    %c0_i32 = arith.constant 0 : i32
    %c0_i32_0 = arith.constant 0 : i32
    %c0_i32_1 = arith.constant 0 : i32
    return %arg0, %c0_i32, %c0_i32_0 : i32, i32, i32
  }
  func.func @transform_6(%arg0: i32) -> (i32, i32, i32) {
    %c0_i32 = arith.constant 0 : i32
    %c0_i32_0 = arith.constant 0 : i32
    %c0_i32_1 = arith.constant 0 : i32
    return %arg0, %c0_i32, %c0_i32_0 : i32, i32, i32
  }
  func.func @transform_7(%arg0: i32) -> (i32, i32, i32) {
    %c0_i32 = arith.constant 0 : i32
    %c0_i32_0 = arith.constant 0 : i32
    %c0_i32_1 = arith.constant 0 : i32
    return %arg0, %c0_i32, %c0_i32_0 : i32, i32, i32
  }
  func.func @transform_8(%arg0: i32) -> (i32, i32, i32) {
    %c0_i32 = arith.constant 0 : i32
    %c0_i32_0 = arith.constant 0 : i32
    %c0_i32_1 = arith.constant 0 : i32
    return %arg0, %c0_i32, %c0_i32_0 : i32, i32, i32
  }
}

</mosaic_0001>

<llo_original>
// kernel: tpu_custom_call.1
$region0: #{tpu_custom_call.1}
  #allocation0 [shape = 'u32[]', space=smem, size = 0x4, offset = 0x4, fixed_abs, tag = 'smem constant byte address 0x4 - core index']
  #allocation1 [shape = 'u32[144,128]{1,0:T(1,128)}', space=vmem, size = 0x12000, scoped, tag = 'internal scratch']
  %s0 = inlined_call_operand.vmem [shape: f32[4,32,32], index: 0, kind: input, shape index: {}]
  %s1 = inlined_call_operand.vmem [shape: f32[4,32,8], index: 1, kind: input, shape index: {}]
  %s2 = inlined_call_operand.vmem [shape: f32[4,32,4], index: 2, kind: input, shape index: {}]
  %s3 = inlined_call_operand.vmem [shape: f32[4,32,16], index: 3, kind: input, shape index: {}]
  %s4 = inlined_call_operand.vmem [shape: f32[1,1,64], index: 4, kind: input, shape index: {}]
  %s5 = inlined_call_operand.vmem [shape: f32[1,4,64], index: 5, kind: input, shape index: {}]
  %s6 = inlined_call_operand.vmem [shape: f32[1,1,64], index: 6, kind: input, shape index: {}]
  %s7 = inlined_call_operand.hbm [shape: f32[1,4,64], index: 7, kind: output, shape index: {0}]
  %s8 = inlined_call_operand.hbm [shape: f32[1,1,64], index: 8, kind: output, shape index: {1}]
  %9 = xla_tuple %s7, %s8
  %s10 = sld [smem:[#allocation0]]
  $region46: #{tpu_custom_call.1} parent=0
    _
  %s12 = ssub.s32 1, %s10
  %s13 = scalar_select 0, %s12, %s10
  $region1: #{tpu_custom_call.1} parent=0
    #allocation2 [shape = 'u8[2048]{0}', space=vmem, size = 0x800, scoped, tag = 'output window, operand 0, single buffered']
    #allocation3 [shape = 's32[1]{0}', space=sflag, size = 0x4, scoped, tag = 'scoped memory for tpu_custom_call.1']
    #allocation4 [shape = 'u8[512]{0}', space=vmem, size = 0x400, scoped, tag = 'output window, operand 1, single buffered']
    #allocation5 [shape = 's32[1]{0}', space=sflag, size = 0x4, scoped, tag = 'scoped memory for tpu_custom_call.1']
    %14 = vsyncpa [#allocation3], 0
    %15 = vsyncpa [#allocation5], 0
    // Predicated region
    $region2: #{tpu_custom_call.1} parent=1 // pred_check
      _
    $region3: #{tpu_custom_call.1} parent=1 // pred_check_branch
      %17 = sbr.rel (0) target = $region5
    $region4: #{tpu_custom_call.1} parent=1 // pred_region
      _
    $region5: #{tpu_custom_call.1} parent=1 // pred_fallthru
      _
    // Predicated region
    $region6: #{tpu_custom_call.1} parent=1 // pred_check
      _
    $region7: #{tpu_custom_call.1} parent=1 // pred_check_branch
      %19 = sbr.rel (0) target = $region9
    $region8: #{tpu_custom_call.1} parent=1 // pred_region
      _
    $region9: #{tpu_custom_call.1} parent=1 // pred_fallthru
      _
    // Predicated region
    $region10: #{tpu_custom_call.1} parent=1 // pred_check
      _
    $region11: #{tpu_custom_call.1} parent=1 // pred_check_branch
      %21 = sbr.rel (0) target = $region13
    $region12: #{tpu_custom_call.1} parent=1 // pred_region
      _
    $region13: #{tpu_custom_call.1} parent=1 // pred_fallthru
      _
    // Predicated region
    $region14: #{tpu_custom_call.1} parent=1 // pred_check
      _
    $region15: #{tpu_custom_call.1} parent=1 // pred_check_branch
      %23 = sbr.rel (0) target = $region17
    $region16: #{tpu_custom_call.1} parent=1 // pred_region
      _
    $region17: #{tpu_custom_call.1} parent=1 // pred_fallthru
      _
    // Predicated region
    $region18: #{tpu_custom_call.1} parent=1 // pred_check
      _
    $region19: #{tpu_custom_call.1} parent=1 // pred_check_branch
      %25 = sbr.rel (0) target = $region21
    $region20: #{tpu_custom_call.1} parent=1 // pred_region
      _
    $region21: #{tpu_custom_call.1} parent=1 // pred_fallthru
      _
    // Predicated region
    $region22: #{tpu_custom_call.1} parent=1 // pred_check
      _
    $region23: #{tpu_custom_call.1} parent=1 // pred_check_branch
      %27 = sbr.rel (0) target = $region25
    $region24: #{tpu_custom_call.1} parent=1 // pred_region
      _
    $region25: #{tpu_custom_call.1} parent=1 // pred_fallthru
      _
    // Predicated region
    $region26: #{tpu_custom_call.1} parent=1 // pred_check
      _
    $region27: #{tpu_custom_call.1} parent=1 // pred_check_branch
      %29 = sbr.rel (0) target = $region29
    $region28: #{tpu_custom_call.1} parent=1 // pred_region
      _
    $region29: #{tpu_custom_call.1} parent=1 // pred_fallthru
      _
    %v30 = vld [vmem:[%s0 + $0x8] sm:$0xff]
    %v31 = vld [vmem:[%s0 + $0x10] sm:$0xff]
    %v32 = vld [vmem:[%s0 + $0x18] sm:$0xff]
    %v33 = vld [vmem:[%s3] sm:$0xff]
    %v34 = vld [vmem:[%s3 + $0x8] sm:$0xff]
    %v35 = vld [vmem:[%s3 + $0x10] sm:$0xff]
    %v36 = vld [vmem:[%s3 + $0x18] sm:$0xff]
    %v37 = vld [vmem:[%s2] sm:$0xff]
    %v38 = vld [vmem:[%s2 + $0x8] sm:$0xff]
    %v39 = vld [vmem:[%s2 + $0x10] sm:$0xff]
    %v40 = vld [vmem:[%s2 + $0x18] sm:$0xff]
    %v41 = vld [vmem:[%s1] sm:$0xff]
    %v42 = vld [vmem:[%s1 + $0x8] sm:$0xff]
    %v43 = vld [vmem:[%s1 + $0x10] sm:$0xff]
    %v44 = vld [vmem:[%s1 + $0x18] sm:$0xff]
    %45 = vxpose.xlu0.b32.start [1/16] %v37, 128
    %46 = vxpose.xlu0.b32.cont [2/16] %v38, 128
    %47 = vxpose.xlu0.b32.cont [3/16] %v39, 128
    %48 = vxpose.xlu0.b32.cont [4/16] %v40, 128
    %49 = vxpose.xlu0.b32.cont [5/16] 0.0, 128
    %50 = vxpose.xlu0.b32.cont [6/16] 0.0, 128
    %51 = vxpose.xlu0.b32.cont [7/16] 0.0, 128
    %52 = vxpose.xlu0.b32.cont [8/16] 0.0, 128
    %53 = vxpose.xlu0.b32.cont [9/16] 0.0, 128
    %54 = vxpose.xlu0.b32.cont [10/16] 0.0, 128
    %55 = vxpose.xlu0.b32.cont [11/16] 0.0, 128
    %56 = vxpose.xlu0.b32.cont [12/16] 0.0, 128
    %57 = vxpose.xlu0.b32.cont [13/16] 0.0, 128
    %58 = vxpose.xlu0.b32.cont [14/16] 0.0, 128
    %59 = vxpose.xlu0.b32.cont [15/16] 0.0, 128
    %60 = vxpose.xlu0.b32.end [16/16] 0.0, 128
    %v61 = vpop.trf.xlu0
    %v62 = vpop.trf.xlu0
    %v63 = vpop.trf.xlu0
    %v64 = vpop.trf.xlu0
    %v65 = vpop.trf.xlu0
    %v66 = vpop.trf.xlu0
    %v67 = vpop.trf.xlu0
    %v68 = vpop.trf.xlu0
    %v69 = vpop.trf.xlu0
    %v70 = vpop.trf.xlu0
    %v71 = vpop.trf.xlu0
    %v72 = vpop.trf.xlu0
    %v73 = vpop.trf.xlu0
    %v74 = vpop.trf.xlu0
    %v75 = vpop.trf.xlu0
    %v76 = vpop.trf.xlu0
    %vm77 = vcmask 261120
    %v79 = vsel %vm77, %v61, 0
    %81 = vmatprep.subr.mxu0 0.0
    %82 = vmatpush1.msra.mxu0 0.0
    %83 = vmatprep.subr.mxu0 0.0
    %84 = vmatpush1.msra.mxu0 0.0
    %85 = vmatprep.subr.mxu0 0.0
    %86 = vmatpush1.msra.mxu0 0.0
    %87 = vmatprep.subr.mxu0 0.0
    %88 = vmatpush1.msra.mxu0 0.0
    %89 = vmatprep.subr.mxu0 0.0
    %90 = vmatpush1.msra.mxu0 0.0
    %91 = vmatprep.subr.mxu0 0.0
    %92 = vmatpush1.msra.mxu0 0.0
    %93 = vmatprep.subr.mxu0 0.0
    %94 = vmatpush1.msra.mxu0 0.0
    %95 = vmatprep.subr.mxu0 0.0
    %96 = vmatpush1.msra.mxu0 0.0
    %97 = vmatprep.subr.mxu0 0.0
    %98 = vmatpush1.msra.mxu0 0.0
    %99 = vmatprep.subr.mxu0 0.0
    %100 = vmatpush1.msra.mxu0 0.0
    %101 = vmatprep.subr.mxu0 0.0
    %102 = vmatpush1.msra.mxu0 0.0
    %103 = vmatprep.subr.mxu0 0.0
    %104 = vmatpush1.msra.mxu0 0.0
    %105 = vmatprep.subr.mxu0 0.0
    %106 = vmatpush1.msra.mxu0 %v36
    %107 = vmatprep.subr.mxu0 0.0
    %108 = vmatpush1.msra.mxu0 %v35
    %109 = vmatprep.subr.mxu0 0.0
    %110 = vmatpush1.msra.mxu0 %v34
    %111 = vmatprep.subr.mxu0 0.0
    %112 = vmatpush1.msra.mxu0 %v33
    %113 = vmatprep.subr.mxu0 0.0
    %114 = vmatpush2.msra.mxu0 0.0
    %115 = vmatprep.subr.mxu0 0.0
    %116 = vmatpush2.msra.mxu0 0.0
    %117 = vmatprep.subr.mxu0 0.0
    %118 = vmatpush2.msra.mxu0 0.0
    %119 = vmatprep.subr.mxu0 0.0
    %120 = vmatpush2.msra.mxu0 0.0
    %121 = vmatprep.subr.mxu0 0.0
    %122 = vmatpush2.msra.mxu0 0.0
    %123 = vmatprep.subr.mxu0 0.0
    %124 = vmatpush2.msra.mxu0 0.0
    %125 = vmatprep.subr.mxu0 0.0
    %126 = vmatpush2.msra.mxu0 0.0
    %127 = vmatprep.subr.mxu0 0.0
    %128 = vmatpush2.msra.mxu0 0.0
    %129 = vmatprep.subr.mxu0 0.0
    %130 = vmatpush2.msra.mxu0 0.0
    %131 = vmatprep.subr.mxu0 0.0
    %132 = vmatpush2.msra.mxu0 0.0
    %133 = vmatprep.subr.mxu0 0.0
    %134 = vmatpush2.msra.mxu0 0.0
    %135 = vmatprep.subr.mxu0 0.0
    %136 = vmatpush2.msra.mxu0 0.0
    %137 = vmatprep.subr.mxu0 0.0
    %138 = vmatpush2.msra.mxu0 0.0
    %139 = vmatprep.subr.mxu0 0.0
    %140 = vmatpush2.msra.mxu0 0.0
    %141 = vmatprep.subr.mxu0 0.0
    %142 = vmatpush2.msra.mxu0 0.0
    %143 = vmatprep.subr.mxu0 0.0
    %144 = vmatpush2.msra.mxu0 0.0
    %145 = vmatprep.mubr.f32.mxu0 0.0
    %146 = vmatmul.mubr.f32.gmra.mxu0 %v79
    %v147 = vpop.f32.mrf.mxu0
    %v148 = vadd.f32 0.0, %v147
    %v149 = vpop.f32.mrf.mxu0
    %150 = vdwg.mxu0
    %vm151 = vcmask 64512
    %v153 = vsel %vm151, %v41, 0
    %155 = vmatprep.subr.mxu0 0.0
    %156 = vmatpush1.msra.mxu0 0.0
    %157 = vmatprep.subr.mxu0 0.0
    %158 = vmatpush1.msra.mxu0 0.0
    %159 = vmatprep.subr.mxu0 0.0
    %160 = vmatpush1.msra.mxu0 0.0
    %161 = vmatprep.subr.mxu0 0.0
    %162 = vmatpush1.msra.mxu0 0.0
    %163 = vmatprep.subr.mxu0 0.0
    %164 = vmatpush1.msra.mxu0 0.0
    %165 = vmatprep.subr.mxu0 0.0
    %166 = vmatpush1.msra.mxu0 0.0
    %167 = vmatprep.subr.mxu0 0.0
    %168 = vmatpush1.msra.mxu0 0.0
    %169 = vmatprep.subr.mxu0 0.0
    %170 = vmatpush1.msra.mxu0 0.0
    %171 = vmatprep.subr.mxu0 0.0
    %172 = vmatpush1.msra.mxu0 0.0
    %173 = vmatprep.subr.mxu0 0.0
    %174 = vmatpush1.msra.mxu0 0.0
    %175 = vmatprep.subr.mxu0 0.0
    %176 = vmatpush1.msra.mxu0 0.0
    %177 = vmatprep.subr.mxu0 0.0
    %178 = vmatpush1.msra.mxu0 0.0
    %179 = vmatprep.subr.mxu0 0.0
    %180 = vmatpush1.msra.mxu0 0.0
    %181 = vmatprep.subr.mxu0 0.0
    %182 = vmatpush1.msra.mxu0 0.0
    %183 = vmatprep.subr.mxu0 0.0
    %184 = vmatpush1.msra.mxu0 0.0
    %185 = vmatprep.subr.mxu0 0.0
    %186 = vmatpush1.msra.mxu0 %v33
    %187 = vmatprep.subr.mxu0 0.0
    %188 = vmatpush2.msra.mxu0 0.0
    %189 = vmatprep.subr.mxu0 0.0
    %190 = vmatpush2.msra.mxu0 0.0
    %191 = vmatprep.subr.mxu0 0.0
    %192 = vmatpush2.msra.mxu0 0.0
    %193 = vmatprep.subr.mxu0 0.0
    %194 = vmatpush2.msra.mxu0 0.0
    %195 = vmatprep.subr.mxu0 0.0
    %196 = vmatpush2.msra.mxu0 0.0
    %197 = vmatprep.subr.mxu0 0.0
    %198 = vmatpush2.msra.mxu0 0.0
    %199 = vmatprep.subr.mxu0 0.0
    %200 = vmatpush2.msra.mxu0 0.0
    %201 = vmatprep.subr.mxu0 0.0
    %202 = vmatpush2.msra.mxu0 0.0
    %203 = vmatprep.subr.mxu0 0.0
    %204 = vmatpush2.msra.mxu0 0.0
    %205 = vmatprep.subr.mxu0 0.0
    %206 = vmatpush2.msra.mxu0 0.0
    %207 = vmatprep.subr.mxu0 0.0
    %208 = vmatpush2.msra.mxu0 0.0
    %209 = vmatprep.subr.mxu0 0.0
    %210 = vmatpush2.msra.mxu0 0.0
    %211 = vmatprep.subr.mxu0 0.0
    %212 = vmatpush2.msra.mxu0 0.0
    %213 = vmatprep.subr.mxu0 0.0
    %214 = vmatpush2.msra.mxu0 0.0
    %215 = vmatprep.subr.mxu0 0.0
    %216 = vmatpush2.msra.mxu0 0.0
    %217 = vmatprep.subr.mxu0 0.0
    %218 = vmatpush2.msra.mxu0 0.0
    %219 = vmatprep.mubr.f32.mxu0 0.0
    %220 = vmatmul.mubr.f32.gmra.mxu0 %v153
    %v221 = vpop.f32.mrf.mxu0
    %v222 = vadd.f32 0.0, %v221
    %v223 = vpop.f32.mrf.mxu0
    %224 = vdwg.mxu0
    %v225 = vmul.f32 %v222, %v222
    %vm226 = vcmask 130048
    %v227 = vsel %vm226, %v225, 0.0
    %v228 = vrot.slane %v227, 4
    %v229 = vadd.f32 %v227, %v228
    %v230 = vrot.slane %v229, 2
    %v231 = vadd.f32 %v229, %v230
    %v232 = vrot.slane %v231, 1
    %v233 = vadd.f32 %v231, %v232
    %v235 = vsel %vm151, %v30, 0
    %v238 = vsel %vm151, %v31, 0
    %v241 = vsel %vm151, %v32, 0
    %243 = vmatprep.subr.mxu0 0.0
    %244 = vmatpush1.msra.mxu0 0.0
    %245 = vmatprep.subr.mxu0 0.0
    %246 = vmatpush1.msra.mxu0 0.0
    %247 = vmatprep.subr.mxu0 0.0
    %248 = vmatpush1.msra.mxu0 0.0
    %249 = vmatprep.subr.mxu0 0.0
    %250 = vmatpush1.msra.mxu0 0.0
    %251 = vmatprep.subr.mxu0 0.0
    %252 = vmatpush1.msra.mxu0 0.0
    %253 = vmatprep.subr.mxu0 0.0
    %254 = vmatpush1.msra.mxu0 0.0
    %255 = vmatprep.subr.mxu0 0.0
    %256 = vmatpush1.msra.mxu0 0.0
    %257 = vmatprep.subr.mxu0 0.0
    %258 = vmatpush1.msra.mxu0 0.0
    %259 = vmatprep.subr.mxu0 0.0
    %260 = vmatpush1.msra.mxu0 0.0
    %261 = vmatprep.subr.mxu0 0.0
    %262 = vmatpush1.msra.mxu0 0.0
    %263 = vmatprep.subr.mxu0 0.0
    %264 = vmatpush1.msra.mxu0 0.0
    %265 = vmatprep.subr.mxu0 0.0
    %266 = vmatpush1.msra.mxu0 0.0
    %267 = vmatprep.subr.mxu0 0.0
    %268 = vmatpush1.msra.mxu0 0.0
    %269 = vmatprep.subr.mxu0 0.0
    %270 = vmatpush1.msra.mxu0 0.0
    %271 = vmatprep.subr.mxu0 0.0
    %272 = vmatpush1.msra.mxu0 0.0
    %273 = vmatprep.subr.mxu0 0.0
    %274 = vmatpush1.msra.mxu0 %v222
    %275 = vmatprep.subr.mxu0 0.0
    %276 = vmatpush2.msra.mxu0 0.0
    %277 = vmatprep.subr.mxu0 0.0
    %278 = vmatpush2.msra.mxu0 0.0
    %279 = vmatprep.subr.mxu0 0.0
    %280 = vmatpush2.msra.mxu0 0.0
    %281 = vmatprep.subr.mxu0 0.0
    %282 = vmatpush2.msra.mxu0 0.0
    %283 = vmatprep.subr.mxu0 0.0
    %284 = vmatpush2.msra.mxu0 0.0
    %285 = vmatprep.subr.mxu0 0.0
    %286 = vmatpush2.msra.mxu0 0.0
    %287 = vmatprep.subr.mxu0 0.0
    %288 = vmatpush2.msra.mxu0 0.0
    %289 = vmatprep.subr.mxu0 0.0
    %290 = vmatpush2.msra.mxu0 0.0
    %291 = vmatprep.subr.mxu0 0.0
    %292 = vmatpush2.msra.mxu0 0.0
    %293 = vmatprep.subr.mxu0 0.0
    %294 = vmatpush2.msra.mxu0 0.0
    %295 = vmatprep.subr.mxu0 0.0
    %296 = vmatpush2.msra.mxu0 0.0
    %297 = vmatprep.subr.mxu0 0.0
    %298 = vmatpush2.msra.mxu0 0.0
    %299 = vmatprep.subr.mxu0 0.0
    %300 = vmatpush2.msra.mxu0 0.0
    %301 = vmatprep.subr.mxu0 0.0
    %302 = vmatpush2.msra.mxu0 0.0
    %303 = vmatprep.subr.mxu0 0.0
    %304 = vmatpush2.msra.mxu0 0.0
    %305 = vmatprep.subr.mxu0 0.0
    %306 = vmatpush2.msra.mxu0 0.0
    %307 = vmatprep.mubr.f32.mxu0 0.0
    %308 = vmatmul.mubr.f32.gmra.mxu0 %v235
    %v309 = vpop.f32.mrf.mxu0
    %v310 = vadd.f32 0.0, %v309
    %v311 = vpop.f32.mrf.mxu0
    %312 = vmatprep.mubr.f32.mxu0 0.0
    %313 = vmatmul.mubr.f32.gmra.mxu0 %v238
    %v314 = vpop.f32.mrf.mxu0
    %v315 = vadd.f32 0.0, %v314
    %v316 = vpop.f32.mrf.mxu0
    %317 = vmatprep.mubr.f32.mxu0 0.0
    %318 = vmatmul.mubr.f32.gmra.mxu0 %v241
    %v319 = vpop.f32.mrf.mxu0
    %v320 = vadd.f32 0.0, %v319
    %v321 = vpop.f32.mrf.mxu0
    %322 = vdwg.mxu0
    %v323 = vsub.f32 %v34, %v310
    %v324 = vsub.f32 %v35, %v315
    %v325 = vsub.f32 %v36, %v320
    %v327 = vsel %vm151, %v42, 0
    %329 = vmatprep.subr.mxu0 0.0
    %330 = vmatpush1.msra.mxu0 0.0
    %331 = vmatprep.subr.mxu0 0.0
    %332 = vmatpush1.msra.mxu0 0.0
    %333 = vmatprep.subr.mxu0 0.0
    %334 = vmatpush1.msra.mxu0 0.0
    %335 = vmatprep.subr.mxu0 0.0
    %336 = vmatpush1.msra.mxu0 0.0
    %337 = vmatprep.subr.mxu0 0.0
    %338 = vmatpush1.msra.mxu0 0.0
    %339 = vmatprep.subr.mxu0 0.0
    %340 = vmatpush1.msra.mxu0 0.0
    %341 = vmatprep.subr.mxu0 0.0
    %342 = vmatpush1.msra.mxu0 0.0
    %343 = vmatprep.subr.mxu0 0.0
    %344 = vmatpush1.msra.mxu0 0.0
    %345 = vmatprep.subr.mxu0 0.0
    %346 = vmatpush1.msra.mxu0 0.0
    %347 = vmatprep.subr.mxu0 0.0
    %348 = vmatpush1.msra.mxu0 0.0
    %349 = vmatprep.subr.mxu0 0.0
    %350 = vmatpush1.msra.mxu0 0.0
    %351 = vmatprep.subr.mxu0 0.0
    %352 = vmatpush1.msra.mxu0 0.0
    %353 = vmatprep.subr.mxu0 0.0
    %354 = vmatpush1.msra.mxu0 0.0
    %355 = vmatprep.subr.mxu0 0.0
    %356 = vmatpush1.msra.mxu0 0.0
    %357 = vmatprep.subr.mxu0 0.0
    %358 = vmatpush1.msra.mxu0 0.0
    %359 = vmatprep.subr.mxu0 0.0
    %360 = vmatpush1.msra.mxu0 %v323
    %361 = vmatprep.subr.mxu0 0.0
    %362 = vmatpush2.msra.mxu0 0.0
    %363 = vmatprep.subr.mxu0 0.0
    %364 = vmatpush2.msra.mxu0 0.0
    %365 = vmatprep.subr.mxu0 0.0
    %366 = vmatpush2.msra.mxu0 0.0
    %367 = vmatprep.subr.mxu0 0.0
    %368 = vmatpush2.msra.mxu0 0.0
    %369 = vmatprep.subr.mxu0 0.0
    %370 = vmatpush2.msra.mxu0 0.0
    %371 = vmatprep.subr.mxu0 0.0
    %372 = vmatpush2.msra.mxu0 0.0
    %373 = vmatprep.subr.mxu0 0.0
    %374 = vmatpush2.msra.mxu0 0.0
    %375 = vmatprep.subr.mxu0 0.0
    %376 = vmatpush2.msra.mxu0 0.0
    %377 = vmatprep.subr.mxu0 0.0
    %378 = vmatpush2.msra.mxu0 0.0
    %379 = vmatprep.subr.mxu0 0.0
    %380 = vmatpush2.msra.mxu0 0.0
    %381 = vmatprep.subr.mxu0 0.0
    %382 = vmatpush2.msra.mxu0 0.0
    %383 = vmatprep.subr.mxu0 0.0
    %384 = vmatpush2.msra.mxu0 0.0
    %385 = vmatprep.subr.mxu0 0.0
    %386 = vmatpush2.msra.mxu0 0.0
    %387 = vmatprep.subr.mxu0 0.0
    %388 = vmatpush2.msra.mxu0 0.0
    %389 = vmatprep.subr.mxu0 0.0
    %390 = vmatpush2.msra.mxu0 0.0
    %391 = vmatprep.subr.mxu0 0.0
    %392 = vmatpush2.msra.mxu0 0.0
    %393 = vmatprep.mubr.f32.mxu0 0.0
    %394 = vmatmul.mubr.f32.gmra.mxu0 %v327
    %v395 = vpop.f32.mrf.mxu0
    %v396 = vadd.f32 0.0, %v395
    %v397 = vpop.f32.mrf.mxu0
    %398 = vdwg.mxu0
    %v399 = vmul.f32 %v396, %v396
    %v400 = vsel %vm226, %v399, 0.0
    %v401 = vrot.slane %v400, 4
    %v402 = vadd.f32 %v400, %v401
    %v403 = vrot.slane %v402, 2
    %v404 = vadd.f32 %v402, %v403
    %v405 = vrot.slane %v404, 1
    %v406 = vadd.f32 %v404, %v405
    %v407 = vadd.f32 %v233, %v406
    %408 = vrot.lane.b32.xlu0 %v31, 120
    %v409 = vpop.permute.xlu0 %408
    %410 = vrot.lane.b32.xlu0 %v32, 120
    %v411 = vpop.permute.xlu0 %410
    %v412 = vsel %vm151, %v409, 0
    %v414 = vsel %vm151, %v411, 0
    %416 = vmatprep.subr.mxu0 0.0
    %417 = vmatpush1.msra.mxu0 0.0
    %418 = vmatprep.subr.mxu0 0.0
    %419 = vmatpush1.msra.mxu0 0.0
    %420 = vmatprep.subr.mxu0 0.0
    %421 = vmatpush1.msra.mxu0 0.0
    %422 = vmatprep.subr.mxu0 0.0
    %423 = vmatpush1.msra.mxu0 0.0
    %424 = vmatprep.subr.mxu0 0.0
    %425 = vmatpush1.msra.mxu0 0.0
    %426 = vmatprep.subr.mxu0 0.0
    %427 = vmatpush1.msra.mxu0 0.0
    %428 = vmatprep.subr.mxu0 0.0
    %429 = vmatpush1.msra.mxu0 0.0
    %430 = vmatprep.subr.mxu0 0.0
    %431 = vmatpush1.msra.mxu0 0.0
    %432 = vmatprep.subr.mxu0 0.0
    %433 = vmatpush1.msra.mxu0 0.0
    %434 = vmatprep.subr.mxu0 0.0
    %435 = vmatpush1.msra.mxu0 0.0
    %436 = vmatprep.subr.mxu0 0.0
    %437 = vmatpush1.msra.mxu0 0.0
    %438 = vmatprep.subr.mxu0 0.0
    %439 = vmatpush1.msra.mxu0 0.0
    %440 = vmatprep.subr.mxu0 0.0
    %441 = vmatpush1.msra.mxu0 0.0
    %442 = vmatprep.subr.mxu0 0.0
    %443 = vmatpush1.msra.mxu0 0.0
    %444 = vmatprep.subr.mxu0 0.0
    %445 = vmatpush1.msra.mxu0 0.0
    %446 = vmatprep.subr.mxu0 0.0
    %447 = vmatpush1.msra.mxu0 %v396
    %448 = vmatprep.subr.mxu0 0.0
    %449 = vmatpush2.msra.mxu0 0.0
    %450 = vmatprep.subr.mxu0 0.0
    %451 = vmatpush2.msra.mxu0 0.0
    %452 = vmatprep.subr.mxu0 0.0
    %453 = vmatpush2.msra.mxu0 0.0
    %454 = vmatprep.subr.mxu0 0.0
    %455 = vmatpush2.msra.mxu0 0.0
    %456 = vmatprep.subr.mxu0 0.0
    %457 = vmatpush2.msra.mxu0 0.0
    %458 = vmatprep.subr.mxu0 0.0
    %459 = vmatpush2.msra.mxu0 0.0
    %460 = vmatprep.subr.mxu0 0.0
    %461 = vmatpush2.msra.mxu0 0.0
    %462 = vmatprep.subr.mxu0 0.0
    %463 = vmatpush2.msra.mxu0 0.0
    %464 = vmatprep.subr.mxu0 0.0
    %465 = vmatpush2.msra.mxu0 0.0
    %466 = vmatprep.subr.mxu0 0.0
    %467 = vmatpush2.msra.mxu0 0.0
    %468 = vmatprep.subr.mxu0 0.0
    %469 = vmatpush2.msra.mxu0 0.0
    %470 = vmatprep.subr.mxu0 0.0
    %471 = vmatpush2.msra.mxu0 0.0
    %472 = vmatprep.subr.mxu0 0.0
    %473 = vmatpush2.msra.mxu0 0.0
    %474 = vmatprep.subr.mxu0 0.0
    %475 = vmatpush2.msra.mxu0 0.0
    %476 = vmatprep.subr.mxu0 0.0
    %477 = vmatpush2.msra.mxu0 0.0
    %478 = vmatprep.subr.mxu0 0.0
    %479 = vmatpush2.msra.mxu0 0.0
    %480 = vmatprep.mubr.f32.mxu0 0.0
    %481 = vmatmul.mubr.f32.gmra.mxu0 %v412
    %v482 = vpop.f32.mrf.mxu0
    %v483 = vadd.f32 0.0, %v482
    %v484 = vpop.f32.mrf.mxu0
    %485 = vmatprep.mubr.f32.mxu0 0.0
    %486 = vmatmul.mubr.f32.gmra.mxu0 %v414
    %v487 = vpop.f32.mrf.mxu0
    %v488 = vadd.f32 0.0, %v487
    %v489 = vpop.f32.mrf.mxu0
    %490 = vdwg.mxu0
    %v491 = vsub.f32 %v324, %v483
    %v492 = vsub.f32 %v325, %v488
    %v494 = vsel %vm151, %v43, 0
    %496 = vmatprep.subr.mxu0 0.0
    %497 = vmatpush1.msra.mxu0 0.0
    %498 = vmatprep.subr.mxu0 0.0
    %499 = vmatpush1.msra.mxu0 0.0
    %500 = vmatprep.subr.mxu0 0.0
    %501 = vmatpush1.msra.mxu0 0.0
    %502 = vmatprep.subr.mxu0 0.0
    %503 = vmatpush1.msra.mxu0 0.0
    %504 = vmatprep.subr.mxu0 0.0
    %505 = vmatpush1.msra.mxu0 0.0
    %506 = vmatprep.subr.mxu0 0.0
    %507 = vmatpush1.msra.mxu0 0.0
    %508 = vmatprep.subr.mxu0 0.0
    %509 = vmatpush1.msra.mxu0 0.0
    %510 = vmatprep.subr.mxu0 0.0
    %511 = vmatpush1.msra.mxu0 0.0
    %512 = vmatprep.subr.mxu0 0.0
    %513 = vmatpush1.msra.mxu0 0.0
    %514 = vmatprep.subr.mxu0 0.0
    %515 = vmatpush1.msra.mxu0 0.0
    %516 = vmatprep.subr.mxu0 0.0
    %517 = vmatpush1.msra.mxu0 0.0
    %518 = vmatprep.subr.mxu0 0.0
    %519 = vmatpush1.msra.mxu0 0.0
    %520 = vmatprep.subr.mxu0 0.0
    %521 = vmatpush1.msra.mxu0 0.0
    %522 = vmatprep.subr.mxu0 0.0
    %523 = vmatpush1.msra.mxu0 0.0
    %524 = vmatprep.subr.mxu0 0.0
    %525 = vmatpush1.msra.mxu0 0.0
    %526 = vmatprep.subr.mxu0 0.0
    %527 = vmatpush1.msra.mxu0 %v491
    %528 = vmatprep.subr.mxu0 0.0
    %529 = vmatpush2.msra.mxu0 0.0
    %530 = vmatprep.subr.mxu0 0.0
    %531 = vmatpush2.msra.mxu0 0.0
    %532 = vmatprep.subr.mxu0 0.0
    %533 = vmatpush2.msra.mxu0 0.0
    %534 = vmatprep.subr.mxu0 0.0
    %535 = vmatpush2.msra.mxu0 0.0
    %536 = vmatprep.subr.mxu0 0.0
    %537 = vmatpush2.msra.mxu0 0.0
    %538 = vmatprep.subr.mxu0 0.0
    %539 = vmatpush2.msra.mxu0 0.0
    %540 = vmatprep.subr.mxu0 0.0
    %541 = vmatpush2.msra.mxu0 0.0
    %542 = vmatprep.subr.mxu0 0.0
    %543 = vmatpush2.msra.mxu0 0.0
    %544 = vmatprep.subr.mxu0 0.0
    %545 = vmatpush2.msra.mxu0 0.0
    %546 = vmatprep.subr.mxu0 0.0
    %547 = vmatpush2.msra.mxu0 0.0
    %548 = vmatprep.subr.mxu0 0.0
    %549 = vmatpush2.msra.mxu0 0.0
    %550 = vmatprep.subr.mxu0 0.0
    %551 = vmatpush2.msra.mxu0 0.0
    %552 = vmatprep.subr.mxu0 0.0
    %553 = vmatpush2.msra.mxu0 0.0
    %554 = vmatprep.subr.mxu0 0.0
    %555 = vmatpush2.msra.mxu0 0.0
    %556 = vmatprep.subr.mxu0 0.0
    %557 = vmatpush2.msra.mxu0 0.0
    %558 = vmatprep.subr.mxu0 0.0
    %559 = vmatpush2.msra.mxu0 0.0
    %560 = vmatprep.mubr.f32.mxu0 0.0
    %561 = vmatmul.mubr.f32.gmra.mxu0 %v494
    %v562 = vpop.f32.mrf.mxu0
    %v563 = vadd.f32 0.0, %v562
    %v564 = vpop.f32.mrf.mxu0
    %565 = vdwg.mxu0
    %v566 = vmul.f32 %v563, %v563
    %v567 = vsel %vm226, %v566, 0.0
    %v568 = vrot.slane %v567, 4
    %v569 = vadd.f32 %v567, %v568
    %v570 = vrot.slane %v569, 2
    %v571 = vadd.f32 %v569, %v570
    %v572 = vrot.slane %v571, 1
    %v573 = vadd.f32 %v571, %v572
    %v574 = vadd.f32 %v407, %v573
    %575 = vrot.lane.b32.xlu0 %v32, 112
    %v576 = vpop.permute.xlu0 %575
    %v577 = vsel %vm151, %v576, 0
    %579 = vmatprep.subr.mxu0 0.0
    %580 = vmatpush1.msra.mxu0 0.0
    %581 = vmatprep.subr.mxu0 0.0
    %582 = vmatpush1.msra.mxu0 0.0
    %583 = vmatprep.subr.mxu0 0.0
    %584 = vmatpush1.msra.mxu0 0.0
    %585 = vmatprep.subr.mxu0 0.0
    %586 = vmatpush1.msra.mxu0 0.0
    %587 = vmatprep.subr.mxu0 0.0
    %588 = vmatpush1.msra.mxu0 0.0
    %589 = vmatprep.subr.mxu0 0.0
    %590 = vmatpush1.msra.mxu0 0.0
    %591 = vmatprep.subr.mxu0 0.0
    %592 = vmatpush1.msra.mxu0 0.0
    %593 = vmatprep.subr.mxu0 0.0
    %594 = vmatpush1.msra.mxu0 0.0
    %595 = vmatprep.subr.mxu0 0.0
    %596 = vmatpush1.msra.mxu0 0.0
    %597 = vmatprep.subr.mxu0 0.0
    %598 = vmatpush1.msra.mxu0 0.0
    %599 = vmatprep.subr.mxu0 0.0
    %600 = vmatpush1.msra.mxu0 0.0
    %601 = vmatprep.subr.mxu0 0.0
    %602 = vmatpush1.msra.mxu0 0.0
    %603 = vmatprep.subr.mxu0 0.0
    %604 = vmatpush1.msra.mxu0 0.0
    %605 = vmatprep.subr.mxu0 0.0
    %606 = vmatpush1.msra.mxu0 0.0
    %607 = vmatprep.subr.mxu0 0.0
    %608 = vmatpush1.msra.mxu0 0.0
    %609 = vmatprep.subr.mxu0 0.0
    %610 = vmatpush1.msra.mxu0 %v563
    %611 = vmatprep.subr.mxu0 0.0
    %612 = vmatpush2.msra.mxu0 0.0
    %613 = vmatprep.subr.mxu0 0.0
    %614 = vmatpush2.msra.mxu0 0.0
    %615 = vmatprep.subr.mxu0 0.0
    %616 = vmatpush2.msra.mxu0 0.0
    %617 = vmatprep.subr.mxu0 0.0
    %618 = vmatpush2.msra.mxu0 0.0
    %619 = vmatprep.subr.mxu0 0.0
    %620 = vmatpush2.msra.mxu0 0.0
    %621 = vmatprep.subr.mxu0 0.0
    %622 = vmatpush2.msra.mxu0 0.0
    %623 = vmatprep.subr.mxu0 0.0
    %624 = vmatpush2.msra.mxu0 0.0
    %625 = vmatprep.subr.mxu0 0.0
    %626 = vmatpush2.msra.mxu0 0.0
    %627 = vmatprep.subr.mxu0 0.0
    %628 = vmatpush2.msra.mxu0 0.0
    %629 = vmatprep.subr.mxu0 0.0
    %630 = vmatpush2.msra.mxu0 0.0
    %631 = vmatprep.subr.mxu0 0.0
    %632 = vmatpush2.msra.mxu0 0.0
    %633 = vmatprep.subr.mxu0 0.0
    %634 = vmatpush2.msra.mxu0 0.0
    %635 = vmatprep.subr.mxu0 0.0
    %636 = vmatpush2.msra.mxu0 0.0
    %637 = vmatprep.subr.mxu0 0.0
    %638 = vmatpush2.msra.mxu0 0.0
    %639 = vmatprep.subr.mxu0 0.0
    %640 = vmatpush2.msra.mxu0 0.0
    %641 = vmatprep.subr.mxu0 0.0
    %642 = vmatpush2.msra.mxu0 0.0
    %643 = vmatprep.mubr.f32.mxu0 0.0
    %644 = vmatmul.mubr.f32.gmra.mxu0 %v577
    %v645 = vpop.f32.mrf.mxu0
    %v646 = vadd.f32 0.0, %v645
    %v647 = vpop.f32.mrf.mxu0
    %648 = vdwg.mxu0
    %v649 = vsub.f32 %v492, %v646
    %v651 = vsel %vm151, %v44, 0
    %653 = vmatprep.subr.mxu0 0.0
    %654 = vmatpush1.msra.mxu0 0.0
    %655 = vmatprep.subr.mxu0 0.0
    %656 = vmatpush1.msra.mxu0 0.0
    %657 = vmatprep.subr.mxu0 0.0
    %658 = vmatpush1.msra.mxu0 0.0
    %659 = vmatprep.subr.mxu0 0.0
    %660 = vmatpush1.msra.mxu0 0.0
    %661 = vmatprep.subr.mxu0 0.0
    %662 = vmatpush1.msra.mxu0 0.0
    %663 = vmatprep.subr.mxu0 0.0
    %664 = vmatpush1.msra.mxu0 0.0
    %665 = vmatprep.subr.mxu0 0.0
    %666 = vmatpush1.msra.mxu0 0.0
    %667 = vmatprep.subr.mxu0 0.0
    %668 = vmatpush1.msra.mxu0 0.0
    %669 = vmatprep.subr.mxu0 0.0
    %670 = vmatpush1.msra.mxu0 0.0
    %671 = vmatprep.subr.mxu0 0.0
    %672 = vmatpush1.msra.mxu0 0.0
    %673 = vmatprep.subr.mxu0 0.0
    %674 = vmatpush1.msra.mxu0 0.0
    %675 = vmatprep.subr.mxu0 0.0
    %676 = vmatpush1.msra.mxu0 0.0
    %677 = vmatprep.subr.mxu0 0.0
    %678 = vmatpush1.msra.mxu0 0.0
    %679 = vmatprep.subr.mxu0 0.0
    %680 = vmatpush1.msra.mxu0 0.0
    %681 = vmatprep.subr.mxu0 0.0
    %682 = vmatpush1.msra.mxu0 0.0
    %683 = vmatprep.subr.mxu0 0.0
    %684 = vmatpush1.msra.mxu0 %v649
    %685 = vmatprep.subr.mxu0 0.0
    %686 = vmatpush2.msra.mxu0 0.0
    %687 = vmatprep.subr.mxu0 0.0
    %688 = vmatpush2.msra.mxu0 0.0
    %689 = vmatprep.subr.mxu0 0.0
    %690 = vmatpush2.msra.mxu0 0.0
    %691 = vmatprep.subr.mxu0 0.0
    %692 = vmatpush2.msra.mxu0 0.0
    %693 = vmatprep.subr.mxu0 0.0
    %694 = vmatpush2.msra.mxu0 0.0
    %695 = vmatprep.subr.mxu0 0.0
    %696 = vmatpush2.msra.mxu0 0.0
    %697 = vmatprep.subr.mxu0 0.0
    %698 = vmatpush2.msra.mxu0 0.0
    %699 = vmatprep.subr.mxu0 0.0
    %700 = vmatpush2.msra.mxu0 0.0
    %701 = vmatprep.subr.mxu0 0.0
    %702 = vmatpush2.msra.mxu0 0.0
    %703 = vmatprep.subr.mxu0 0.0
    %704 = vmatpush2.msra.mxu0 0.0
    %705 = vmatprep.subr.mxu0 0.0
    %706 = vmatpush2.msra.mxu0 0.0
    %707 = vmatprep.subr.mxu0 0.0
    %708 = vmatpush2.msra.mxu0 0.0
    %709 = vmatprep.subr.mxu0 0.0
    %710 = vmatpush2.msra.mxu0 0.0
    %711 = vmatprep.subr.mxu0 0.0
    %712 = vmatpush2.msra.mxu0 0.0
    %713 = vmatprep.subr.mxu0 0.0
    %714 = vmatpush2.msra.mxu0 0.0
    %715 = vmatprep.subr.mxu0 0.0
    %716 = vmatpush2.msra.mxu0 0.0
    %717 = vmatprep.mubr.f32.mxu0 0.0
    %718 = vmatmul.mubr.f32.gmra.mxu0 %v651
    %v719 = vpop.f32.mrf.mxu0
    %v720 = vadd.f32 0.0, %v719
    %v721 = vpop.f32.mrf.mxu0
    %722 = vdwg.mxu0
    %v723 = vmul.f32 %v720, %v720
    %v724 = vsel %vm226, %v723, 0.0
    %v725 = vrot.slane %v724, 4
    %v726 = vadd.f32 %v724, %v725
    %v727 = vrot.slane %v726, 2
    %v728 = vadd.f32 %v726, %v727
    %v729 = vrot.slane %v728, 1
    %v730 = vadd.f32 %v728, %v729
    %v731 = vadd.f32 %v574, %v730
    %s732 = scalar_lea.vmem %s0, 32
    %v733 = vld [vmem:[%s732 + $0x8] sm:$0xff]
    %v734 = vld [vmem:[%s732 + $0x10] sm:$0xff]
    %v735 = vld [vmem:[%s732 + $0x18] sm:$0xff]
    %s736 = scalar_lea.vmem %s3, 32
    %v737 = vld [vmem:[%s736] sm:$0xff]
    %v738 = vld [vmem:[%s736 + $0x8] sm:$0xff]
    %v739 = vld [vmem:[%s736 + $0x10] sm:$0xff]
    %v740 = vld [vmem:[%s736 + $0x18] sm:$0xff]
    %s741 = scalar_lea.vmem %s2, 32
    %v742 = vld [vmem:[%s741] sm:$0xff]
    %v743 = vld [vmem:[%s741 + $0x8] sm:$0xff]
    %v744 = vld [vmem:[%s741 + $0x10] sm:$0xff]
    %v745 = vld [vmem:[%s741 + $0x18] sm:$0xff]
    %s746 = scalar_lea.vmem %s1, 32
    %v747 = vld [vmem:[%s746] sm:$0xff]
    %v748 = vld [vmem:[%s746 + $0x8] sm:$0xff]
    %v749 = vld [vmem:[%s746 + $0x10] sm:$0xff]
    %v750 = vld [vmem:[%s746 + $0x18] sm:$0xff]
    %751 = vxpose.xlu0.b32.start [1/16] %v742, 128
    %752 = vxpose.xlu0.b32.cont [2/16] %v743, 128
    %753 = vxpose.xlu0.b32.cont [3/16] %v744, 128
    %754 = vxpose.xlu0.b32.cont [4/16] %v745, 128
    %755 = vxpose.xlu0.b32.cont [5/16] 0.0, 128
    %756 = vxpose.xlu0.b32.cont [6/16] 0.0, 128
    %757 = vxpose.xlu0.b32.cont [7/16] 0.0, 128
    %758 = vxpose.xlu0.b32.cont [8/16] 0.0, 128
    %759 = vxpose.xlu0.b32.cont [9/16] 0.0, 128
    %760 = vxpose.xlu0.b32.cont [10/16] 0.0, 128
    %761 = vxpose.xlu0.b32.cont [11/16] 0.0, 128
    %762 = vxpose.xlu0.b32.cont [12/16] 0.0, 128
    %763 = vxpose.xlu0.b32.cont [13/16] 0.0, 128
    %764 = vxpose.xlu0.b32.cont [14/16] 0.0, 128
    %765 = vxpose.xlu0.b32.cont [15/16] 0.0, 128
    %766 = vxpose.xlu0.b32.end [16/16] 0.0, 128
    %v767 = vpop.trf.xlu0
    %v768 = vpop.trf.xlu0
    %v769 = vpop.trf.xlu0
    %v770 = vpop.trf.xlu0
    %v771 = vpop.trf.xlu0
    %v772 = vpop.trf.xlu0
    %v773 = vpop.trf.xlu0
    %v774 = vpop.trf.xlu0
    %v775 = vpop.trf.xlu0
    %v776 = vpop.trf.xlu0
    %v777 = vpop.trf.xlu0
    %v778 = vpop.trf.xlu0
    %v779 = vpop.trf.xlu0
    %v780 = vpop.trf.xlu0
    %v781 = vpop.trf.xlu0
    %v782 = vpop.trf.xlu0
    %v784 = vsel %vm77, %v767, 0
    %786 = vmatprep.subr.mxu0 0.0
    %787 = vmatpush1.msra.mxu0 0.0
    %788 = vmatprep.subr.mxu0 0.0
    %789 = vmatpush1.msra.mxu0 0.0
    %790 = vmatprep.subr.mxu0 0.0
    %791 = vmatpush1.msra.mxu0 0.0
    %792 = vmatprep.subr.mxu0 0.0
    %793 = vmatpush1.msra.mxu0 0.0
    %794 = vmatprep.subr.mxu0 0.0
    %795 = vmatpush1.msra.mxu0 0.0
    %796 = vmatprep.subr.mxu0 0.0
    %797 = vmatpush1.msra.mxu0 0.0
    %798 = vmatprep.subr.mxu0 0.0
    %799 = vmatpush1.msra.mxu0 0.0
    %800 = vmatprep.subr.mxu0 0.0
    %801 = vmatpush1.msra.mxu0 0.0
    %802 = vmatprep.subr.mxu0 0.0
    %803 = vmatpush1.msra.mxu0 0.0
    %804 = vmatprep.subr.mxu0 0.0
    %805 = vmatpush1.msra.mxu0 0.0
    %806 = vmatprep.subr.mxu0 0.0
    %807 = vmatpush1.msra.mxu0 0.0
    %808 = vmatprep.subr.mxu0 0.0
    %809 = vmatpush1.msra.mxu0 0.0
    %810 = vmatprep.subr.mxu0 0.0
    %811 = vmatpush1.msra.mxu0 %v740
    %812 = vmatprep.subr.mxu0 0.0
    %813 = vmatpush1.msra.mxu0 %v739
    %814 = vmatprep.subr.mxu0 0.0
    %815 = vmatpush1.msra.mxu0 %v738
    %816 = vmatprep.subr.mxu0 0.0
    %817 = vmatpush1.msra.mxu0 %v737
    %818 = vmatprep.subr.mxu0 0.0
    %819 = vmatpush2.msra.mxu0 0.0
    %820 = vmatprep.subr.mxu0 0.0
    %821 = vmatpush2.msra.mxu0 0.0
    %822 = vmatprep.subr.mxu0 0.0
    %823 = vmatpush2.msra.mxu0 0.0
    %824 = vmatprep.subr.mxu0 0.0
    %825 = vmatpush2.msra.mxu0 0.0
    %826 = vmatprep.subr.mxu0 0.0
    %827 = vmatpush2.msra.mxu0 0.0
    %828 = vmatprep.subr.mxu0 0.0
    %829 = vmatpush2.msra.mxu0 0.0
    %830 = vmatprep.subr.mxu0 0.0
    %831 = vmatpush2.msra.mxu0 0.0
    %832 = vmatprep.subr.mxu0 0.0
    %833 = vmatpush2.msra.mxu0 0.0
    %834 = vmatprep.subr.mxu0 0.0
    %835 = vmatpush2.msra.mxu0 0.0
    %836 = vmatprep.subr.mxu0 0.0
    %837 = vmatpush2.msra.mxu0 0.0
    %838 = vmatprep.subr.mxu0 0.0
    %839 = vmatpush2.msra.mxu0 0.0
    %840 = vmatprep.subr.mxu0 0.0
    %841 = vmatpush2.msra.mxu0 0.0
    %842 = vmatprep.subr.mxu0 0.0
    %843 = vmatpush2.msra.mxu0 0.0
    %844 = vmatprep.subr.mxu0 0.0
    %845 = vmatpush2.msra.mxu0 0.0
    %846 = vmatprep.subr.mxu0 0.0
    %847 = vmatpush2.msra.mxu0 0.0
    %848 = vmatprep.subr.mxu0 0.0
    %849 = vmatpush2.msra.mxu0 0.0
    %850 = vmatprep.mubr.f32.mxu0 0.0
    %851 = vmatmul.mubr.f32.gmra.mxu0 %v784
    %v852 = vpop.f32.mrf.mxu0
    %v853 = vadd.f32 0.0, %v852
    %v854 = vpop.f32.mrf.mxu0
    %855 = vdwg.mxu0
    %v857 = vsel %vm151, %v747, 0
    %859 = vmatprep.subr.mxu0 0.0
    %860 = vmatpush1.msra.mxu0 0.0
    %861 = vmatprep.subr.mxu0 0.0
    %862 = vmatpush1.msra.mxu0 0.0
    %863 = vmatprep.subr.mxu0 0.0
    %864 = vmatpush1.msra.mxu0 0.0
    %865 = vmatprep.subr.mxu0 0.0
    %866 = vmatpush1.msra.mxu0 0.0
    %867 = vmatprep.subr.mxu0 0.0
    %868 = vmatpush1.msra.mxu0 0.0
    %869 = vmatprep.subr.mxu0 0.0
    %870 = vmatpush1.msra.mxu0 0.0
    %871 = vmatprep.subr.mxu0 0.0
    %872 = vmatpush1.msra.mxu0 0.0
    %873 = vmatprep.subr.mxu0 0.0
    %874 = vmatpush1.msra.mxu0 0.0
    %875 = vmatprep.subr.mxu0 0.0
    %876 = vmatpush1.msra.mxu0 0.0
    %877 = vmatprep.subr.mxu0 0.0
    %878 = vmatpush1.msra.mxu0 0.0
    %879 = vmatprep.subr.mxu0 0.0
    %880 = vmatpush1.msra.mxu0 0.0
    %881 = vmatprep.subr.mxu0 0.0
    %882 = vmatpush1.msra.mxu0 0.0
    %883 = vmatprep.subr.mxu0 0.0
    %884 = vmatpush1.msra.mxu0 0.0
    %885 = vmatprep.subr.mxu0 0.0
    %886 = vmatpush1.msra.mxu0 0.0
    %887 = vmatprep.subr.mxu0 0.0
    %888 = vmatpush1.msra.mxu0 0.0
    %889 = vmatprep.subr.mxu0 0.0
    %890 = vmatpush1.msra.mxu0 %v737
    %891 = vmatprep.subr.mxu0 0.0
    %892 = vmatpush2.msra.mxu0 0.0
    %893 = vmatprep.subr.mxu0 0.0
    %894 = vmatpush2.msra.mxu0 0.0
    %895 = vmatprep.subr.mxu0 0.0
    %896 = vmatpush2.msra.mxu0 0.0
    %897 = vmatprep.subr.mxu0 0.0
    %898 = vmatpush2.msra.mxu0 0.0
    %899 = vmatprep.subr.mxu0 0.0
    %900 = vmatpush2.msra.mxu0 0.0
    %901 = vmatprep.subr.mxu0 0.0
    %902 = vmatpush2.msra.mxu0 0.0
    %903 = vmatprep.subr.mxu0 0.0
    %904 = vmatpush2.msra.mxu0 0.0
    %905 = vmatprep.subr.mxu0 0.0
    %906 = vmatpush2.msra.mxu0 0.0
    %907 = vmatprep.subr.mxu0 0.0
    %908 = vmatpush2.msra.mxu0 0.0
    %909 = vmatprep.subr.mxu0 0.0
    %910 = vmatpush2.msra.mxu0 0.0
    %911 = vmatprep.subr.mxu0 0.0
    %912 = vmatpush2.msra.mxu0 0.0
    %913 = vmatprep.subr.mxu0 0.0
    %914 = vmatpush2.msra.mxu0 0.0
    %915 = vmatprep.subr.mxu0 0.0
    %916 = vmatpush2.msra.mxu0 0.0
    %917 = vmatprep.subr.mxu0 0.0
    %918 = vmatpush2.msra.mxu0 0.0
    %919 = vmatprep.subr.mxu0 0.0
    %920 = vmatpush2.msra.mxu0 0.0
    %921 = vmatprep.subr.mxu0 0.0
    %922 = vmatpush2.msra.mxu0 0.0
    %923 = vmatprep.mubr.f32.mxu0 0.0
    %924 = vmatmul.mubr.f32.gmra.mxu0 %v857
    %v925 = vpop.f32.mrf.mxu0
    %v926 = vadd.f32 0.0, %v925
    %v927 = vpop.f32.mrf.mxu0
    %928 = vdwg.mxu0
    %v929 = vmul.f32 %v926, %v926
    %v930 = vsel %vm226, %v929, 0.0
    %v931 = vrot.slane %v930, 4
    %v932 = vadd.f32 %v930, %v931
    %v933 = vrot.slane %v932, 2
    %v934 = vadd.f32 %v932, %v933
    %v935 = vrot.slane %v934, 1
    %v936 = vadd.f32 %v934, %v935
    %v938 = vsel %vm151, %v733, 0
    %v941 = vsel %vm151, %v734, 0
    %v944 = vsel %vm151, %v735, 0
    %946 = vmatprep.subr.mxu0 0.0
    %947 = vmatpush1.msra.mxu0 0.0
    %948 = vmatprep.subr.mxu0 0.0
    %949 = vmatpush1.msra.mxu0 0.0
    %950 = vmatprep.subr.mxu0 0.0
    %951 = vmatpush1.msra.mxu0 0.0
    %952 = vmatprep.subr.mxu0 0.0
    %953 = vmatpush1.msra.mxu0 0.0
    %954 = vmatprep.subr.mxu0 0.0
    %955 = vmatpush1.msra.mxu0 0.0
    %956 = vmatprep.subr.mxu0 0.0
    %957 = vmatpush1.msra.mxu0 0.0
    %958 = vmatprep.subr.mxu0 0.0
    %959 = vmatpush1.msra.mxu0 0.0
    %960 = vmatprep.subr.mxu0 0.0
    %961 = vmatpush1.msra.mxu0 0.0
    %962 = vmatprep.subr.mxu0 0.0
    %963 = vmatpush1.msra.mxu0 0.0
    %964 = vmatprep.subr.mxu0 0.0
    %965 = vmatpush1.msra.mxu0 0.0
    %966 = vmatprep.subr.mxu0 0.0
    %967 = vmatpush1.msra.mxu0 0.0
    %968 = vmatprep.subr.mxu0 0.0
    %969 = vmatpush1.msra.mxu0 0.0
    %970 = vmatprep.subr.mxu0 0.0
    %971 = vmatpush1.msra.mxu0 0.0
    %972 = vmatprep.subr.mxu0 0.0
    %973 = vmatpush1.msra.mxu0 0.0
    %974 = vmatprep.subr.mxu0 0.0
    %975 = vmatpush1.msra.mxu0 0.0
    %976 = vmatprep.subr.mxu0 0.0
    %977 = vmatpush1.msra.mxu0 %v926
    %978 = vmatprep.subr.mxu0 0.0
    %979 = vmatpush2.msra.mxu0 0.0
    %980 = vmatprep.subr.mxu0 0.0
    %981 = vmatpush2.msra.mxu0 0.0
    %982 = vmatprep.subr.mxu0 0.0
    %983 = vmatpush2.msra.mxu0 0.0
    %984 = vmatprep.subr.mxu0 0.0
    %985 = vmatpush2.msra.mxu0 0.0
    %986 = vmatprep.subr.mxu0 0.0
    %987 = vmatpush2.msra.mxu0 0.0
    %988 = vmatprep.subr.mxu0 0.0
    %989 = vmatpush2.msra.mxu0 0.0
    %990 = vmatprep.subr.mxu0 0.0
    %991 = vmatpush2.msra.mxu0 0.0
    %992 = vmatprep.subr.mxu0 0.0
    %993 = vmatpush2.msra.mxu0 0.0
    %994 = vmatprep.subr.mxu0 0.0
    %995 = vmatpush2.msra.mxu0 0.0
    %996 = vmatprep.subr.mxu0 0.0
    %997 = vmatpush2.msra.mxu0 0.0
    %998 = vmatprep.subr.mxu0 0.0
    %999 = vmatpush2.msra.mxu0 0.0
    %1000 = vmatprep.subr.mxu0 0.0
    %1001 = vmatpush2.msra.mxu0 0.0
    %1002 = vmatprep.subr.mxu0 0.0
    %1003 = vmatpush2.msra.mxu0 0.0
    %1004 = vmatprep.subr.mxu0 0.0
    %1005 = vmatpush2.msra.mxu0 0.0
    %1006 = vmatprep.subr.mxu0 0.0
    %1007 = vmatpush2.msra.mxu0 0.0
    %1008 = vmatprep.subr.mxu0 0.0
    %1009 = vmatpush2.msra.mxu0 0.0
    %1010 = vmatprep.mubr.f32.mxu0 0.0
    %1011 = vmatmul.mubr.f32.gmra.mxu0 %v938
    %v1012 = vpop.f32.mrf.mxu0
    %v1013 = vadd.f32 0.0, %v1012
    %v1014 = vpop.f32.mrf.mxu0
    %1015 = vmatprep.mubr.f32.mxu0 0.0
    %1016 = vmatmul.mubr.f32.gmra.mxu0 %v941
    %v1017 = vpop.f32.mrf.mxu0
    %v1018 = vadd.f32 0.0, %v1017
    %v1019 = vpop.f32.mrf.mxu0
    %1020 = vmatprep.mubr.f32.mxu0 0.0
    %1021 = vmatmul.mubr.f32.gmra.mxu0 %v944
    %v1022 = vpop.f32.mrf.mxu0
    %v1023 = vadd.f32 0.0, %v1022
    %v1024 = vpop.f32.mrf.mxu0
    %1025 = vdwg.mxu0
    %v1026 = vsub.f32 %v738, %v1013
    %v1027 = vsub.f32 %v739, %v1018
    %v1028 = vsub.f32 %v740, %v1023
    %v1030 = vsel %vm151, %v748, 0
    %1032 = vmatprep.subr.mxu0 0.0
    %1033 = vmatpush1.msra.mxu0 0.0
    %1034 = vmatprep.subr.mxu0 0.0
    %1035 = vmatpush1.msra.mxu0 0.0
    %1036 = vmatprep.subr.mxu0 0.0
    %1037 = vmatpush1.msra.mxu0 0.0
    %1038 = vmatprep.subr.mxu0 0.0
    %1039 = vmatpush1.msra.mxu0 0.0
    %1040 = vmatprep.subr.mxu0 0.0
    %1041 = vmatpush1.msra.mxu0 0.0
    %1042 = vmatprep.subr.mxu0 0.0
    %1043 = vmatpush1.msra.mxu0 0.0
    %1044 = vmatprep.subr.mxu0 0.0
    %1045 = vmatpush1.msra.mxu0 0.0
    %1046 = vmatprep.subr.mxu0 0.0
    %1047 = vmatpush1.msra.mxu0 0.0
    %1048 = vmatprep.subr.mxu0 0.0
    %1049 = vmatpush1.msra.mxu0 0.0
    %1050 = vmatprep.subr.mxu0 0.0
    %1051 = vmatpush1.msra.mxu0 0.0
    %1052 = vmatprep.subr.mxu0 0.0
    %1053 = vmatpush1.msra.mxu0 0.0
    %1054 = vmatprep.subr.mxu0 0.0
    %1055 = vmatpush1.msra.mxu0 0.0
    %1056 = vmatprep.subr.mxu0 0.0
    %1057 = vmatpush1.msra.mxu0 0.0
    %1058 = vmatprep.subr.mxu0 0.0
    %1059 = vmatpush1.msra.mxu0 0.0
    %1060 = vmatprep.subr.mxu0 0.0
    %1061 = vmatpush1.msra.mxu0 0.0
    %1062 = vmatprep.subr.mxu0 0.0
    %1063 = vmatpush1.msra.mxu0 %v1026
    %1064 = vmatprep.subr.mxu0 0.0
    %1065 = vmatpush2.msra.mxu0 0.0
    %1066 = vmatprep.subr.mxu0 0.0
    %1067 = vmatpush2.msra.mxu0 0.0
    %1068 = vmatprep.subr.mxu0 0.0
    %1069 = vmatpush2.msra.mxu0 0.0
    %1070 = vmatprep.subr.mxu0 0.0
    %1071 = vmatpush2.msra.mxu0 0.0
    %1072 = vmatprep.subr.mxu0 0.0
    %1073 = vmatpush2.msra.mxu0 0.0
    %1074 = vmatprep.subr.mxu0 0.0
    %1075 = vmatpush2.msra.mxu0 0.0
    %1076 = vmatprep.subr.mxu0 0.0
    %1077 = vmatpush2.msra.mxu0 0.0
    %1078 = vmatprep.subr.mxu0 0.0
    %1079 = vmatpush2.msra.mxu0 0.0
    %1080 = vmatprep.subr.mxu0 0.0
    %1081 = vmatpush2.msra.mxu0 0.0
    %1082 = vmatprep.subr.mxu0 0.0
    %1083 = vmatpush2.msra.mxu0 0.0
    %1084 = vmatprep.subr.mxu0 0.0
    %1085 = vmatpush2.msra.mxu0 0.0
    %1086 = vmatprep.subr.mxu0 0.0
    %1087 = vmatpush2.msra.mxu0 0.0
    %1088 = vmatprep.subr.mxu0 0.0
    %1089 = vmatpush2.msra.mxu0 0.0
    %1090 = vmatprep.subr.mxu0 0.0
    %1091 = vmatpush2.msra.mxu0 0.0
    %1092 = vmatprep.subr.mxu0 0.0
    %1093 = vmatpush2.msra.mxu0 0.0
    %1094 = vmatprep.subr.mxu0 0.0
    %1095 = vmatpush2.msra.mxu0 0.0
    %1096 = vmatprep.mubr.f32.mxu0 0.0
    %1097 = vmatmul.mubr.f32.gmra.mxu0 %v1030
    %v1098 = vpop.f32.mrf.mxu0
    %v1099 = vadd.f32 0.0, %v1098
    %v1100 = vpop.f32.mrf.mxu0
    %1101 = vdwg.mxu0
    %v1102 = vmul.f32 %v1099, %v1099
    %v1103 = vsel %vm226, %v1102, 0.0
    %v1104 = vrot.slane %v1103, 4
    %v1105 = vadd.f32 %v1103, %v1104
    %v1106 = vrot.slane %v1105, 2
    %v1107 = vadd.f32 %v1105, %v1106
    %v1108 = vrot.slane %v1107, 1
    %v1109 = vadd.f32 %v1107, %v1108
    %v1110 = vadd.f32 %v936, %v1109
    %1111 = vrot.lane.b32.xlu0 %v734, 120
    %v1112 = vpop.permute.xlu0 %1111
    %1113 = vrot.lane.b32.xlu0 %v735, 120
    %v1114 = vpop.permute.xlu0 %1113
    %v1115 = vsel %vm151, %v1112, 0
    %v1117 = vsel %vm151, %v1114, 0
    %1119 = vmatprep.subr.mxu0 0.0
    %1120 = vmatpush1.msra.mxu0 0.0
    %1121 = vmatprep.subr.mxu0 0.0
    %1122 = vmatpush1.msra.mxu0 0.0
    %1123 = vmatprep.subr.mxu0 0.0
    %1124 = vmatpush1.msra.mxu0 0.0
    %1125 = vmatprep.subr.mxu0 0.0
    %1126 = vmatpush1.msra.mxu0 0.0
    %1127 = vmatprep.subr.mxu0 0.0
    %1128 = vmatpush1.msra.mxu0 0.0
    %1129 = vmatprep.subr.mxu0 0.0
    %1130 = vmatpush1.msra.mxu0 0.0
    %1131 = vmatprep.subr.mxu0 0.0
    %1132 = vmatpush1.msra.mxu0 0.0
    %1133 = vmatprep.subr.mxu0 0.0
    %1134 = vmatpush1.msra.mxu0 0.0
    %1135 = vmatprep.subr.mxu0 0.0
    %1136 = vmatpush1.msra.mxu0 0.0
    %1137 = vmatprep.subr.mxu0 0.0
    %1138 = vmatpush1.msra.mxu0 0.0
    %1139 = vmatprep.subr.mxu0 0.0
    %1140 = vmatpush1.msra.mxu0 0.0
    %1141 = vmatprep.subr.mxu0 0.0
    %1142 = vmatpush1.msra.mxu0 0.0
    %1143 = vmatprep.subr.mxu0 0.0
    %1144 = vmatpush1.msra.mxu0 0.0
    %1145 = vmatprep.subr.mxu0 0.0
    %1146 = vmatpush1.msra.mxu0 0.0
    %1147 = vmatprep.subr.mxu0 0.0
    %1148 = vmatpush1.msra.mxu0 0.0
    %1149 = vmatprep.subr.mxu0 0.0
    %1150 = vmatpush1.msra.mxu0 %v1099
    %1151 = vmatprep.subr.mxu0 0.0
    %1152 = vmatpush2.msra.mxu0 0.0
    %1153 = vmatprep.subr.mxu0 0.0
    %1154 = vmatpush2.msra.mxu0 0.0
    %1155 = vmatprep.subr.mxu0 0.0
    %1156 = vmatpush2.msra.mxu0 0.0
    %1157 = vmatprep.subr.mxu0 0.0
    %1158 = vmatpush2.msra.mxu0 0.0
    %1159 = vmatprep.subr.mxu0 0.0
    %1160 = vmatpush2.msra.mxu0 0.0
    %1161 = vmatprep.subr.mxu0 0.0
    %1162 = vmatpush2.msra.mxu0 0.0
    %1163 = vmatprep.subr.mxu0 0.0
    %1164 = vmatpush2.msra.mxu0 0.0
    %1165 = vmatprep.subr.mxu0 0.0
    %1166 = vmatpush2.msra.mxu0 0.0
    %1167 = vmatprep.subr.mxu0 0.0
    %1168 = vmatpush2.msra.mxu0 0.0
    %1169 = vmatprep.subr.mxu0 0.0
    %1170 = vmatpush2.msra.mxu0 0.0
    %1171 = vmatprep.subr.mxu0 0.0
    %1172 = vmatpush2.msra.mxu0 0.0
    %1173 = vmatprep.subr.mxu0 0.0
    %1174 = vmatpush2.msra.mxu0 0.0
    %1175 = vmatprep.subr.mxu0 0.0
    %1176 = vmatpush2.msra.mxu0 0.0
    %1177 = vmatprep.subr.mxu0 0.0
    %1178 = vmatpush2.msra.mxu0 0.0
    %1179 = vmatprep.subr.mxu0 0.0
    %1180 = vmatpush2.msra.mxu0 0.0
    %1181 = vmatprep.subr.mxu0 0.0
    %1182 = vmatpush2.msra.mxu0 0.0
    %1183 = vmatprep.mubr.f32.mxu0 0.0
    %1184 = vmatmul.mubr.f32.gmra.mxu0 %v1115
    %v1185 = vpop.f32.mrf.mxu0
    %v1186 = vadd.f32 0.0, %v1185
    %v1187 = vpop.f32.mrf.mxu0
    %1188 = vmatprep.mubr.f32.mxu0 0.0
    %1189 = vmatmul.mubr.f32.gmra.mxu0 %v1117
    %v1190 = vpop.f32.mrf.mxu0
    %v1191 = vadd.f32 0.0, %v1190
    %v1192 = vpop.f32.mrf.mxu0
    %1193 = vdwg.mxu0
    %v1194 = vsub.f32 %v1027, %v1186
    %v1195 = vsub.f32 %v1028, %v1191
    %v1197 = vsel %vm151, %v749, 0
    %1199 = vmatprep.subr.mxu0 0.0
    %1200 = vmatpush1.msra.mxu0 0.0
    %1201 = vmatprep.subr.mxu0 0.0
    %1202 = vmatpush1.msra.mxu0 0.0
    %1203 = vmatprep.subr.mxu0 0.0
    %1204 = vmatpush1.msra.mxu0 0.0
    %1205 = vmatprep.subr.mxu0 0.0
    %1206 = vmatpush1.msra.mxu0 0.0
    %1207 = vmatprep.subr.mxu0 0.0
    %1208 = vmatpush1.msra.mxu0 0.0
    %1209 = vmatprep.subr.mxu0 0.0
    %1210 = vmatpush1.msra.mxu0 0.0
    %1211 = vmatprep.subr.mxu0 0.0
    %1212 = vmatpush1.msra.mxu0 0.0
    %1213 = vmatprep.subr.mxu0 0.0
    %1214 = vmatpush1.msra.mxu0 0.0
    %1215 = vmatprep.subr.mxu0 0.0
    %1216 = vmatpush1.msra.mxu0 0.0
    %1217 = vmatprep.subr.mxu0 0.0
    %1218 = vmatpush1.msra.mxu0 0.0
    %1219 = vmatprep.subr.mxu0 0.0
    %1220 = vmatpush1.msra.mxu0 0.0
    %1221 = vmatprep.subr.mxu0 0.0
    %1222 = vmatpush1.msra.mxu0 0.0
    %1223 = vmatprep.subr.mxu0 0.0
    %1224 = vmatpush1.msra.mxu0 0.0
    %1225 = vmatprep.subr.mxu0 0.0
    %1226 = vmatpush1.msra.mxu0 0.0
    %1227 = vmatprep.subr.mxu0 0.0
    %1228 = vmatpush1.msra.mxu0 0.0
    %1229 = vmatprep.subr.mxu0 0.0
    %1230 = vmatpush1.msra.mxu0 %v1194
    %1231 = vmatprep.subr.mxu0 0.0
    %1232 = vmatpush2.msra.mxu0 0.0
    %1233 = vmatprep.subr.mxu0 0.0
    %1234 = vmatpush2.msra.mxu0 0.0
    %1235 = vmatprep.subr.mxu0 0.0
    %1236 = vmatpush2.msra.mxu0 0.0
    %1237 = vmatprep.subr.mxu0 0.0
    %1238 = vmatpush2.msra.mxu0 0.0
    %1239 = vmatprep.subr.mxu0 0.0
    %1240 = vmatpush2.msra.mxu0 0.0
    %1241 = vmatprep.subr.mxu0 0.0
    %1242 = vmatpush2.msra.mxu0 0.0
    %1243 = vmatprep.subr.mxu0 0.0
    %1244 = vmatpush2.msra.mxu0 0.0
    %1245 = vmatprep.subr.mxu0 0.0
    %1246 = vmatpush2.msra.mxu0 0.0
    %1247 = vmatprep.subr.mxu0 0.0
    %1248 = vmatpush2.msra.mxu0 0.0
    %1249 = vmatprep.subr.mxu0 0.0
    %1250 = vmatpush2.msra.mxu0 0.0
    %1251 = vmatprep.subr.mxu0 0.0
    %1252 = vmatpush2.msra.mxu0 0.0
    %1253 = vmatprep.subr.mxu0 0.0
    %1254 = vmatpush2.msra.mxu0 0.0
    %1255 = vmatprep.subr.mxu0 0.0
    %1256 = vmatpush2.msra.mxu0 0.0
    %1257 = vmatprep.subr.mxu0 0.0
    %1258 = vmatpush2.msra.mxu0 0.0
    %1259 = vmatprep.subr.mxu0 0.0
    %1260 = vmatpush2.msra.mxu0 0.0
    %1261 = vmatprep.subr.mxu0 0.0
    %1262 = vmatpush2.msra.mxu0 0.0
    %1263 = vmatprep.mubr.f32.mxu0 0.0
    %1264 = vmatmul.mubr.f32.gmra.mxu0 %v1197
    %v1265 = vpop.f32.mrf.mxu0
    %v1266 = vadd.f32 0.0, %v1265
    %v1267 = vpop.f32.mrf.mxu0
    %1268 = vdwg.mxu0
    %v1269 = vmul.f32 %v1266, %v1266
    %v1270 = vsel %vm226, %v1269, 0.0
    %v1271 = vrot.slane %v1270, 4
    %v1272 = vadd.f32 %v1270, %v1271
    %v1273 = vrot.slane %v1272, 2
    %v1274 = vadd.f32 %v1272, %v1273
    %v1275 = vrot.slane %v1274, 1
    %v1276 = vadd.f32 %v1274, %v1275
    %v1277 = vadd.f32 %v1110, %v1276
    %1278 = vrot.lane.b32.xlu0 %v735, 112
    %v1279 = vpop.permute.xlu0 %1278
    %v1280 = vsel %vm151, %v1279, 0
    %1282 = vmatprep.subr.mxu0 0.0
    %1283 = vmatpush1.msra.mxu0 0.0
    %1284 = vmatprep.subr.mxu0 0.0
    %1285 = vmatpush1.msra.mxu0 0.0
    %1286 = vmatprep.subr.mxu0 0.0
    %1287 = vmatpush1.msra.mxu0 0.0
    %1288 = vmatprep.subr.mxu0 0.0
    %1289 = vmatpush1.msra.mxu0 0.0
    %1290 = vmatprep.subr.mxu0 0.0
    %1291 = vmatpush1.msra.mxu0 0.0
    %1292 = vmatprep.subr.mxu0 0.0
    %1293 = vmatpush1.msra.mxu0 0.0
    %1294 = vmatprep.subr.mxu0 0.0
    %1295 = vmatpush1.msra.mxu0 0.0
    %1296 = vmatprep.subr.mxu0 0.0
    %1297 = vmatpush1.msra.mxu0 0.0
    %1298 = vmatprep.subr.mxu0 0.0
    %1299 = vmatpush1.msra.mxu0 0.0
    %1300 = vmatprep.subr.mxu0 0.0
    %1301 = vmatpush1.msra.mxu0 0.0
    %1302 = vmatprep.subr.mxu0 0.0
    %1303 = vmatpush1.msra.mxu0 0.0
    %1304 = vmatprep.subr.mxu0 0.0
    %1305 = vmatpush1.msra.mxu0 0.0
    %1306 = vmatprep.subr.mxu0 0.0
    %1307 = vmatpush1.msra.mxu0 0.0
    %1308 = vmatprep.subr.mxu0 0.0
    %1309 = vmatpush1.msra.mxu0 0.0
    %1310 = vmatprep.subr.mxu0 0.0
    %1311 = vmatpush1.msra.mxu0 0.0
    %1312 = vmatprep.subr.mxu0 0.0
    %1313 = vmatpush1.msra.mxu0 %v1266
    %1314 = vmatprep.subr.mxu0 0.0
    %1315 = vmatpush2.msra.mxu0 0.0
    %1316 = vmatprep.subr.mxu0 0.0
    %1317 = vmatpush2.msra.mxu0 0.0
    %1318 = vmatprep.subr.mxu0 0.0
    %1319 = vmatpush2.msra.mxu0 0.0
    %1320 = vmatprep.subr.mxu0 0.0
    %1321 = vmatpush2.msra.mxu0 0.0
    %1322 = vmatprep.subr.mxu0 0.0
    %1323 = vmatpush2.msra.mxu0 0.0
    %1324 = vmatprep.subr.mxu0 0.0
    %1325 = vmatpush2.msra.mxu0 0.0
    %1326 = vmatprep.subr.mxu0 0.0
    %1327 = vmatpush2.msra.mxu0 0.0
    %1328 = vmatprep.subr.mxu0 0.0
    %1329 = vmatpush2.msra.mxu0 0.0
    %1330 = vmatprep.subr.mxu0 0.0
    %1331 = vmatpush2.msra.mxu0 0.0
    %1332 = vmatprep.subr.mxu0 0.0
    %1333 = vmatpush2.msra.mxu0 0.0
    %1334 = vmatprep.subr.mxu0 0.0
    %1335 = vmatpush2.msra.mxu0 0.0
    %1336 = vmatprep.subr.mxu0 0.0
    %1337 = vmatpush2.msra.mxu0 0.0
    %1338 = vmatprep.subr.mxu0 0.0
    %1339 = vmatpush2.msra.mxu0 0.0
    %1340 = vmatprep.subr.mxu0 0.0
    %1341 = vmatpush2.msra.mxu0 0.0
    %1342 = vmatprep.subr.mxu0 0.0
    %1343 = vmatpush2.msra.mxu0 0.0
    %1344 = vmatprep.subr.mxu0 0.0
    %1345 = vmatpush2.msra.mxu0 0.0
    %1346 = vmatprep.mubr.f32.mxu0 0.0
    %1347 = vmatmul.mubr.f32.gmra.mxu0 %v1280
    %v1348 = vpop.f32.mrf.mxu0
    %v1349 = vadd.f32 0.0, %v1348
    %v1350 = vpop.f32.mrf.mxu0
    %1351 = vdwg.mxu0
    %v1352 = vsub.f32 %v1195, %v1349
    %v1354 = vsel %vm151, %v750, 0
    %1356 = vmatprep.subr.mxu0 0.0
    %1357 = vmatpush1.msra.mxu0 0.0
    %1358 = vmatprep.subr.mxu0 0.0
    %1359 = vmatpush1.msra.mxu0 0.0
    %1360 = vmatprep.subr.mxu0 0.0
    %1361 = vmatpush1.msra.mxu0 0.0
    %1362 = vmatprep.subr.mxu0 0.0
    %1363 = vmatpush1.msra.mxu0 0.0
    %1364 = vmatprep.subr.mxu0 0.0
    %1365 = vmatpush1.msra.mxu0 0.0
    %1366 = vmatprep.subr.mxu0 0.0
    %1367 = vmatpush1.msra.mxu0 0.0
    %1368 = vmatprep.subr.mxu0 0.0
    %1369 = vmatpush1.msra.mxu0 0.0
    %1370 = vmatprep.subr.mxu0 0.0
    %1371 = vmatpush1.msra.mxu0 0.0
    %1372 = vmatprep.subr.mxu0 0.0
    %1373 = vmatpush1.msra.mxu0 0.0
    %1374 = vmatprep.subr.mxu0 0.0
    %1375 = vmatpush1.msra.mxu0 0.0
    %1376 = vmatprep.subr.mxu0 0.0
    %1377 = vmatpush1.msra.mxu0 0.0
    %1378 = vmatprep.subr.mxu0 0.0
    %1379 = vmatpush1.msra.mxu0 0.0
    %1380 = vmatprep.subr.mxu0 0.0
    %1381 = vmatpush1.msra.mxu0 0.0
    %1382 = vmatprep.subr.mxu0 0.0
    %1383 = vmatpush1.msra.mxu0 0.0
    %1384 = vmatprep.subr.mxu0 0.0
    %1385 = vmatpush1.msra.mxu0 0.0
    %1386 = vmatprep.subr.mxu0 0.0
    %1387 = vmatpush1.msra.mxu0 %v1352
    %1388 = vmatprep.subr.mxu0 0.0
    %1389 = vmatpush2.msra.mxu0 0.0
    %1390 = vmatprep.subr.mxu0 0.0
    %1391 = vmatpush2.msra.mxu0 0.0
    %1392 = vmatprep.subr.mxu0 0.0
    %1393 = vmatpush2.msra.mxu0 0.0
    %1394 = vmatprep.subr.mxu0 0.0
    %1395 = vmatpush2.msra.mxu0 0.0
    %1396 = vmatprep.subr.mxu0 0.0
    %1397 = vmatpush2.msra.mxu0 0.0
    %1398 = vmatprep.subr.mxu0 0.0
    %1399 = vmatpush2.msra.mxu0 0.0
    %1400 = vmatprep.subr.mxu0 0.0
    %1401 = vmatpush2.msra.mxu0 0.0
    %1402 = vmatprep.subr.mxu0 0.0
    %1403 = vmatpush2.msra.mxu0 0.0
    %1404 = vmatprep.subr.mxu0 0.0
    %1405 = vmatpush2.msra.mxu0 0.0
    %1406 = vmatprep.subr.mxu0 0.0
    %1407 = vmatpush2.msra.mxu0 0.0
    %1408 = vmatprep.subr.mxu0 0.0
    %1409 = vmatpush2.msra.mxu0 0.0
    %1410 = vmatprep.subr.mxu0 0.0
    %1411 = vmatpush2.msra.mxu0 0.0
    %1412 = vmatprep.subr.mxu0 0.0
    %1413 = vmatpush2.msra.mxu0 0.0
    %1414 = vmatprep.subr.mxu0 0.0
    %1415 = vmatpush2.msra.mxu0 0.0
    %1416 = vmatprep.subr.mxu0 0.0
    %1417 = vmatpush2.msra.mxu0 0.0
    %1418 = vmatprep.subr.mxu0 0.0
    %1419 = vmatpush2.msra.mxu0 0.0
    %1420 = vmatprep.mubr.f32.mxu0 0.0
    %1421 = vmatmul.mubr.f32.gmra.mxu0 %v1354
    %v1422 = vpop.f32.mrf.mxu0
    %v1423 = vadd.f32 0.0, %v1422
    %v1424 = vpop.f32.mrf.mxu0
    %1425 = vdwg.mxu0
    %v1426 = vmul.f32 %v1423, %v1423
    %v1427 = vsel %vm226, %v1426, 0.0
    %v1428 = vrot.slane %v1427, 4
    %v1429 = vadd.f32 %v1427, %v1428
    %v1430 = vrot.slane %v1429, 2
    %v1431 = vadd.f32 %v1429, %v1430
    %v1432 = vrot.slane %v1431, 1
    %v1433 = vadd.f32 %v1431, %v1432
    %v1434 = vadd.f32 %v1277, %v1433
    %s1435 = scalar_lea.vmem %s0, 64
    %v1436 = vld [vmem:[%s1435 + $0x8] sm:$0xff]
    %v1437 = vld [vmem:[%s1435 + $0x10] sm:$0xff]
    %v1438 = vld [vmem:[%s1435 + $0x18] sm:$0xff]
    %s1439 = scalar_lea.vmem %s3, 64
    %v1440 = vld [vmem:[%s1439] sm:$0xff]
    %v1441 = vld [vmem:[%s1439 + $0x8] sm:$0xff]
    %v1442 = vld [vmem:[%s1439 + $0x10] sm:$0xff]
    %v1443 = vld [vmem:[%s1439 + $0x18] sm:$0xff]
    %s1444 = scalar_lea.vmem %s2, 64
    %v1445 = vld [vmem:[%s1444] sm:$0xff]
    %v1446 = vld [vmem:[%s1444 + $0x8] sm:$0xff]
    %v1447 = vld [vmem:[%s1444 + $0x10] sm:$0xff]
    %v1448 = vld [vmem:[%s1444 + $0x18] sm:$0xff]
    %s1449 = scalar_lea.vmem %s1, 64
    %v1450 = vld [vmem:[%s1449] sm:$0xff]
    %v1451 = vld [vmem:[%s1449 + $0x8] sm:$0xff]
    %v1452 = vld [vmem:[%s1449 + $0x10] sm:$0xff]
    %v1453 = vld [vmem:[%s1449 + $0x18] sm:$0xff]
    %1454 = vxpose.xlu0.b32.start [1/16] %v1445, 128
    %1455 = vxpose.xlu0.b32.cont [2/16] %v1446, 128
    %1456 = vxpose.xlu0.b32.cont [3/16] %v1447, 128
    %1457 = vxpose.xlu0.b32.cont [4/16] %v1448, 128
    %1458 = vxpose.xlu0.b32.cont [5/16] 0.0, 128
    %1459 = vxpose.xlu0.b32.cont [6/16] 0.0, 128
    %1460 = vxpose.xlu0.b32.cont [7/16] 0.0, 128
    %1461 = vxpose.xlu0.b32.cont [8/16] 0.0, 128
    %1462 = vxpose.xlu0.b32.cont [9/16] 0.0, 128
    %1463 = vxpose.xlu0.b32.cont [10/16] 0.0, 128
    %1464 = vxpose.xlu0.b32.cont [11/16] 0.0, 128
    %1465 = vxpose.xlu0.b32.cont [12/16] 0.0, 128
    %1466 = vxpose.xlu0.b32.cont [13/16] 0.0, 128
    %1467 = vxpose.xlu0.b32.cont [14/16] 0.0, 128
    %1468 = vxpose.xlu0.b32.cont [15/16] 0.0, 128
    %1469 = vxpose.xlu0.b32.end [16/16] 0.0, 128
    %v1470 = vpop.trf.xlu0
    %v1471 = vpop.trf.xlu0
    %v1472 = vpop.trf.xlu0
    %v1473 = vpop.trf.xlu0
    %v1474 = vpop.trf.xlu0
    %v1475 = vpop.trf.xlu0
    %v1476 = vpop.trf.xlu0
    %v1477 = vpop.trf.xlu0
    %v1478 = vpop.trf.xlu0
    %v1479 = vpop.trf.xlu0
    %v1480 = vpop.trf.xlu0
    %v1481 = vpop.trf.xlu0
    %v1482 = vpop.trf.xlu0
    %v1483 = vpop.trf.xlu0
    %v1484 = vpop.trf.xlu0
    %v1485 = vpop.trf.xlu0
    %v1487 = vsel %vm77, %v1470, 0
    %1489 = vmatprep.subr.mxu0 0.0
    %1490 = vmatpush1.msra.mxu0 0.0
    %1491 = vmatprep.subr.mxu0 0.0
    %1492 = vmatpush1.msra.mxu0 0.0
    %1493 = vmatprep.subr.mxu0 0.0
    %1494 = vmatpush1.msra.mxu0 0.0
    %1495 = vmatprep.subr.mxu0 0.0
    %1496 = vmatpush1.msra.mxu0 0.0
    %1497 = vmatprep.subr.mxu0 0.0
    %1498 = vmatpush1.msra.mxu0 0.0
    %1499 = vmatprep.subr.mxu0 0.0
    %1500 = vmatpush1.msra.mxu0 0.0
    %1501 = vmatprep.subr.mxu0 0.0
    %1502 = vmatpush1.msra.mxu0 0.0
    %1503 = vmatprep.subr.mxu0 0.0
    %1504 = vmatpush1.msra.mxu0 0.0
    %1505 = vmatprep.subr.mxu0 0.0
    %1506 = vmatpush1.msra.mxu0 0.0
    %1507 = vmatprep.subr.mxu0 0.0
    %1508 = vmatpush1.msra.mxu0 0.0
    %1509 = vmatprep.subr.mxu0 0.0
    %1510 = vmatpush1.msra.mxu0 0.0
    %1511 = vmatprep.subr.mxu0 0.0
    %1512 = vmatpush1.msra.mxu0 0.0
    %1513 = vmatprep.subr.mxu0 0.0
    %1514 = vmatpush1.msra.mxu0 %v1443
    %1515 = vmatprep.subr.mxu0 0.0
    %1516 = vmatpush1.msra.mxu0 %v1442
    %1517 = vmatprep.subr.mxu0 0.0
    %1518 = vmatpush1.msra.mxu0 %v1441
    %1519 = vmatprep.subr.mxu0 0.0
    %1520 = vmatpush1.msra.mxu0 %v1440
    %1521 = vmatprep.subr.mxu0 0.0
    %1522 = vmatpush2.msra.mxu0 0.0
    %1523 = vmatprep.subr.mxu0 0.0
    %1524 = vmatpush2.msra.mxu0 0.0
    %1525 = vmatprep.subr.mxu0 0.0
    %1526 = vmatpush2.msra.mxu0 0.0
    %1527 = vmatprep.subr.mxu0 0.0
    %1528 = vmatpush2.msra.mxu0 0.0
    %1529 = vmatprep.subr.mxu0 0.0
    %1530 = vmatpush2.msra.mxu0 0.0
    %1531 = vmatprep.subr.mxu0 0.0
    %1532 = vmatpush2.msra.mxu0 0.0
    %1533 = vmatprep.subr.mxu0 0.0
    %1534 = vmatpush2.msra.mxu0 0.0
    %1535 = vmatprep.subr.mxu0 0.0
    %1536 = vmatpush2.msra.mxu0 0.0
    %1537 = vmatprep.subr.mxu0 0.0
    %1538 = vmatpush2.msra.mxu0 0.0
    %1539 = vmatprep.subr.mxu0 0.0
    %1540 = vmatpush2.msra.mxu0 0.0
    %1541 = vmatprep.subr.mxu0 0.0
    %1542 = vmatpush2.msra.mxu0 0.0
    %1543 = vmatprep.subr.mxu0 0.0
    %1544 = vmatpush2.msra.mxu0 0.0
    %1545 = vmatprep.subr.mxu0 0.0
    %1546 = vmatpush2.msra.mxu0 0.0
    %1547 = vmatprep.subr.mxu0 0.0
    %1548 = vmatpush2.msra.mxu0 0.0
    %1549 = vmatprep.subr.mxu0 0.0
    %1550 = vmatpush2.msra.mxu0 0.0
    %1551 = vmatprep.subr.mxu0 0.0
    %1552 = vmatpush2.msra.mxu0 0.0
    %1553 = vmatprep.mubr.f32.mxu0 0.0
    %1554 = vmatmul.mubr.f32.gmra.mxu0 %v1487
    %v1555 = vpop.f32.mrf.mxu0
    %v1556 = vadd.f32 0.0, %v1555
    %v1557 = vpop.f32.mrf.mxu0
    %1558 = vdwg.mxu0
    %v1560 = vsel %vm151, %v1450, 0
    %1562 = vmatprep.subr.mxu0 0.0
    %1563 = vmatpush1.msra.mxu0 0.0
    %1564 = vmatprep.subr.mxu0 0.0
    %1565 = vmatpush1.msra.mxu0 0.0
    %1566 = vmatprep.subr.mxu0 0.0
    %1567 = vmatpush1.msra.mxu0 0.0
    %1568 = vmatprep.subr.mxu0 0.0
    %1569 = vmatpush1.msra.mxu0 0.0
    %1570 = vmatprep.subr.mxu0 0.0
    %1571 = vmatpush1.msra.mxu0 0.0
    %1572 = vmatprep.subr.mxu0 0.0
    %1573 = vmatpush1.msra.mxu0 0.0
    %1574 = vmatprep.subr.mxu0 0.0
    %1575 = vmatpush1.msra.mxu0 0.0
    %1576 = vmatprep.subr.mxu0 0.0
    %1577 = vmatpush1.msra.mxu0 0.0
    %1578 = vmatprep.subr.mxu0 0.0
    %1579 = vmatpush1.msra.mxu0 0.0
    %1580 = vmatprep.subr.mxu0 0.0
    %1581 = vmatpush1.msra.mxu0 0.0
    %1582 = vmatprep.subr.mxu0 0.0
    %1583 = vmatpush1.msra.mxu0 0.0
    %1584 = vmatprep.subr.mxu0 0.0
    %1585 = vmatpush1.msra.mxu0 0.0
    %1586 = vmatprep.subr.mxu0 0.0
    %1587 = vmatpush1.msra.mxu0 0.0
    %1588 = vmatprep.subr.mxu0 0.0
    %1589 = vmatpush1.msra.mxu0 0.0
    %1590 = vmatprep.subr.mxu0 0.0
    %1591 = vmatpush1.msra.mxu0 0.0
    %1592 = vmatprep.subr.mxu0 0.0
    %1593 = vmatpush1.msra.mxu0 %v1440
    %1594 = vmatprep.subr.mxu0 0.0
    %1595 = vmatpush2.msra.mxu0 0.0
    %1596 = vmatprep.subr.mxu0 0.0
    %1597 = vmatpush2.msra.mxu0 0.0
    %1598 = vmatprep.subr.mxu0 0.0
    %1599 = vmatpush2.msra.mxu0 0.0
    %1600 = vmatprep.subr.mxu0 0.0
    %1601 = vmatpush2.msra.mxu0 0.0
    %1602 = vmatprep.subr.mxu0 0.0
    %1603 = vmatpush2.msra.mxu0 0.0
    %1604 = vmatprep.subr.mxu0 0.0
    %1605 = vmatpush2.msra.mxu0 0.0
    %1606 = vmatprep.subr.mxu0 0.0
    %1607 = vmatpush2.msra.mxu0 0.0
    %1608 = vmatprep.subr.mxu0 0.0
    %1609 = vmatpush2.msra.mxu0 0.0
    %1610 = vmatprep.subr.mxu0 0.0
    %1611 = vmatpush2.msra.mxu0 0.0
    %1612 = vmatprep.subr.mxu0 0.0
    %1613 = vmatpush2.msra.mxu0 0.0
    %1614 = vmatprep.subr.mxu0 0.0
    %1615 = vmatpush2.msra.mxu0 0.0
    %1616 = vmatprep.subr.mxu0 0.0
    %1617 = vmatpush2.msra.mxu0 0.0
    %1618 = vmatprep.subr.mxu0 0.0
    %1619 = vmatpush2.msra.mxu0 0.0
    %1620 = vmatprep.subr.mxu0 0.0
    %1621 = vmatpush2.msra.mxu0 0.0
    %1622 = vmatprep.subr.mxu0 0.0
    %1623 = vmatpush2.msra.mxu0 0.0
    %1624 = vmatprep.subr.mxu0 0.0
    %1625 = vmatpush2.msra.mxu0 0.0
    %1626 = vmatprep.mubr.f32.mxu0 0.0
    %1627 = vmatmul.mubr.f32.gmra.mxu0 %v1560
    %v1628 = vpop.f32.mrf.mxu0
    %v1629 = vadd.f32 0.0, %v1628
    %v1630 = vpop.f32.mrf.mxu0
    %1631 = vdwg.mxu0
    %v1632 = vmul.f32 %v1629, %v1629
    %v1633 = vsel %vm226, %v1632, 0.0
    %v1634 = vrot.slane %v1633, 4
    %v1635 = vadd.f32 %v1633, %v1634
    %v1636 = vrot.slane %v1635, 2
    %v1637 = vadd.f32 %v1635, %v1636
    %v1638 = vrot.slane %v1637, 1
    %v1639 = vadd.f32 %v1637, %v1638
    %v1641 = vsel %vm151, %v1436, 0
    %v1644 = vsel %vm151, %v1437, 0
    %v1647 = vsel %vm151, %v1438, 0
    %1649 = vmatprep.subr.mxu0 0.0
    %1650 = vmatpush1.msra.mxu0 0.0
    %1651 = vmatprep.subr.mxu0 0.0
    %1652 = vmatpush1.msra.mxu0 0.0
    %1653 = vmatprep.subr.mxu0 0.0
    %1654 = vmatpush1.msra.mxu0 0.0
    %1655 = vmatprep.subr.mxu0 0.0
    %1656 = vmatpush1.msra.mxu0 0.0
    %1657 = vmatprep.subr.mxu0 0.0
    %1658 = vmatpush1.msra.mxu0 0.0
    %1659 = vmatprep.subr.mxu0 0.0
    %1660 = vmatpush1.msra.mxu0 0.0
    %1661 = vmatprep.subr.mxu0 0.0
    %1662 = vmatpush1.msra.mxu0 0.0
    %1663 = vmatprep.subr.mxu0 0.0
    %1664 = vmatpush1.msra.mxu0 0.0
    %1665 = vmatprep.subr.mxu0 0.0
    %1666 = vmatpush1.msra.mxu0 0.0
    %1667 = vmatprep.subr.mxu0 0.0
    %1668 = vmatpush1.msra.mxu0 0.0
    %1669 = vmatprep.subr.mxu0 0.0
    %1670 = vmatpush1.msra.mxu0 0.0
    %1671 = vmatprep.subr.mxu0 0.0
    %1672 = vmatpush1.msra.mxu0 0.0
    %1673 = vmatprep.subr.mxu0 0.0
    %1674 = vmatpush1.msra.mxu0 0.0
    %1675 = vmatprep.subr.mxu0 0.0
    %1676 = vmatpush1.msra.mxu0 0.0
    %1677 = vmatprep.subr.mxu0 0.0
    %1678 = vmatpush1.msra.mxu0 0.0
    %1679 = vmatprep.subr.mxu0 0.0
    %1680 = vmatpush1.msra.mxu0 %v1629
    %1681 = vmatprep.subr.mxu0 0.0
    %1682 = vmatpush2.msra.mxu0 0.0
    %1683 = vmatprep.subr.mxu0 0.0
    %1684 = vmatpush2.msra.mxu0 0.0
    %1685 = vmatprep.subr.mxu0 0.0
    %1686 = vmatpush2.msra.mxu0 0.0
    %1687 = vmatprep.subr.mxu0 0.0
    %1688 = vmatpush2.msra.mxu0 0.0
    %1689 = vmatprep.subr.mxu0 0.0
    %1690 = vmatpush2.msra.mxu0 0.0
    %1691 = vmatprep.subr.mxu0 0.0
    %1692 = vmatpush2.msra.mxu0 0.0
    %1693 = vmatprep.subr.mxu0 0.0
    %1694 = vmatpush2.msra.mxu0 0.0
    %1695 = vmatprep.subr.mxu0 0.0
    %1696 = vmatpush2.msra.mxu0 0.0
    %1697 = vmatprep.subr.mxu0 0.0
    %1698 = vmatpush2.msra.mxu0 0.0
    %1699 = vmatprep.subr.mxu0 0.0
    %1700 = vmatpush2.msra.mxu0 0.0
    %1701 = vmatprep.subr.mxu0 0.0
    %1702 = vmatpush2.msra.mxu0 0.0
    %1703 = vmatprep.subr.mxu0 0.0
    %1704 = vmatpush2.msra.mxu0 0.0
    %1705 = vmatprep.subr.mxu0 0.0
    %1706 = vmatpush2.msra.mxu0 0.0
    %1707 = vmatprep.subr.mxu0 0.0
    %1708 = vmatpush2.msra.mxu0 0.0
    %1709 = vmatprep.subr.mxu0 0.0
    %1710 = vmatpush2.msra.mxu0 0.0
    %1711 = vmatprep.subr.mxu0 0.0
    %1712 = vmatpush2.msra.mxu0 0.0
    %1713 = vmatprep.mubr.f32.mxu0 0.0
    %1714 = vmatmul.mubr.f32.gmra.mxu0 %v1641
    %v1715 = vpop.f32.mrf.mxu0
    %v1716 = vadd.f32 0.0, %v1715
    %v1717 = vpop.f32.mrf.mxu0
    %1718 = vmatprep.mubr.f32.mxu0 0.0
    %1719 = vmatmul.mubr.f32.gmra.mxu0 %v1644
    %v1720 = vpop.f32.mrf.mxu0
    %v1721 = vadd.f32 0.0, %v1720
    %v1722 = vpop.f32.mrf.mxu0
    %1723 = vmatprep.mubr.f32.mxu0 0.0
    %1724 = vmatmul.mubr.f32.gmra.mxu0 %v1647
    %v1725 = vpop.f32.mrf.mxu0
    %v1726 = vadd.f32 0.0, %v1725
    %v1727 = vpop.f32.mrf.mxu0
    %1728 = vdwg.mxu0
    %v1729 = vsub.f32 %v1441, %v1716
    %v1730 = vsub.f32 %v1442, %v1721
    %v1731 = vsub.f32 %v1443, %v1726
    %v1733 = vsel %vm151, %v1451, 0
    %1735 = vmatprep.subr.mxu0 0.0
    %1736 = vmatpush1.msra.mxu0 0.0
    %1737 = vmatprep.subr.mxu0 0.0
    %1738 = vmatpush1.msra.mxu0 0.0
    %1739 = vmatprep.subr.mxu0 0.0
    %1740 = vmatpush1.msra.mxu0 0.0
    %1741 = vmatprep.subr.mxu0 0.0
    %1742 = vmatpush1.msra.mxu0 0.0
    %1743 = vmatprep.subr.mxu0 0.0
    %1744 = vmatpush1.msra.mxu0 0.0
    %1745 = vmatprep.subr.mxu0 0.0
    %1746 = vmatpush1.msra.mxu0 0.0
    %1747 = vmatprep.subr.mxu0 0.0
    %1748 = vmatpush1.msra.mxu0 0.0
    %1749 = vmatprep.subr.mxu0 0.0
    %1750 = vmatpush1.msra.mxu0 0.0
    %1751 = vmatprep.subr.mxu0 0.0
    %1752 = vmatpush1.msra.mxu0 0.0
    %1753 = vmatprep.subr.mxu0 0.0
    %1754 = vmatpush1.msra.mxu0 0.0
    %1755 = vmatprep.subr.mxu0 0.0
    %1756 = vmatpush1.msra.mxu0 0.0
    %1757 = vmatprep.subr.mxu0 0.0
    %1758 = vmatpush1.msra.mxu0 0.0
    %1759 = vmatprep.subr.mxu0 0.0
    %1760 = vmatpush1.msra.mxu0 0.0
    %1761 = vmatprep.subr.mxu0 0.0
    %1762 = vmatpush1.msra.mxu0 0.0
    %1763 = vmatprep.subr.mxu0 0.0
    %1764 = vmatpush1.msra.mxu0 0.0
    %1765 = vmatprep.subr.mxu0 0.0
    %1766 = vmatpush1.msra.mxu0 %v1729
    %1767 = vmatprep.subr.mxu0 0.0
    %1768 = vmatpush2.msra.mxu0 0.0
    %1769 = vmatprep.subr.mxu0 0.0
    %1770 = vmatpush2.msra.mxu0 0.0
    %1771 = vmatprep.subr.mxu0 0.0
    %1772 = vmatpush2.msra.mxu0 0.0
    %1773 = vmatprep.subr.mxu0 0.0
    %1774 = vmatpush2.msra.mxu0 0.0
    %1775 = vmatprep.subr.mxu0 0.0
    %1776 = vmatpush2.msra.mxu0 0.0
    %1777 = vmatprep.subr.mxu0 0.0
    %1778 = vmatpush2.msra.mxu0 0.0
    %1779 = vmatprep.subr.mxu0 0.0
    %1780 = vmatpush2.msra.mxu0 0.0
    %1781 = vmatprep.subr.mxu0 0.0
    %1782 = vmatpush2.msra.mxu0 0.0
    %1783 = vmatprep.subr.mxu0 0.0
    %1784 = vmatpush2.msra.mxu0 0.0
    %1785 = vmatprep.subr.mxu0 0.0
    %1786 = vmatpush2.msra.mxu0 0.0
    %1787 = vmatprep.subr.mxu0 0.0
    %1788 = vmatpush2.msra.mxu0 0.0
    %1789 = vmatprep.subr.mxu0 0.0
    %1790 = vmatpush2.msra.mxu0 0.0
    %1791 = vmatprep.subr.mxu0 0.0
    %1792 = vmatpush2.msra.mxu0 0.0
    %1793 = vmatprep.subr.mxu0 0.0
    %1794 = vmatpush2.msra.mxu0 0.0
    %1795 = vmatprep.subr.mxu0 0.0
    %1796 = vmatpush2.msra.mxu0 0.0
    %1797 = vmatprep.subr.mxu0 0.0
    %1798 = vmatpush2.msra.mxu0 0.0
    %1799 = vmatprep.mubr.f32.mxu0 0.0
    %1800 = vmatmul.mubr.f32.gmra.mxu0 %v1733
    %v1801 = vpop.f32.mrf.mxu0
    %v1802 = vadd.f32 0.0, %v1801
    %v1803 = vpop.f32.mrf.mxu0
    %1804 = vdwg.mxu0
    %v1805 = vmul.f32 %v1802, %v1802
    %v1806 = vsel %vm226, %v1805, 0.0
    %v1807 = vrot.slane %v1806, 4
    %v1808 = vadd.f32 %v1806, %v1807
    %v1809 = vrot.slane %v1808, 2
    %v1810 = vadd.f32 %v1808, %v1809
    %v1811 = vrot.slane %v1810, 1
    %v1812 = vadd.f32 %v1810, %v1811
    %v1813 = vadd.f32 %v1639, %v1812
    %1814 = vrot.lane.b32.xlu0 %v1437, 120
    %v1815 = vpop.permute.xlu0 %1814
    %1816 = vrot.lane.b32.xlu0 %v1438, 120
    %v1817 = vpop.permute.xlu0 %1816
    %v1818 = vsel %vm151, %v1815, 0
    %v1820 = vsel %vm151, %v1817, 0
    %1822 = vmatprep.subr.mxu0 0.0
    %1823 = vmatpush1.msra.mxu0 0.0
    %1824 = vmatprep.subr.mxu0 0.0
    %1825 = vmatpush1.msra.mxu0 0.0
    %1826 = vmatprep.subr.mxu0 0.0
    %1827 = vmatpush1.msra.mxu0 0.0
    %1828 = vmatprep.subr.mxu0 0.0
    %1829 = vmatpush1.msra.mxu0 0.0
    %1830 = vmatprep.subr.mxu0 0.0
    %1831 = vmatpush1.msra.mxu0 0.0
    %1832 = vmatprep.subr.mxu0 0.0
    %1833 = vmatpush1.msra.mxu0 0.0
    %1834 = vmatprep.subr.mxu0 0.0
    %1835 = vmatpush1.msra.mxu0 0.0
    %1836 = vmatprep.subr.mxu0 0.0
    %1837 = vmatpush1.msra.mxu0 0.0
    %1838 = vmatprep.subr.mxu0 0.0
    %1839 = vmatpush1.msra.mxu0 0.0
    %1840 = vmatprep.subr.mxu0 0.0
    %1841 = vmatpush1.msra.mxu0 0.0
    %1842 = vmatprep.subr.mxu0 0.0
    %1843 = vmatpush1.msra.mxu0 0.0
    %1844 = vmatprep.subr.mxu0 0.0
    %1845 = vmatpush1.msra.mxu0 0.0
    %1846 = vmatprep.subr.mxu0 0.0
    %1847 = vmatpush1.msra.mxu0 0.0
    %1848 = vmatprep.subr.mxu0 0.0
    %1849 = vmatpush1.msra.mxu0 0.0
    %1850 = vmatprep.subr.mxu0 0.0
    %1851 = vmatpush1.msra.mxu0 0.0
    %1852 = vmatprep.subr.mxu0 0.0
    %1853 = vmatpush1.msra.mxu0 %v1802
    %1854 = vmatprep.subr.mxu0 0.0
    %1855 = vmatpush2.msra.mxu0 0.0
    %1856 = vmatprep.subr.mxu0 0.0
    %1857 = vmatpush2.msra.mxu0 0.0
    %1858 = vmatprep.subr.mxu0 0.0
    %1859 = vmatpush2.msra.mxu0 0.0
    %1860 = vmatprep.subr.mxu0 0.0
    %1861 = vmatpush2.msra.mxu0 0.0
    %1862 = vmatprep.subr.mxu0 0.0
    %1863 = vmatpush2.msra.mxu0 0.0
    %1864 = vmatprep.subr.mxu0 0.0
    %1865 = vmatpush2.msra.mxu0 0.0
    %1866 = vmatprep.subr.mxu0 0.0
    %1867 = vmatpush2.msra.mxu0 0.0
    %1868 = vmatprep.subr.mxu0 0.0
    %1869 = vmatpush2.msra.mxu0 0.0
    %1870 = vmatprep.subr.mxu0 0.0
    %1871 = vmatpush2.msra.mxu0 0.0
    %1872 = vmatprep.subr.mxu0 0.0
    %1873 = vmatpush2.msra.mxu0 0.0
    %1874 = vmatprep.subr.mxu0 0.0
    %1875 = vmatpush2.msra.mxu0 0.0
    %1876 = vmatprep.subr.mxu0 0.0
    %1877 = vmatpush2.msra.mxu0 0.0
    %1878 = vmatprep.subr.mxu0 0.0
    %1879 = vmatpush2.msra.mxu0 0.0
    %1880 = vmatprep.subr.mxu0 0.0
    %1881 = vmatpush2.msra.mxu0 0.0
    %1882 = vmatprep.subr.mxu0 0.0
    %1883 = vmatpush2.msra.mxu0 0.0
    %1884 = vmatprep.subr.mxu0 0.0
    %1885 = vmatpush2.msra.mxu0 0.0
    %1886 = vmatprep.mubr.f32.mxu0 0.0
    %1887 = vmatmul.mubr.f32.gmra.mxu0 %v1818
    %v1888 = vpop.f32.mrf.mxu0
    %v1889 = vadd.f32 0.0, %v1888
    %v1890 = vpop.f32.mrf.mxu0
    %1891 = vmatprep.mubr.f32.mxu0 0.0
    %1892 = vmatmul.mubr.f32.gmra.mxu0 %v1820
    %v1893 = vpop.f32.mrf.mxu0
    %v1894 = vadd.f32 0.0, %v1893
    %v1895 = vpop.f32.mrf.mxu0
    %1896 = vdwg.mxu0
    %v1897 = vsub.f32 %v1730, %v1889
    %v1898 = vsub.f32 %v1731, %v1894
    %v1900 = vsel %vm151, %v1452, 0
    %1902 = vmatprep.subr.mxu0 0.0
    %1903 = vmatpush1.msra.mxu0 0.0
    %1904 = vmatprep.subr.mxu0 0.0
    %1905 = vmatpush1.msra.mxu0 0.0
    %1906 = vmatprep.subr.mxu0 0.0
    %1907 = vmatpush1.msra.mxu0 0.0
    %1908 = vmatprep.subr.mxu0 0.0
    %1909 = vmatpush1.msra.mxu0 0.0
    %1910 = vmatprep.subr.mxu0 0.0
    %1911 = vmatpush1.msra.mxu0 0.0
    %1912 = vmatprep.subr.mxu0 0.0
    %1913 = vmatpush1.msra.mxu0 0.0
    %1914 = vmatprep.subr.mxu0 0.0
    %1915 = vmatpush1.msra.mxu0 0.0
    %1916 = vmatprep.subr.mxu0 0.0
    %1917 = vmatpush1.msra.mxu0 0.0
    %1918 = vmatprep.subr.mxu0 0.0
    %1919 = vmatpush1.msra.mxu0 0.0
    %1920 = vmatprep.subr.mxu0 0.0
    %1921 = vmatpush1.msra.mxu0 0.0
    %1922 = vmatprep.subr.mxu0 0.0
    %1923 = vmatpush1.msra.mxu0 0.0
    %1924 = vmatprep.subr.mxu0 0.0
    %1925 = vmatpush1.msra.mxu0 0.0
    %1926 = vmatprep.subr.mxu0 0.0
    %1927 = vmatpush1.msra.mxu0 0.0
    %1928 = vmatprep.subr.mxu0 0.0
    %1929 = vmatpush1.msra.mxu0 0.0
    %1930 = vmatprep.subr.mxu0 0.0
    %1931 = vmatpush1.msra.mxu0 0.0
    %1932 = vmatprep.subr.mxu0 0.0
    %1933 = vmatpush1.msra.mxu0 %v1897
    %1934 = vmatprep.subr.mxu0 0.0
    %1935 = vmatpush2.msra.mxu0 0.0
    %1936 = vmatprep.subr.mxu0 0.0
    %1937 = vmatpush2.msra.mxu0 0.0
    %1938 = vmatprep.subr.mxu0 0.0
    %1939 = vmatpush2.msra.mxu0 0.0
    %1940 = vmatprep.subr.mxu0 0.0
    %1941 = vmatpush2.msra.mxu0 0.0
    %1942 = vmatprep.subr.mxu0 0.0
    %1943 = vmatpush2.msra.mxu0 0.0
    %1944 = vmatprep.subr.mxu0 0.0
    %1945 = vmatpush2.msra.mxu0 0.0
    %1946 = vmatprep.subr.mxu0 0.0
    %1947 = vmatpush2.msra.mxu0 0.0
    %1948 = vmatprep.subr.mxu0 0.0
    %1949 = vmatpush2.msra.mxu0 0.0
    %1950 = vmatprep.subr.mxu0 0.0
    %1951 = vmatpush2.msra.mxu0 0.0
    %1952 = vmatprep.subr.mxu0 0.0
    %1953 = vmatpush2.msra.mxu0 0.0
    %1954 = vmatprep.subr.mxu0 0.0
    %1955 = vmatpush2.msra.mxu0 0.0
    %1956 = vmatprep.subr.mxu0 0.0
    %1957 = vmatpush2.msra.mxu0 0.0
    %1958 = vmatprep.subr.mxu0 0.0
    %1959 = vmatpush2.msra.mxu0 0.0
    %1960 = vmatprep.subr.mxu0 0.0
    %1961 = vmatpush2.msra.mxu0 0.0
    %1962 = vmatprep.subr.mxu0 0.0
    %1963 = vmatpush2.msra.mxu0 0.0
    %1964 = vmatprep.subr.mxu0 0.0
    %1965 = vmatpush2.msra.mxu0 0.0
    %1966 = vmatprep.mubr.f32.mxu0 0.0
    %1967 = vmatmul.mubr.f32.gmra.mxu0 %v1900
    %v1968 = vpop.f32.mrf.mxu0
    %v1969 = vadd.f32 0.0, %v1968
    %v1970 = vpop.f32.mrf.mxu0
    %1971 = vdwg.mxu0
    %v1972 = vmul.f32 %v1969, %v1969
    %v1973 = vsel %vm226, %v1972, 0.0
    %v1974 = vrot.slane %v1973, 4
    %v1975 = vadd.f32 %v1973, %v1974
    %v1976 = vrot.slane %v1975, 2
    %v1977 = vadd.f32 %v1975, %v1976
    %v1978 = vrot.slane %v1977, 1
    %v1979 = vadd.f32 %v1977, %v1978
    %v1980 = vadd.f32 %v1813, %v1979
    %1981 = vrot.lane.b32.xlu0 %v1438, 112
    %v1982 = vpop.permute.xlu0 %1981
    %v1983 = vsel %vm151, %v1982, 0
    %1985 = vmatprep.subr.mxu0 0.0
    %1986 = vmatpush1.msra.mxu0 0.0
    %1987 = vmatprep.subr.mxu0 0.0
    %1988 = vmatpush1.msra.mxu0 0.0
    %1989 = vmatprep.subr.mxu0 0.0
    %1990 = vmatpush1.msra.mxu0 0.0
    %1991 = vmatprep.subr.mxu0 0.0
    %1992 = vmatpush1.msra.mxu0 0.0
    %1993 = vmatprep.subr.mxu0 0.0
    %1994 = vmatpush1.msra.mxu0 0.0
    %1995 = vmatprep.subr.mxu0 0.0
    %1996 = vmatpush1.msra.mxu0 0.0
    %1997 = vmatprep.subr.mxu0 0.0
    %1998 = vmatpush1.msra.mxu0 0.0
    %1999 = vmatprep.subr.mxu0 0.0
    %2000 = vmatpush1.msra.mxu0 0.0
    %2001 = vmatprep.subr.mxu0 0.0
    %2002 = vmatpush1.msra.mxu0 0.0
    %2003 = vmatprep.subr.mxu0 0.0
    %2004 = vmatpush1.msra.mxu0 0.0
    %2005 = vmatprep.subr.mxu0 0.0
    %2006 = vmatpush1.msra.mxu0 0.0
    %2007 = vmatprep.subr.mxu0 0.0
    %2008 = vmatpush1.msra.mxu0 0.0
    %2009 = vmatprep.subr.mxu0 0.0
    %2010 = vmatpush1.msra.mxu0 0.0
    %2011 = vmatprep.subr.mxu0 0.0
    %2012 = vmatpush1.msra.mxu0 0.0
    %2013 = vmatprep.subr.mxu0 0.0
    %2014 = vmatpush1.msra.mxu0 0.0
    %2015 = vmatprep.subr.mxu0 0.0
    %2016 = vmatpush1.msra.mxu0 %v1969
    %2017 = vmatprep.subr.mxu0 0.0
    %2018 = vmatpush2.msra.mxu0 0.0
    %2019 = vmatprep.subr.mxu0 0.0
    %2020 = vmatpush2.msra.mxu0 0.0
    %2021 = vmatprep.subr.mxu0 0.0
    %2022 = vmatpush2.msra.mxu0 0.0
    %2023 = vmatprep.subr.mxu0 0.0
    %2024 = vmatpush2.msra.mxu0 0.0
    %2025 = vmatprep.subr.mxu0 0.0
    %2026 = vmatpush2.msra.mxu0 0.0
    %2027 = vmatprep.subr.mxu0 0.0
    %2028 = vmatpush2.msra.mxu0 0.0
    %2029 = vmatprep.subr.mxu0 0.0
    %2030 = vmatpush2.msra.mxu0 0.0
    %2031 = vmatprep.subr.mxu0 0.0
    %2032 = vmatpush2.msra.mxu0 0.0
    %2033 = vmatprep.subr.mxu0 0.0
    %2034 = vmatpush2.msra.mxu0 0.0
    %2035 = vmatprep.subr.mxu0 0.0
    %2036 = vmatpush2.msra.mxu0 0.0
    %2037 = vmatprep.subr.mxu0 0.0
    %2038 = vmatpush2.msra.mxu0 0.0
    %2039 = vmatprep.subr.mxu0 0.0
    %2040 = vmatpush2.msra.mxu0 0.0
    %2041 = vmatprep.subr.mxu0 0.0
    %2042 = vmatpush2.msra.mxu0 0.0
    %2043 = vmatprep.subr.mxu0 0.0
    %2044 = vmatpush2.msra.mxu0 0.0
    %2045 = vmatprep.subr.mxu0 0.0
    %2046 = vmatpush2.msra.mxu0 0.0
    %2047 = vmatprep.subr.mxu0 0.0
    %2048 = vmatpush2.msra.mxu0 0.0
    %2049 = vmatprep.mubr.f32.mxu0 0.0
    %2050 = vmatmul.mubr.f32.gmra.mxu0 %v1983
    %v2051 = vpop.f32.mrf.mxu0
    %v2052 = vadd.f32 0.0, %v2051
    %v2053 = vpop.f32.mrf.mxu0
    %2054 = vdwg.mxu0
    %v2055 = vsub.f32 %v1898, %v2052
    %v2057 = vsel %vm151, %v1453, 0
    %2059 = vmatprep.subr.mxu0 0.0
    %2060 = vmatpush1.msra.mxu0 0.0
    %2061 = vmatprep.subr.mxu0 0.0
    %2062 = vmatpush1.msra.mxu0 0.0
    %2063 = vmatprep.subr.mxu0 0.0
    %2064 = vmatpush1.msra.mxu0 0.0
    %2065 = vmatprep.subr.mxu0 0.0
    %2066 = vmatpush1.msra.mxu0 0.0
    %2067 = vmatprep.subr.mxu0 0.0
    %2068 = vmatpush1.msra.mxu0 0.0
    %2069 = vmatprep.subr.mxu0 0.0
    %2070 = vmatpush1.msra.mxu0 0.0
    %2071 = vmatprep.subr.mxu0 0.0
    %2072 = vmatpush1.msra.mxu0 0.0
    %2073 = vmatprep.subr.mxu0 0.0
    %2074 = vmatpush1.msra.mxu0 0.0
    %2075 = vmatprep.subr.mxu0 0.0
    %2076 = vmatpush1.msra.mxu0 0.0
    %2077 = vmatprep.subr.mxu0 0.0
    %2078 = vmatpush1.msra.mxu0 0.0
    %2079 = vmatprep.subr.mxu0 0.0
    %2080 = vmatpush1.msra.mxu0 0.0
    %2081 = vmatprep.subr.mxu0 0.0
    %2082 = vmatpush1.msra.mxu0 0.0
    %2083 = vmatprep.subr.mxu0 0.0
    %2084 = vmatpush1.msra.mxu0 0.0
    %2085 = vmatprep.subr.mxu0 0.0
    %2086 = vmatpush1.msra.mxu0 0.0
    %2087 = vmatprep.subr.mxu0 0.0
    %2088 = vmatpush1.msra.mxu0 0.0
    %2089 = vmatprep.subr.mxu0 0.0
    %2090 = vmatpush1.msra.mxu0 %v2055
    %2091 = vmatprep.subr.mxu0 0.0
    %2092 = vmatpush2.msra.mxu0 0.0
    %2093 = vmatprep.subr.mxu0 0.0
    %2094 = vmatpush2.msra.mxu0 0.0
    %2095 = vmatprep.subr.mxu0 0.0
    %2096 = vmatpush2.msra.mxu0 0.0
    %2097 = vmatprep.subr.mxu0 0.0
    %2098 = vmatpush2.msra.mxu0 0.0
    %2099 = vmatprep.subr.mxu0 0.0
    %2100 = vmatpush2.msra.mxu0 0.0
    %2101 = vmatprep.subr.mxu0 0.0
    %2102 = vmatpush2.msra.mxu0 0.0
    %2103 = vmatprep.subr.mxu0 0.0
    %2104 = vmatpush2.msra.mxu0 0.0
    %2105 = vmatprep.subr.mxu0 0.0
    %2106 = vmatpush2.msra.mxu0 0.0
    %2107 = vmatprep.subr.mxu0 0.0
    %2108 = vmatpush2.msra.mxu0 0.0
    %2109 = vmatprep.subr.mxu0 0.0
    %2110 = vmatpush2.msra.mxu0 0.0
    %2111 = vmatprep.subr.mxu0 0.0
    %2112 = vmatpush2.msra.mxu0 0.0
    %2113 = vmatprep.subr.mxu0 0.0
    %2114 = vmatpush2.msra.mxu0 0.0
    %2115 = vmatprep.subr.mxu0 0.0
    %2116 = vmatpush2.msra.mxu0 0.0
    %2117 = vmatprep.subr.mxu0 0.0
    %2118 = vmatpush2.msra.mxu0 0.0
    %2119 = vmatprep.subr.mxu0 0.0
    %2120 = vmatpush2.msra.mxu0 0.0
    %2121 = vmatprep.subr.mxu0 0.0
    %2122 = vmatpush2.msra.mxu0 0.0
    %2123 = vmatprep.mubr.f32.mxu0 0.0
    %2124 = vmatmul.mubr.f32.gmra.mxu0 %v2057
    %v2125 = vpop.f32.mrf.mxu0
    %v2126 = vadd.f32 0.0, %v2125
    %v2127 = vpop.f32.mrf.mxu0
    %2128 = vdwg.mxu0
    %v2129 = vmul.f32 %v2126, %v2126
    %v2130 = vsel %vm226, %v2129, 0.0
    %v2131 = vrot.slane %v2130, 4
    %v2132 = vadd.f32 %v2130, %v2131
    %v2133 = vrot.slane %v2132, 2
    %v2134 = vadd.f32 %v2132, %v2133
    %v2135 = vrot.slane %v2134, 1
    %v2136 = vadd.f32 %v2134, %v2135
    %v2137 = vadd.f32 %v1980, %v2136
    %s2138 = scalar_lea.vmem %s0, 96
    %v2139 = vld [vmem:[%s2138 + $0x8] sm:$0xff]
    %v2140 = vld [vmem:[%s2138 + $0x10] sm:$0xff]
    %v2141 = vld [vmem:[%s2138 + $0x18] sm:$0xff]
    %s2142 = scalar_lea.vmem %s3, 96
    %v2143 = vld [vmem:[%s2142] sm:$0xff]
    %v2144 = vld [vmem:[%s2142 + $0x8] sm:$0xff]
    %v2145 = vld [vmem:[%s2142 + $0x10] sm:$0xff]
    %v2146 = vld [vmem:[%s2142 + $0x18] sm:$0xff]
    %s2147 = scalar_lea.vmem %s2, 96
    %v2148 = vld [vmem:[%s2147] sm:$0xff]
    %v2149 = vld [vmem:[%s2147 + $0x8] sm:$0xff]
    %v2150 = vld [vmem:[%s2147 + $0x10] sm:$0xff]
    %v2151 = vld [vmem:[%s2147 + $0x18] sm:$0xff]
    %s2152 = scalar_lea.vmem %s1, 96
    %v2153 = vld [vmem:[%s2152] sm:$0xff]
    %v2154 = vld [vmem:[%s2152 + $0x8] sm:$0xff]
    %v2155 = vld [vmem:[%s2152 + $0x10] sm:$0xff]
    %v2156 = vld [vmem:[%s2152 + $0x18] sm:$0xff]
    %2157 = vxpose.xlu0.b32.start [1/16] %v2148, 128
    %2158 = vxpose.xlu0.b32.cont [2/16] %v2149, 128
    %2159 = vxpose.xlu0.b32.cont [3/16] %v2150, 128
    %2160 = vxpose.xlu0.b32.cont [4/16] %v2151, 128
    %2161 = vxpose.xlu0.b32.cont [5/16] 0.0, 128
    %2162 = vxpose.xlu0.b32.cont [6/16] 0.0, 128
    %2163 = vxpose.xlu0.b32.cont [7/16] 0.0, 128
    %2164 = vxpose.xlu0.b32.cont [8/16] 0.0, 128
    %2165 = vxpose.xlu0.b32.cont [9/16] 0.0, 128
    %2166 = vxpose.xlu0.b32.cont [10/16] 0.0, 128
    %2167 = vxpose.xlu0.b32.cont [11/16] 0.0, 128
    %2168 = vxpose.xlu0.b32.cont [12/16] 0.0, 128
    %2169 = vxpose.xlu0.b32.cont [13/16] 0.0, 128
    %2170 = vxpose.xlu0.b32.cont [14/16] 0.0, 128
    %2171 = vxpose.xlu0.b32.cont [15/16] 0.0, 128
    %2172 = vxpose.xlu0.b32.end [16/16] 0.0, 128
    %v2173 = vpop.trf.xlu0
    %v2174 = vpop.trf.xlu0
    %v2175 = vpop.trf.xlu0
    %v2176 = vpop.trf.xlu0
    %v2177 = vpop.trf.xlu0
    %v2178 = vpop.trf.xlu0
    %v2179 = vpop.trf.xlu0
    %v2180 = vpop.trf.xlu0
    %v2181 = vpop.trf.xlu0
    %v2182 = vpop.trf.xlu0
    %v2183 = vpop.trf.xlu0
    %v2184 = vpop.trf.xlu0
    %v2185 = vpop.trf.xlu0
    %v2186 = vpop.trf.xlu0
    %v2187 = vpop.trf.xlu0
    %v2188 = vpop.trf.xlu0
    %v2190 = vsel %vm77, %v2173, 0
    %2192 = vmatprep.subr.mxu0 0.0
    %2193 = vmatpush1.msra.mxu0 0.0
    %2194 = vmatprep.subr.mxu0 0.0
    %2195 = vmatpush1.msra.mxu0 0.0
    %2196 = vmatprep.subr.mxu0 0.0
    %2197 = vmatpush1.msra.mxu0 0.0
    %2198 = vmatprep.subr.mxu0 0.0
    %2199 = vmatpush1.msra.mxu0 0.0
    %2200 = vmatprep.subr.mxu0 0.0
    %2201 = vmatpush1.msra.mxu0 0.0
    %2202 = vmatprep.subr.mxu0 0.0
    %2203 = vmatpush1.msra.mxu0 0.0
    %2204 = vmatprep.subr.mxu0 0.0
    %2205 = vmatpush1.msra.mxu0 0.0
    %2206 = vmatprep.subr.mxu0 0.0
    %2207 = vmatpush1.msra.mxu0 0.0
    %2208 = vmatprep.subr.mxu0 0.0
    %2209 = vmatpush1.msra.mxu0 0.0
    %2210 = vmatprep.subr.mxu0 0.0
    %2211 = vmatpush1.msra.mxu0 0.0
    %2212 = vmatprep.subr.mxu0 0.0
    %2213 = vmatpush1.msra.mxu0 0.0
    %2214 = vmatprep.subr.mxu0 0.0
    %2215 = vmatpush1.msra.mxu0 0.0
    %2216 = vmatprep.subr.mxu0 0.0
    %2217 = vmatpush1.msra.mxu0 %v2146
    %2218 = vmatprep.subr.mxu0 0.0
    %2219 = vmatpush1.msra.mxu0 %v2145
    %2220 = vmatprep.subr.mxu0 0.0
    %2221 = vmatpush1.msra.mxu0 %v2144
    %2222 = vmatprep.subr.mxu0 0.0
    %2223 = vmatpush1.msra.mxu0 %v2143
    %2224 = vmatprep.subr.mxu0 0.0
    %2225 = vmatpush2.msra.mxu0 0.0
    %2226 = vmatprep.subr.mxu0 0.0
    %2227 = vmatpush2.msra.mxu0 0.0
    %2228 = vmatprep.subr.mxu0 0.0
    %2229 = vmatpush2.msra.mxu0 0.0
    %2230 = vmatprep.subr.mxu0 0.0
    %2231 = vmatpush2.msra.mxu0 0.0
    %2232 = vmatprep.subr.mxu0 0.0
    %2233 = vmatpush2.msra.mxu0 0.0
    %2234 = vmatprep.subr.mxu0 0.0
    %2235 = vmatpush2.msra.mxu0 0.0
    %2236 = vmatprep.subr.mxu0 0.0
    %2237 = vmatpush2.msra.mxu0 0.0
    %2238 = vmatprep.subr.mxu0 0.0
    %2239 = vmatpush2.msra.mxu0 0.0
    %2240 = vmatprep.subr.mxu0 0.0
    %2241 = vmatpush2.msra.mxu0 0.0
    %2242 = vmatprep.subr.mxu0 0.0
    %2243 = vmatpush2.msra.mxu0 0.0
    %2244 = vmatprep.subr.mxu0 0.0
    %2245 = vmatpush2.msra.mxu0 0.0
    %2246 = vmatprep.subr.mxu0 0.0
    %2247 = vmatpush2.msra.mxu0 0.0
    %2248 = vmatprep.subr.mxu0 0.0
    %2249 = vmatpush2.msra.mxu0 0.0
    %2250 = vmatprep.subr.mxu0 0.0
    %2251 = vmatpush2.msra.mxu0 0.0
    %2252 = vmatprep.subr.mxu0 0.0
    %2253 = vmatpush2.msra.mxu0 0.0
    %2254 = vmatprep.subr.mxu0 0.0
    %2255 = vmatpush2.msra.mxu0 0.0
    %2256 = vmatprep.mubr.f32.mxu0 0.0
    %2257 = vmatmul.mubr.f32.gmra.mxu0 %v2190
    %v2258 = vpop.f32.mrf.mxu0
    %v2259 = vadd.f32 0.0, %v2258
    %v2260 = vpop.f32.mrf.mxu0
    %2261 = vdwg.mxu0
    %v2263 = vsel %vm151, %v2153, 0
    %2265 = vmatprep.subr.mxu0 0.0
    %2266 = vmatpush1.msra.mxu0 0.0
    %2267 = vmatprep.subr.mxu0 0.0
    %2268 = vmatpush1.msra.mxu0 0.0
    %2269 = vmatprep.subr.mxu0 0.0
    %2270 = vmatpush1.msra.mxu0 0.0
    %2271 = vmatprep.subr.mxu0 0.0
    %2272 = vmatpush1.msra.mxu0 0.0
    %2273 = vmatprep.subr.mxu0 0.0
    %2274 = vmatpush1.msra.mxu0 0.0
    %2275 = vmatprep.subr.mxu0 0.0
    %2276 = vmatpush1.msra.mxu0 0.0
    %2277 = vmatprep.subr.mxu0 0.0
    %2278 = vmatpush1.msra.mxu0 0.0
    %2279 = vmatprep.subr.mxu0 0.0
    %2280 = vmatpush1.msra.mxu0 0.0
    %2281 = vmatprep.subr.mxu0 0.0
    %2282 = vmatpush1.msra.mxu0 0.0
    %2283 = vmatprep.subr.mxu0 0.0
    %2284 = vmatpush1.msra.mxu0 0.0
    %2285 = vmatprep.subr.mxu0 0.0
    %2286 = vmatpush1.msra.mxu0 0.0
    %2287 = vmatprep.subr.mxu0 0.0
    %2288 = vmatpush1.msra.mxu0 0.0
    %2289 = vmatprep.subr.mxu0 0.0
    %2290 = vmatpush1.msra.mxu0 0.0
    %2291 = vmatprep.subr.mxu0 0.0
    %2292 = vmatpush1.msra.mxu0 0.0
    %2293 = vmatprep.subr.mxu0 0.0
    %2294 = vmatpush1.msra.mxu0 0.0
    %2295 = vmatprep.subr.mxu0 0.0
    %2296 = vmatpush1.msra.mxu0 %v2143
    %2297 = vmatprep.subr.mxu0 0.0
    %2298 = vmatpush2.msra.mxu0 0.0
    %2299 = vmatprep.subr.mxu0 0.0
    %2300 = vmatpush2.msra.mxu0 0.0
    %2301 = vmatprep.subr.mxu0 0.0
    %2302 = vmatpush2.msra.mxu0 0.0
    %2303 = vmatprep.subr.mxu0 0.0
    %2304 = vmatpush2.msra.mxu0 0.0
    %2305 = vmatprep.subr.mxu0 0.0
    %2306 = vmatpush2.msra.mxu0 0.0
    %2307 = vmatprep.subr.mxu0 0.0
    %2308 = vmatpush2.msra.mxu0 0.0
    %2309 = vmatprep.subr.mxu0 0.0
    %2310 = vmatpush2.msra.mxu0 0.0
    %2311 = vmatprep.subr.mxu0 0.0
    %2312 = vmatpush2.msra.mxu0 0.0
    %2313 = vmatprep.subr.mxu0 0.0
    %2314 = vmatpush2.msra.mxu0 0.0
    %2315 = vmatprep.subr.mxu0 0.0
    %2316 = vmatpush2.msra.mxu0 0.0
    %2317 = vmatprep.subr.mxu0 0.0
    %2318 = vmatpush2.msra.mxu0 0.0
    %2319 = vmatprep.subr.mxu0 0.0
    %2320 = vmatpush2.msra.mxu0 0.0
    %2321 = vmatprep.subr.mxu0 0.0
    %2322 = vmatpush2.msra.mxu0 0.0
    %2323 = vmatprep.subr.mxu0 0.0
    %2324 = vmatpush2.msra.mxu0 0.0
    %2325 = vmatprep.subr.mxu0 0.0
    %2326 = vmatpush2.msra.mxu0 0.0
    %2327 = vmatprep.subr.mxu0 0.0
    %2328 = vmatpush2.msra.mxu0 0.0
    %2329 = vmatprep.mubr.f32.mxu0 0.0
    %2330 = vmatmul.mubr.f32.gmra.mxu0 %v2263
    %v2331 = vpop.f32.mrf.mxu0
    %v2332 = vadd.f32 0.0, %v2331
    %v2333 = vpop.f32.mrf.mxu0
    %2334 = vdwg.mxu0
    %v2335 = vmul.f32 %v2332, %v2332
    %v2336 = vsel %vm226, %v2335, 0.0
    %v2337 = vrot.slane %v2336, 4
    %v2338 = vadd.f32 %v2336, %v2337
    %v2339 = vrot.slane %v2338, 2
    %v2340 = vadd.f32 %v2338, %v2339
    %v2341 = vrot.slane %v2340, 1
    %v2342 = vadd.f32 %v2340, %v2341
    %v2344 = vsel %vm151, %v2139, 0
    %v2347 = vsel %vm151, %v2140, 0
    %v2350 = vsel %vm151, %v2141, 0
    %2352 = vmatprep.subr.mxu0 0.0
    %2353 = vmatpush1.msra.mxu0 0.0
    %2354 = vmatprep.subr.mxu0 0.0
    %2355 = vmatpush1.msra.mxu0 0.0
    %2356 = vmatprep.subr.mxu0 0.0
    %2357 = vmatpush1.msra.mxu0 0.0
    %2358 = vmatprep.subr.mxu0 0.0
    %2359 = vmatpush1.msra.mxu0 0.0
    %2360 = vmatprep.subr.mxu0 0.0
    %2361 = vmatpush1.msra.mxu0 0.0
    %2362 = vmatprep.subr.mxu0 0.0
    %2363 = vmatpush1.msra.mxu0 0.0
    %2364 = vmatprep.subr.mxu0 0.0
    %2365 = vmatpush1.msra.mxu0 0.0
    %2366 = vmatprep.subr.mxu0 0.0
    %2367 = vmatpush1.msra.mxu0 0.0
    %2368 = vmatprep.subr.mxu0 0.0
    %2369 = vmatpush1.msra.mxu0 0.0
    %2370 = vmatprep.subr.mxu0 0.0
    %2371 = vmatpush1.msra.mxu0 0.0
    %2372 = vmatprep.subr.mxu0 0.0
    %2373 = vmatpush1.msra.mxu0 0.0
    %2374 = vmatprep.subr.mxu0 0.0
    %2375 = vmatpush1.msra.mxu0 0.0
    %2376 = vmatprep.subr.mxu0 0.0
    %2377 = vmatpush1.msra.mxu0 0.0
    %2378 = vmatprep.subr.mxu0 0.0
    %2379 = vmatpush1.msra.mxu0 0.0
    %2380 = vmatprep.subr.mxu0 0.0
    %2381 = vmatpush1.msra.mxu0 0.0
    %2382 = vmatprep.subr.mxu0 0.0
    %2383 = vmatpush1.msra.mxu0 %v2332
    %2384 = vmatprep.subr.mxu0 0.0
    %2385 = vmatpush2.msra.mxu0 0.0
    %2386 = vmatprep.subr.mxu0 0.0
    %2387 = vmatpush2.msra.mxu0 0.0
    %2388 = vmatprep.subr.mxu0 0.0
    %2389 = vmatpush2.msra.mxu0 0.0
    %2390 = vmatprep.subr.mxu0 0.0
    %2391 = vmatpush2.msra.mxu0 0.0
    %2392 = vmatprep.subr.mxu0 0.0
    %2393 = vmatpush2.msra.mxu0 0.0
    %2394 = vmatprep.subr.mxu0 0.0
    %2395 = vmatpush2.msra.mxu0 0.0
    %2396 = vmatprep.subr.mxu0 0.0
    %2397 = vmatpush2.msra.mxu0 0.0
    %2398 = vmatprep.subr.mxu0 0.0
    %2399 = vmatpush2.msra.mxu0 0.0
    %2400 = vmatprep.subr.mxu0 0.0
    %2401 = vmatpush2.msra.mxu0 0.0
    %2402 = vmatprep.subr.mxu0 0.0
    %2403 = vmatpush2.msra.mxu0 0.0
    %2404 = vmatprep.subr.mxu0 0.0
    %2405 = vmatpush2.msra.mxu0 0.0
    %2406 = vmatprep.subr.mxu0 0.0
    %2407 = vmatpush2.msra.mxu0 0.0
    %2408 = vmatprep.subr.mxu0 0.0
    %2409 = vmatpush2.msra.mxu0 0.0
    %2410 = vmatprep.subr.mxu0 0.0
    %2411 = vmatpush2.msra.mxu0 0.0
    %2412 = vmatprep.subr.mxu0 0.0
    %2413 = vmatpush2.msra.mxu0 0.0
    %2414 = vmatprep.subr.mxu0 0.0
    %2415 = vmatpush2.msra.mxu0 0.0
    %2416 = vmatprep.mubr.f32.mxu0 0.0
    %2417 = vmatmul.mubr.f32.gmra.mxu0 %v2344
    %v2418 = vpop.f32.mrf.mxu0
    %v2419 = vadd.f32 0.0, %v2418
    %v2420 = vpop.f32.mrf.mxu0
    %2421 = vmatprep.mubr.f32.mxu0 0.0
    %2422 = vmatmul.mubr.f32.gmra.mxu0 %v2347
    %v2423 = vpop.f32.mrf.mxu0
    %v2424 = vadd.f32 0.0, %v2423
    %v2425 = vpop.f32.mrf.mxu0
    %2426 = vmatprep.mubr.f32.mxu0 0.0
    %2427 = vmatmul.mubr.f32.gmra.mxu0 %v2350
    %v2428 = vpop.f32.mrf.mxu0
    %v2429 = vadd.f32 0.0, %v2428
    %v2430 = vpop.f32.mrf.mxu0
    %2431 = vdwg.mxu0
    %v2432 = vsub.f32 %v2144, %v2419
    %v2433 = vsub.f32 %v2145, %v2424
    %v2434 = vsub.f32 %v2146, %v2429
    %v2436 = vsel %vm151, %v2154, 0
    %2438 = vmatprep.subr.mxu0 0.0
    %2439 = vmatpush1.msra.mxu0 0.0
    %2440 = vmatprep.subr.mxu0 0.0
    %2441 = vmatpush1.msra.mxu0 0.0
    %2442 = vmatprep.subr.mxu0 0.0
    %2443 = vmatpush1.msra.mxu0 0.0
    %2444 = vmatprep.subr.mxu0 0.0
    %2445 = vmatpush1.msra.mxu0 0.0
    %2446 = vmatprep.subr.mxu0 0.0
    %2447 = vmatpush1.msra.mxu0 0.0
    %2448 = vmatprep.subr.mxu0 0.0
    %2449 = vmatpush1.msra.mxu0 0.0
    %2450 = vmatprep.subr.mxu0 0.0
    %2451 = vmatpush1.msra.mxu0 0.0
    %2452 = vmatprep.subr.mxu0 0.0
    %2453 = vmatpush1.msra.mxu0 0.0
    %2454 = vmatprep.subr.mxu0 0.0
    %2455 = vmatpush1.msra.mxu0 0.0
    %2456 = vmatprep.subr.mxu0 0.0
    %2457 = vmatpush1.msra.mxu0 0.0
    %2458 = vmatprep.subr.mxu0 0.0
    %2459 = vmatpush1.msra.mxu0 0.0
    %2460 = vmatprep.subr.mxu0 0.0
    %2461 = vmatpush1.msra.mxu0 0.0
    %2462 = vmatprep.subr.mxu0 0.0
    %2463 = vmatpush1.msra.mxu0 0.0
    %2464 = vmatprep.subr.mxu0 0.0
    %2465 = vmatpush1.msra.mxu0 0.0
    %2466 = vmatprep.subr.mxu0 0.0
    %2467 = vmatpush1.msra.mxu0 0.0
    %2468 = vmatprep.subr.mxu0 0.0
    %2469 = vmatpush1.msra.mxu0 %v2432
    %2470 = vmatprep.subr.mxu0 0.0
    %2471 = vmatpush2.msra.mxu0 0.0
    %2472 = vmatprep.subr.mxu0 0.0
    %2473 = vmatpush2.msra.mxu0 0.0
    %2474 = vmatprep.subr.mxu0 0.0
    %2475 = vmatpush2.msra.mxu0 0.0
    %2476 = vmatprep.subr.mxu0 0.0
    %2477 = vmatpush2.msra.mxu0 0.0
    %2478 = vmatprep.subr.mxu0 0.0
    %2479 = vmatpush2.msra.mxu0 0.0
    %2480 = vmatprep.subr.mxu0 0.0
    %2481 = vmatpush2.msra.mxu0 0.0
    %2482 = vmatprep.subr.mxu0 0.0
    %2483 = vmatpush2.msra.mxu0 0.0
    %2484 = vmatprep.subr.mxu0 0.0
    %2485 = vmatpush2.msra.mxu0 0.0
    %2486 = vmatprep.subr.mxu0 0.0
    %2487 = vmatpush2.msra.mxu0 0.0
    %2488 = vmatprep.subr.mxu0 0.0
    %2489 = vmatpush2.msra.mxu0 0.0
    %2490 = vmatprep.subr.mxu0 0.0
    %2491 = vmatpush2.msra.mxu0 0.0
    %2492 = vmatprep.subr.mxu0 0.0
    %2493 = vmatpush2.msra.mxu0 0.0
    %2494 = vmatprep.subr.mxu0 0.0
    %2495 = vmatpush2.msra.mxu0 0.0
    %2496 = vmatprep.subr.mxu0 0.0
    %2497 = vmatpush2.msra.mxu0 0.0
    %2498 = vmatprep.subr.mxu0 0.0
    %2499 = vmatpush2.msra.mxu0 0.0
    %2500 = vmatprep.subr.mxu0 0.0
    %2501 = vmatpush2.msra.mxu0 0.0
    %2502 = vmatprep.mubr.f32.mxu0 0.0
    %2503 = vmatmul.mubr.f32.gmra.mxu0 %v2436
    %v2504 = vpop.f32.mrf.mxu0
    %v2505 = vadd.f32 0.0, %v2504
    %v2506 = vpop.f32.mrf.mxu0
    %2507 = vdwg.mxu0
    %v2508 = vmul.f32 %v2505, %v2505
    %v2509 = vsel %vm226, %v2508, 0.0
    %v2510 = vrot.slane %v2509, 4
    %v2511 = vadd.f32 %v2509, %v2510
    %v2512 = vrot.slane %v2511, 2
    %v2513 = vadd.f32 %v2511, %v2512
    %v2514 = vrot.slane %v2513, 1
    %v2515 = vadd.f32 %v2513, %v2514
    %v2516 = vadd.f32 %v2342, %v2515
    %2517 = vrot.lane.b32.xlu0 %v2140, 120
    %v2518 = vpop.permute.xlu0 %2517
    %2519 = vrot.lane.b32.xlu0 %v2141, 120
    %v2520 = vpop.permute.xlu0 %2519
    %v2521 = vsel %vm151, %v2518, 0
    %v2523 = vsel %vm151, %v2520, 0
    %2525 = vmatprep.subr.mxu0 0.0
    %2526 = vmatpush1.msra.mxu0 0.0
    %2527 = vmatprep.subr.mxu0 0.0
    %2528 = vmatpush1.msra.mxu0 0.0
    %2529 = vmatprep.subr.mxu0 0.0
    %2530 = vmatpush1.msra.mxu0 0.0
    %2531 = vmatprep.subr.mxu0 0.0
    %2532 = vmatpush1.msra.mxu0 0.0
    %2533 = vmatprep.subr.mxu0 0.0
    %2534 = vmatpush1.msra.mxu0 0.0
    %2535 = vmatprep.subr.mxu0 0.0
    %2536 = vmatpush1.msra.mxu0 0.0
    %2537 = vmatprep.subr.mxu0 0.0
    %2538 = vmatpush1.msra.mxu0 0.0
    %2539 = vmatprep.subr.mxu0 0.0
    %2540 = vmatpush1.msra.mxu0 0.0
    %2541 = vmatprep.subr.mxu0 0.0
    %2542 = vmatpush1.msra.mxu0 0.0
    %2543 = vmatprep.subr.mxu0 0.0
    %2544 = vmatpush1.msra.mxu0 0.0
    %2545 = vmatprep.subr.mxu0 0.0
    %2546 = vmatpush1.msra.mxu0 0.0
    %2547 = vmatprep.subr.mxu0 0.0
    %2548 = vmatpush1.msra.mxu0 0.0
    %2549 = vmatprep.subr.mxu0 0.0
    %2550 = vmatpush1.msra.mxu0 0.0
    %2551 = vmatprep.subr.mxu0 0.0
    %2552 = vmatpush1.msra.mxu0 0.0
    %2553 = vmatprep.subr.mxu0 0.0
    %2554 = vmatpush1.msra.mxu0 0.0
    %2555 = vmatprep.subr.mxu0 0.0
    %2556 = vmatpush1.msra.mxu0 %v2505
    %2557 = vmatprep.subr.mxu0 0.0
    %2558 = vmatpush2.msra.mxu0 0.0
    %2559 = vmatprep.subr.mxu0 0.0
    %2560 = vmatpush2.msra.mxu0 0.0
    %2561 = vmatprep.subr.mxu0 0.0
    %2562 = vmatpush2.msra.mxu0 0.0
    %2563 = vmatprep.subr.mxu0 0.0
    %2564 = vmatpush2.msra.mxu0 0.0
    %2565 = vmatprep.subr.mxu0 0.0
    %2566 = vmatpush2.msra.mxu0 0.0
    %2567 = vmatprep.subr.mxu0 0.0
    %2568 = vmatpush2.msra.mxu0 0.0
    %2569 = vmatprep.subr.mxu0 0.0
    %2570 = vmatpush2.msra.mxu0 0.0
    %2571 = vmatprep.subr.mxu0 0.0
    %2572 = vmatpush2.msra.mxu0 0.0
    %2573 = vmatprep.subr.mxu0 0.0
    %2574 = vmatpush2.msra.mxu0 0.0
    %2575 = vmatprep.subr.mxu0 0.0
    %2576 = vmatpush2.msra.mxu0 0.0
    %2577 = vmatprep.subr.mxu0 0.0
    %2578 = vmatpush2.msra.mxu0 0.0
    %2579 = vmatprep.subr.mxu0 0.0
    %2580 = vmatpush2.msra.mxu0 0.0
    %2581 = vmatprep.subr.mxu0 0.0
    %2582 = vmatpush2.msra.mxu0 0.0
    %2583 = vmatprep.subr.mxu0 0.0
    %2584 = vmatpush2.msra.mxu0 0.0
    %2585 = vmatprep.subr.mxu0 0.0
    %2586 = vmatpush2.msra.mxu0 0.0
    %2587 = vmatprep.subr.mxu0 0.0
    %2588 = vmatpush2.msra.mxu0 0.0
    %2589 = vmatprep.mubr.f32.mxu0 0.0
    %2590 = vmatmul.mubr.f32.gmra.mxu0 %v2521
    %v2591 = vpop.f32.mrf.mxu0
    %v2592 = vadd.f32 0.0, %v2591
    %v2593 = vpop.f32.mrf.mxu0
    %2594 = vmatprep.mubr.f32.mxu0 0.0
    %2595 = vmatmul.mubr.f32.gmra.mxu0 %v2523
    %v2596 = vpop.f32.mrf.mxu0
    %v2597 = vadd.f32 0.0, %v2596
    %v2598 = vpop.f32.mrf.mxu0
    %2599 = vdwg.mxu0
    %v2600 = vsub.f32 %v2433, %v2592
    %v2601 = vsub.f32 %v2434, %v2597
    %v2603 = vsel %vm151, %v2155, 0
    %2605 = vmatprep.subr.mxu0 0.0
    %2606 = vmatpush1.msra.mxu0 0.0
    %2607 = vmatprep.subr.mxu0 0.0
    %2608 = vmatpush1.msra.mxu0 0.0
    %2609 = vmatprep.subr.mxu0 0.0
    %2610 = vmatpush1.msra.mxu0 0.0
    %2611 = vmatprep.subr.mxu0 0.0
    %2612 = vmatpush1.msra.mxu0 0.0
    %2613 = vmatprep.subr.mxu0 0.0
    %2614 = vmatpush1.msra.mxu0 0.0
    %2615 = vmatprep.subr.mxu0 0.0
    %2616 = vmatpush1.msra.mxu0 0.0
    %2617 = vmatprep.subr.mxu0 0.0
    %2618 = vmatpush1.msra.mxu0 0.0
    %2619 = vmatprep.subr.mxu0 0.0
    %2620 = vmatpush1.msra.mxu0 0.0
    %2621 = vmatprep.subr.mxu0 0.0
    %2622 = vmatpush1.msra.mxu0 0.0
    %2623 = vmatprep.subr.mxu0 0.0
    %2624 = vmatpush1.msra.mxu0 0.0
    %2625 = vmatprep.subr.mxu0 0.0
    %2626 = vmatpush1.msra.mxu0 0.0
    %2627 = vmatprep.subr.mxu0 0.0
    %2628 = vmatpush1.msra.mxu0 0.0
    %2629 = vmatprep.subr.mxu0 0.0
    %2630 = vmatpush1.msra.mxu0 0.0
    %2631 = vmatprep.subr.mxu0 0.0
    %2632 = vmatpush1.msra.mxu0 0.0
    %2633 = vmatprep.subr.mxu0 0.0
    %2634 = vmatpush1.msra.mxu0 0.0
    %2635 = vmatprep.subr.mxu0 0.0
    %2636 = vmatpush1.msra.mxu0 %v2600
    %2637 = vmatprep.subr.mxu0 0.0
    %2638 = vmatpush2.msra.mxu0 0.0
    %2639 = vmatprep.subr.mxu0 0.0
    %2640 = vmatpush2.msra.mxu0 0.0
    %2641 = vmatprep.subr.mxu0 0.0
    %2642 = vmatpush2.msra.mxu0 0.0
    %2643 = vmatprep.subr.mxu0 0.0
    %2644 = vmatpush2.msra.mxu0 0.0
    %2645 = vmatprep.subr.mxu0 0.0
    %2646 = vmatpush2.msra.mxu0 0.0
    %2647 = vmatprep.subr.mxu0 0.0
    %2648 = vmatpush2.msra.mxu0 0.0
    %2649 = vmatprep.subr.mxu0 0.0
    %2650 = vmatpush2.msra.mxu0 0.0
    %2651 = vmatprep.subr.mxu0 0.0
    %2652 = vmatpush2.msra.mxu0 0.0
    %2653 = vmatprep.subr.mxu0 0.0
    %2654 = vmatpush2.msra.mxu0 0.0
    %2655 = vmatprep.subr.mxu0 0.0
    %2656 = vmatpush2.msra.mxu0 0.0
    %2657 = vmatprep.subr.mxu0 0.0
    %2658 = vmatpush2.msra.mxu0 0.0
    %2659 = vmatprep.subr.mxu0 0.0
    %2660 = vmatpush2.msra.mxu0 0.0
    %2661 = vmatprep.subr.mxu0 0.0
    %2662 = vmatpush2.msra.mxu0 0.0
    %2663 = vmatprep.subr.mxu0 0.0
    %2664 = vmatpush2.msra.mxu0 0.0
    %2665 = vmatprep.subr.mxu0 0.0
    %2666 = vmatpush2.msra.mxu0 0.0
    %2667 = vmatprep.subr.mxu0 0.0
    %2668 = vmatpush2.msra.mxu0 0.0
    %2669 = vmatprep.mubr.f32.mxu0 0.0
    %2670 = vmatmul.mubr.f32.gmra.mxu0 %v2603
    %v2671 = vpop.f32.mrf.mxu0
    %v2672 = vadd.f32 0.0, %v2671
    %v2673 = vpop.f32.mrf.mxu0
    %2674 = vdwg.mxu0
    %v2675 = vmul.f32 %v2672, %v2672
    %v2676 = vsel %vm226, %v2675, 0.0
    %v2677 = vrot.slane %v2676, 4
    %v2678 = vadd.f32 %v2676, %v2677
    %v2679 = vrot.slane %v2678, 2
    %v2680 = vadd.f32 %v2678, %v2679
    %v2681 = vrot.slane %v2680, 1
    %v2682 = vadd.f32 %v2680, %v2681
    %v2683 = vadd.f32 %v2516, %v2682
    %2684 = vrot.lane.b32.xlu0 %v2141, 112
    %v2685 = vpop.permute.xlu0 %2684
    %v2686 = vsel %vm151, %v2685, 0
    %2688 = vmatprep.subr.mxu0 0.0
    %2689 = vmatpush1.msra.mxu0 0.0
    %2690 = vmatprep.subr.mxu0 0.0
    %2691 = vmatpush1.msra.mxu0 0.0
    %2692 = vmatprep.subr.mxu0 0.0
    %2693 = vmatpush1.msra.mxu0 0.0
    %2694 = vmatprep.subr.mxu0 0.0
    %2695 = vmatpush1.msra.mxu0 0.0
    %2696 = vmatprep.subr.mxu0 0.0
    %2697 = vmatpush1.msra.mxu0 0.0
    %2698 = vmatprep.subr.mxu0 0.0
    %2699 = vmatpush1.msra.mxu0 0.0
    %2700 = vmatprep.subr.mxu0 0.0
    %2701 = vmatpush1.msra.mxu0 0.0
    %2702 = vmatprep.subr.mxu0 0.0
    %2703 = vmatpush1.msra.mxu0 0.0
    %2704 = vmatprep.subr.mxu0 0.0
    %2705 = vmatpush1.msra.mxu0 0.0
    %2706 = vmatprep.subr.mxu0 0.0
    %2707 = vmatpush1.msra.mxu0 0.0
    %2708 = vmatprep.subr.mxu0 0.0
    %2709 = vmatpush1.msra.mxu0 0.0
    %2710 = vmatprep.subr.mxu0 0.0
    %2711 = vmatpush1.msra.mxu0 0.0
    %2712 = vmatprep.subr.mxu0 0.0
    %2713 = vmatpush1.msra.mxu0 0.0
    %2714 = vmatprep.subr.mxu0 0.0
    %2715 = vmatpush1.msra.mxu0 0.0
    %2716 = vmatprep.subr.mxu0 0.0
    %2717 = vmatpush1.msra.mxu0 0.0
    %2718 = vmatprep.subr.mxu0 0.0
    %2719 = vmatpush1.msra.mxu0 %v2672
    %2720 = vmatprep.subr.mxu0 0.0
    %2721 = vmatpush2.msra.mxu0 0.0
    %2722 = vmatprep.subr.mxu0 0.0
    %2723 = vmatpush2.msra.mxu0 0.0
    %2724 = vmatprep.subr.mxu0 0.0
    %2725 = vmatpush2.msra.mxu0 0.0
    %2726 = vmatprep.subr.mxu0 0.0
    %2727 = vmatpush2.msra.mxu0 0.0
    %2728 = vmatprep.subr.mxu0 0.0
    %2729 = vmatpush2.msra.mxu0 0.0
    %2730 = vmatprep.subr.mxu0 0.0
    %2731 = vmatpush2.msra.mxu0 0.0
    %2732 = vmatprep.subr.mxu0 0.0
    %2733 = vmatpush2.msra.mxu0 0.0
    %2734 = vmatprep.subr.mxu0 0.0
    %2735 = vmatpush2.msra.mxu0 0.0
    %2736 = vmatprep.subr.mxu0 0.0
    %2737 = vmatpush2.msra.mxu0 0.0
    %2738 = vmatprep.subr.mxu0 0.0
    %2739 = vmatpush2.msra.mxu0 0.0
    %2740 = vmatprep.subr.mxu0 0.0
    %2741 = vmatpush2.msra.mxu0 0.0
    %2742 = vmatprep.subr.mxu0 0.0
    %2743 = vmatpush2.msra.mxu0 0.0
    %2744 = vmatprep.subr.mxu0 0.0
    %2745 = vmatpush2.msra.mxu0 0.0
    %2746 = vmatprep.subr.mxu0 0.0
    %2747 = vmatpush2.msra.mxu0 0.0
    %2748 = vmatprep.subr.mxu0 0.0
    %2749 = vmatpush2.msra.mxu0 0.0
    %2750 = vmatprep.subr.mxu0 0.0
    %2751 = vmatpush2.msra.mxu0 0.0
    %2752 = vmatprep.mubr.f32.mxu0 0.0
    %2753 = vmatmul.mubr.f32.gmra.mxu0 %v2686
    %v2754 = vpop.f32.mrf.mxu0
    %v2755 = vadd.f32 0.0, %v2754
    %v2756 = vpop.f32.mrf.mxu0
    %2757 = vdwg.mxu0
    %v2758 = vsub.f32 %v2601, %v2755
    %v2760 = vsel %vm151, %v2156, 0
    %2762 = vmatprep.subr.mxu0 0.0
    %2763 = vmatpush1.msra.mxu0 0.0
    %2764 = vmatprep.subr.mxu0 0.0
    %2765 = vmatpush1.msra.mxu0 0.0
    %2766 = vmatprep.subr.mxu0 0.0
    %2767 = vmatpush1.msra.mxu0 0.0
    %2768 = vmatprep.subr.mxu0 0.0
    %2769 = vmatpush1.msra.mxu0 0.0
    %2770 = vmatprep.subr.mxu0 0.0
    %2771 = vmatpush1.msra.mxu0 0.0
    %2772 = vmatprep.subr.mxu0 0.0
    %2773 = vmatpush1.msra.mxu0 0.0
    %2774 = vmatprep.subr.mxu0 0.0
    %2775 = vmatpush1.msra.mxu0 0.0
    %2776 = vmatprep.subr.mxu0 0.0
    %2777 = vmatpush1.msra.mxu0 0.0
    %2778 = vmatprep.subr.mxu0 0.0
    %2779 = vmatpush1.msra.mxu0 0.0
    %2780 = vmatprep.subr.mxu0 0.0
    %2781 = vmatpush1.msra.mxu0 0.0
    %2782 = vmatprep.subr.mxu0 0.0
    %2783 = vmatpush1.msra.mxu0 0.0
    %2784 = vmatprep.subr.mxu0 0.0
    %2785 = vmatpush1.msra.mxu0 0.0
    %2786 = vmatprep.subr.mxu0 0.0
    %2787 = vmatpush1.msra.mxu0 0.0
    %2788 = vmatprep.subr.mxu0 0.0
    %2789 = vmatpush1.msra.mxu0 0.0
    %2790 = vmatprep.subr.mxu0 0.0
    %2791 = vmatpush1.msra.mxu0 0.0
    %2792 = vmatprep.subr.mxu0 0.0
    %2793 = vmatpush1.msra.mxu0 %v2758
    %2794 = vmatprep.subr.mxu0 0.0
    %2795 = vmatpush2.msra.mxu0 0.0
    %2796 = vmatprep.subr.mxu0 0.0
    %2797 = vmatpush2.msra.mxu0 0.0
    %2798 = vmatprep.subr.mxu0 0.0
    %2799 = vmatpush2.msra.mxu0 0.0
    %2800 = vmatprep.subr.mxu0 0.0
    %2801 = vmatpush2.msra.mxu0 0.0
    %2802 = vmatprep.subr.mxu0 0.0
    %2803 = vmatpush2.msra.mxu0 0.0
    %2804 = vmatprep.subr.mxu0 0.0
    %2805 = vmatpush2.msra.mxu0 0.0
    %2806 = vmatprep.subr.mxu0 0.0
    %2807 = vmatpush2.msra.mxu0 0.0
    %2808 = vmatprep.subr.mxu0 0.0
    %2809 = vmatpush2.msra.mxu0 0.0
    %2810 = vmatprep.subr.mxu0 0.0
    %2811 = vmatpush2.msra.mxu0 0.0
    %2812 = vmatprep.subr.mxu0 0.0
    %2813 = vmatpush2.msra.mxu0 0.0
    %2814 = vmatprep.subr.mxu0 0.0
    %2815 = vmatpush2.msra.mxu0 0.0
    %2816 = vmatprep.subr.mxu0 0.0
    %2817 = vmatpush2.msra.mxu0 0.0
    %2818 = vmatprep.subr.mxu0 0.0
    %2819 = vmatpush2.msra.mxu0 0.0
    %2820 = vmatprep.subr.mxu0 0.0
    %2821 = vmatpush2.msra.mxu0 0.0
    %2822 = vmatprep.subr.mxu0 0.0
    %2823 = vmatpush2.msra.mxu0 0.0
    %2824 = vmatprep.subr.mxu0 0.0
    %2825 = vmatpush2.msra.mxu0 0.0
    %2826 = vmatprep.mubr.f32.mxu0 0.0
    %2827 = vmatmul.mubr.f32.gmra.mxu0 %v2760
    %v2828 = vpop.f32.mrf.mxu0
    %v2829 = vadd.f32 0.0, %v2828
    %v2830 = vpop.f32.mrf.mxu0
    %2831 = vdwg.mxu0
    %v2832 = vmul.f32 %v2829, %v2829
    %v2833 = vsel %vm226, %v2832, 0.0
    %v2834 = vrot.slane %v2833, 4
    %v2835 = vadd.f32 %v2833, %v2834
    %v2836 = vrot.slane %v2835, 2
    %v2837 = vadd.f32 %v2835, %v2836
    %v2838 = vrot.slane %v2837, 1
    %v2839 = vadd.f32 %v2837, %v2838
    %v2840 = vadd.f32 %v2683, %v2839
    %2842 = vrot.lane.b32.xlu0 %v853, 16
    %v2843 = vpop.permute.xlu0 %2842
    %2846 = vrot.lane.b32.xlu0 %v1556, 32
    %v2847 = vpop.permute.xlu0 %2846
    %2850 = vrot.lane.b32.xlu0 %v2259, 48
    %v2851 = vpop.permute.xlu0 %2850
    %v2853 = vsel %vm226, %v148, %v2843
    %v2854 = vsel %vm77, %v2853, %v2847
    %vm2855 = vcmask 392192
    %v2856 = vsel %vm2855, %v2854, %v2851
    %v2857 = vld [vmem:[%s5] sm:$0xf]
    %v2858 = vadd.f32 %v2857, %v2856
    %vm2859 = vcmask 519168
    %2860 = vst.msk [vmem:[#allocation2] sm:$0xf] %vm2859, %v2858
    %2862 = vrot.lane.b32.xlu0 %v1434, 16
    %v2863 = vpop.permute.xlu0 %2862
    %2866 = vrot.lane.b32.xlu0 %v2137, 32
    %v2867 = vpop.permute.xlu0 %2866
    %2870 = vrot.lane.b32.xlu0 %v2840, 48
    %v2871 = vpop.permute.xlu0 %2870
    %v2873 = vsel %vm226, %v731, %v2863
    %v2874 = vsel %vm77, %v2873, %v2867
    %v2875 = vsel %vm2855, %v2874, %v2871
    %v2876 = vld [vmem:[%s4] sm:$0x1]
    %v2877 = vsub.f32 %v2876, %v2875
    %v2878 = vld [vmem:[%s6] sm:$0x1]
    %v2879 = vadd.f32 %v2877, %v2878
    %vm2880 = vcmask 516096
    %2881 = vst.msk [vmem:[#allocation4] sm:$0x1] %vm2880, %v2879
    // Predicated region
    $region30: #{tpu_custom_call.1} parent=1 // pred_check
      _
    $region31: #{tpu_custom_call.1} parent=1 // pred_check_branch
      %2883 = sbr.rel (0) target = $region33
    $region32: #{tpu_custom_call.1} parent=1 // pred_region
      %s2885 = ssub.s32 64, 64
      %2886 = vsyncadd [#allocation3], %s2885
      %s2888 = sshll.u32 [#allocation2], 4
      %s2889 = int_to_ptr.vmem [resolvable:$true] %s2888
      %2891 = dma.vmem_to_hbm [thread:$0]  %s2889, 64, %s7, [#allocation3]
    $region33: #{tpu_custom_call.1} parent=1 // pred_fallthru
      _
    // Predicated region
    $region34: #{tpu_custom_call.1} parent=1 // pred_check
      _
    $region35: #{tpu_custom_call.1} parent=1 // pred_check_branch
      %2893 = sbr.rel (0) target = $region37
    $region36: #{tpu_custom_call.1} parent=1 // pred_region
      %s2895 = ssub.s32 16, 16
      %2896 = vsyncadd [#allocation5], %s2895
      %s2898 = sshll.u32 [#allocation4], 4
      %s2899 = int_to_ptr.vmem [resolvable:$true] %s2898
      %2901 = dma.vmem_to_hbm [thread:$0]  %s2899, 16, %s8, [#allocation5]
    $region37: #{tpu_custom_call.1} parent=1 // pred_fallthru
      _
    // Predicated region
    $region38: #{tpu_custom_call.1} parent=1 // pred_check
      _
    $region39: #{tpu_custom_call.1} parent=1 // pred_check_branch
      %2903 = sbr.rel (0) target = $region41
    $region40: #{tpu_custom_call.1} parent=1 // pred_region
      %2904 = dma.done [#allocation3], 64
    $region41: #{tpu_custom_call.1} parent=1 // pred_fallthru
      _
    // Predicated region
    $region42: #{tpu_custom_call.1} parent=1 // pred_check
      _
    $region43: #{tpu_custom_call.1} parent=1 // pred_check_branch
      %2906 = sbr.rel (0) target = $region45
    $region44: #{tpu_custom_call.1} parent=1 // pred_region
      %2907 = dma.done [#allocation5], 16
    $region45: #{tpu_custom_call.1} parent=1 // pred_fallthru
      _
    %2908 = vsyncpa [#allocation3], 1
    %2909 = vsyncpa [#allocation5], 1

</llo_original>
